<compile_context>
chip_gen: v7x
topology: tpu7x:2x2x1
jax: 0.10.0
libtpu: 0.0.40
codegen_flags: <defaults>
</compile_context>

<pallas_src>
import math
import functools

import numpy as np
import jax
import jax.numpy as jnp
from jax import lax
from jax.experimental import pallas as pl
from jax.experimental.pallas import tpu as pltpu

# ---------------- config (consistent with the module) ----------------
VOCAB = 50
D_MODEL = 32
N_HEADS = 4
DH = D_MODEL // N_HEADS
N_LAYERS = 2
FF_HIDDEN = 2048          # FeedForward default hidden_size
MAX_LEN = 80
NEG_INF = -1000000000.0   # matches masked_fill value in the PyTorch code


# ---------------- the single fused Pallas kernel ----------------
def _decoder_block_kernel(
    x_ref, e_ref, smask_ref, cmask_ref,
    n1a_ref, n1b_ref, n2a_ref, n2b_ref, n3a_ref, n3b_ref,
    wqkv1_ref, bqkv1_ref, wo1_ref, bo1_ref,
    wq2_ref, bq2_ref, wkv2_ref, bkv2_ref, wo2_ref, bo2_ref,
    ffw1_ref, ffb1_ref, ffw2_ref, ffb2_ref,
    nfa_ref, nfb_ref,
    out_ref,
    *, n_tok, D, dh, n_layers):
  P = D // dh
  bf16 = jnp.bfloat16
  f32 = jnp.float32

  def layernorm(v, a_ref, b_ref):
    mean = jnp.mean(v, axis=-1, keepdims=True)
    cen = v - mean
    var = jnp.sum(cen * cen, axis=-1, keepdims=True) / (D - 1)   # unbiased (N-1)
    return a_ref[...] * cen / (jnp.sqrt(var) + 1e-07) + b_ref[...]  # eps on std

  def to_heads(y):
    # (rows, D) -> (P*rows, dh) in (p, row) chunk order: the torch
    # `.view(B, H, -1, dh)` regrouping realized as a sublane concat of static
    # lane slices.  No MXU work, no in-kernel reshape.
    return jnp.concatenate([y[:, p * dh:(p + 1) * dh] for p in range(P)], axis=0)

  def attention(qr, kr, vr, mask_ref, wo_ref, bo_ref):
    # qr: (P*n_tok, dh); kr/vr: (P*n_k, dh).  mask_ref holds an additive
    # 0 / -1e9 bias in the same (p, b, s) chunk order; it encodes both the
    # per-(batch, weird-view-head) block structure and the user mask, so the
    # row softmax of the single big Gram reduces exactly to torch's per-head
    # masked softmax (masked entries underflow to exactly 0 after exp).
    s = lax.dot_general(qr.astype(bf16), kr.astype(bf16),
                        (((1,), (1,)), ((), ())),
                        preferred_element_type=f32)     # 1/sqrt(dh) pre-folded
    s = s + mask_ref[...]
    s = s - jnp.max(s, axis=-1, keepdims=True)
    ex = jnp.exp(s)
    pr = ex * pl.reciprocal(jnp.sum(ex, axis=-1, keepdims=True), approx=True)
    ctx = jnp.dot(pr.astype(bf16), vr.astype(bf16),
                  preferred_element_type=f32)           # (P*n_tok, dh)
    # inverse regrouping = lane concat, folded straight into the output proj
    ctx_tok = jnp.concatenate(
        [ctx[p * n_tok:(p + 1) * n_tok, :] for p in range(P)], axis=1)
    return jnp.dot(ctx_tok.astype(bf16), wo_ref[...],
                   preferred_element_type=f32) + bo_ref[...]

  # cross-attention K/V: layer-shared weights + fixed e_out -> compute once
  kv2 = jnp.dot(e_ref[...].astype(bf16), wkv2_ref[...],
                preferred_element_type=f32) + bkv2_ref[...]   # (B*Ss, 2D)
  k2r = to_heads(kv2[:, :D])
  v2r = to_heads(kv2[:, D:])

  x = x_ref[...]                                              # (n_tok, D) f32
  for _ in range(n_layers):   # clone_layers(): every layer shares one weight set
    # --- masked self attention (dropout1 is identity in eval mode) ---
    x1 = layernorm(x, n1a_ref, n1b_ref)
    qkv = jnp.dot(x1.astype(bf16), wqkv1_ref[...],
                  preferred_element_type=f32) + bqkv1_ref[...]
    x = x + attention(to_heads(qkv[:, 0 * D:1 * D]),
                      to_heads(qkv[:, 1 * D:2 * D]),
                      to_heads(qkv[:, 2 * D:3 * D]),
                      smask_ref, wo1_ref, bo1_ref)
    # --- cross attention over encoder output ---
    x1 = layernorm(x, n2a_ref, n2b_ref)
    q2 = jnp.dot(x1.astype(bf16), wq2_ref[...],
                 preferred_element_type=f32) + bq2_ref[...]
    x = x + attention(to_heads(q2), k2r, v2r, cmask_ref, wo2_ref, bo2_ref)
    # --- feed forward (32 -> 2048 -> 32) ---
    x1 = layernorm(x, n3a_ref, n3b_ref)
    h = jnp.maximum(jnp.dot(x1.astype(bf16), ffw1_ref[...],
                            preferred_element_type=f32) + ffb1_ref[...],
                    0.0).astype(bf16)
    x = x + jnp.dot(h, ffw2_ref[...],
                    preferred_element_type=f32) + ffb2_ref[...]

  out_ref[...] = layernorm(x, nfa_ref, nfb_ref)


# ---------------- one-time parameter prep (out of the hot path) ----------------
def prepare_params(params):
  D = D_MODEL
  p = params["layer"]
  a1, a2 = p["attn1"], p["attn2"]
  scale = 1.0 / math.sqrt(DH)              # fold 1/sqrt(dh) into the Q projection
  wqkv1 = jnp.concatenate([a1["wq"] * scale, a1["wk"], a1["wv"]], axis=1)
  bqkv1 = jnp.concatenate([a1["bq"] * scale, a1["bk"], a1["bv"]], axis=1)
  wkv2 = jnp.concatenate([a2["wk"], a2["wv"]], axis=1)
  bkv2 = jnp.concatenate([a2["bk"], a2["bv"]], axis=1)
  bf = lambda w: w.astype(jnp.bfloat16)    # MXU operands in bf16, biases stay f32
  return dict(
      embed=params["embed"], pe=params["pe"],
      n1a=p["n1_a"].reshape(1, D), n1b=p["n1_b"].reshape(1, D),
      n2a=p["n2_a"].reshape(1, D), n2b=p["n2_b"].reshape(1, D),
      n3a=p["n3_a"].reshape(1, D), n3b=p["n3_b"].reshape(1, D),
      wqkv1=bf(wqkv1), bqkv1=bqkv1, wo1=bf(a1["wo"]), bo1=a1["bo"],
      wq2=bf(a2["wq"] * scale), bq2=a2["bq"] * scale,
      wkv2=bf(wkv2), bkv2=bkv2, wo2=bf(a2["wo"]), bo2=a2["bo"],
      ffw1=bf(p["ff_w1"]), ffb1=p["ff_b1"], ffw2=bf(p["ff_w2"]), ffb2=p["ff_b2"],
      nfa=params["norm_a"].reshape(1, D), nfb=params["norm_b"].reshape(1, D),
  )


# ---------------- wrapper / glue ----------------
def _build_additive_mask(m, B, H, Sq, Sk):
  # m: (B, Sq, Sk) 0/1.  Chunk rows/cols are ordered (p, b, s).  Torch's
  # `.view(B, H, -1, dh)` assigns chunk (b, s, p) to head h = (s*H+p)//S_side
  # at within-head index t = (s*H+p)%S_side; an entry is kept iff same batch,
  # same head, and the user mask keeps (t_q, t_k).  Returns additive 0 / -1e9.
  nq, nk = H * B * Sq, H * B * Sk
  rq, rk = np.arange(nq), np.arange(nk)
  pq, bq, sq = rq // (B * Sq), (rq // Sq) % B, rq % Sq
  pk, bk, sk = rk // (B * Sk), (rk // Sk) % B, rk % Sk
  fq, fk = sq * H + pq, sk * H + pk
  hq, tq = fq // Sq, fq % Sq
  hk, tk = fk // Sk, fk % Sk
  same = (bq[:, None] == bk[None, :]) & (hq[:, None] == hk[None, :])
  keep = m[bq[:, None], tq[:, None], tk[None, :]] > 0.5
  return jnp.where(jnp.asarray(same) & keep, 0.0, NEG_INF).astype(jnp.float32)


def decoder_block(trg, e_out, src_mask, trg_mask, prepped):
  B, St = trg.shape
  Ss = e_out.shape[1]
  D, H, dh = D_MODEL, N_HEADS, DH

  # thin XLA glue: embedding gather + sinusoidal positional encoding
  x2d = (prepped["embed"][trg] + prepped["pe"][:St][None, :, :]).reshape(B * St, D)
  e2d = e_out.reshape(B * Ss, D)

  tm = jnp.broadcast_to(trg_mask.astype(jnp.float32), (B, St, St))
  sm = jnp.broadcast_to(src_mask.astype(jnp.float32), (B, St, Ss))
  smask = _build_additive_mask(tm, B, H, St, St)
  cmask = _build_additive_mask(sm, B, H, St, Ss)

  args = [
      x2d, e2d, smask, cmask,
      prepped["n1a"], prepped["n1b"], prepped["n2a"], prepped["n2b"],
      prepped["n3a"], prepped["n3b"],
      prepped["wqkv1"], prepped["bqkv1"], prepped["wo1"], prepped["bo1"],
      prepped["wq2"], prepped["bq2"], prepped["wkv2"], prepped["bkv2"],
      prepped["wo2"], prepped["bo2"],
      prepped["ffw1"], prepped["ffb1"], prepped["ffw2"], prepped["ffb2"],
      prepped["nfa"], prepped["nfb"],
  ]
  out2d = pl.pallas_call(
      functools.partial(_decoder_block_kernel, n_tok=B * St, D=D, dh=dh,
                        n_layers=N_LAYERS),
      out_shape=jax.ShapeDtypeStruct((B * St, D), jnp.float32),
      in_specs=[pl.BlockSpec(memory_space=pltpu.MemorySpace.VMEM)] * len(args),
      out_specs=pl.BlockSpec(memory_space=pltpu.MemorySpace.VMEM),
      compiler_params=pltpu.CompilerParams(vmem_limit_bytes=32 * 1024 * 1024),
  )(*args)
  return out2d.reshape(B, St, D)


# ---------------- parameter init (deterministic) ----------------
def make_pe(max_len, d_model):
  pos = np.arange(max_len, dtype=np.float32)[:, None]
  i = np.arange(0, d_model, 2, dtype=np.float32)
  div = np.power(10000.0, i / d_model)
  pe = np.zeros((max_len, d_model), dtype=np.float32)
  pe[:, 0::2] = np.sin(pos / div)
  pe[:, 1::2] = np.cos(pos / div)
  return jnp.asarray(pe)


def init_params(key):
  keys = jax.random.split(key, 8)

  def lin(k, fin, fout):
    k1, k2 = jax.random.split(k)
    bound = 1.0 / math.sqrt(fin)
    w = jax.random.uniform(k1, (fin, fout), jnp.float32, -bound, bound)
    b = jax.random.uniform(k2, (1, fout), jnp.float32, -bound, bound)
    return w, b

  def mha_params(k):
    ks = jax.random.split(k, 4)
    wq, bq = lin(ks[0], D_MODEL, D_MODEL)
    wk, bk = lin(ks[1], D_MODEL, D_MODEL)
    wv, bv = lin(ks[2], D_MODEL, D_MODEL)
    wo, bo = lin(ks[3], D_MODEL, D_MODEL)
    return dict(wq=wq, bq=bq, wk=wk, bk=bk, wv=wv, bv=bv, wo=wo, bo=bo)

  ff_w1, ff_b1 = lin(keys[2], D_MODEL, FF_HIDDEN)
  ff_w2, ff_b2 = lin(keys[3], FF_HIDDEN, D_MODEL)
  ones = jnp.ones((D_MODEL,), jnp.float32)
  zeros = jnp.zeros((D_MODEL,), jnp.float32)
  layer = dict(
      n1_a=ones, n1_b=zeros, n2_a=ones, n2_b=zeros, n3_a=ones, n3_b=zeros,
      attn1=mha_params(keys[0]), attn2=mha_params(keys[1]),
      ff_w1=ff_w1, ff_b1=ff_b1, ff_w2=ff_w2, ff_b2=ff_b2,
  )
  embed = jax.random.normal(keys[4], (VOCAB, D_MODEL), jnp.float32)
  return dict(embed=embed, pe=make_pe(MAX_LEN, D_MODEL), layer=layer,
              norm_a=ones, norm_b=zeros)


# ---------------- pure-JAX reference (sanity check, f32) ----------------
def ref_layernorm(x, alpha, bias):
  mean = jnp.mean(x, -1, keepdims=True)
  var = jnp.sum((x - mean) ** 2, -1, keepdims=True) / (x.shape[-1] - 1)
  return alpha * (x - mean) / (jnp.sqrt(var) + 1e-07) + bias


def ref_mha(x_q, x_kv, mask, p):
  B, Sq, D = x_q.shape
  Sk = x_kv.shape[1]
  q = (x_q @ p["wq"] + p["bq"]).reshape(B, N_HEADS, Sq, DH)
  k = (x_kv @ p["wk"] + p["bk"]).reshape(B, N_HEADS, Sk, DH)
  v = (x_kv @ p["wv"] + p["bv"]).reshape(B, N_HEADS, Sk, DH)
  s = jnp.einsum("bhqd,bhkd->bhqk", q, k) / math.sqrt(DH)
  s = jnp.where(mask[:, None, :, :] == 0, NEG_INF, s)
  a = jax.nn.softmax(s, axis=-1)
  ctx = jnp.einsum("bhqk,bhkd->bhqd", a, v).reshape(B, Sq, D)
  return ctx @ p["wo"] + p["bo"]


def ref_decoder_block(trg, e_out, src_mask, trg_mask, params):
  B, S_trg = trg.shape
  S_src = e_out.shape[1]
  x = params["embed"][trg] + params["pe"][:S_trg][None]
  tm = jnp.broadcast_to(trg_mask.astype(jnp.float32), (B, S_trg, S_trg))
  sm = jnp.broadcast_to(src_mask.astype(jnp.float32), (B, S_trg, S_src))
  p = params["layer"]
  for _ in range(N_LAYERS):
    x1 = ref_layernorm(x, p["n1_a"], p["n1_b"])
    x = x + ref_mha(x1, x1, tm, p["attn1"])
    x1 = ref_layernorm(x, p["n2_a"], p["n2_b"])
    x = x + ref_mha(x1, e_out, sm, p["attn2"])
    x1 = ref_layernorm(x, p["n3_a"], p["n3_b"])
    h = jnp.maximum(x1 @ p["ff_w1"] + p["ff_b1"], 0.0)
    x = x + (h @ p["ff_w2"] + p["ff_b2"])
  return ref_layernorm(x, params["norm_a"], params["norm_b"])


# ---------------- main ----------------
if __name__ == "__main__":
  key = jax.random.PRNGKey(0)
  kp, kt, ke = jax.random.split(key, 3)
  params = init_params(kp)
  prepped = prepare_params(params)     # one-time: concat / scale-fold / bf16 cast

  B, S_TRG, S_SRC = 2, 8, 8
  trg = jax.random.randint(kt, (B, S_TRG), 0, VOCAB)
  e_out = jax.random.normal(ke, (B, S_SRC, D_MODEL), jnp.float32)
  # causal target mask [B, S_trg, S_trg]
  trg_mask = jnp.broadcast_to(jnp.tril(jnp.ones((S_TRG, S_TRG), jnp.float32)),
                              (B, S_TRG, S_TRG))
  # source padding mask [B, 1, S_src]; batch item 1 has its last 2 positions padded
  src_mask = jnp.ones((B, 1, S_SRC), jnp.float32).at[1, 0, -2:].set(0.0)

  fwd = jax.jit(decoder_block)
  out = fwd(trg, e_out, src_mask, trg_mask, prepped)
  out = jax.block_until_ready(out)

  ref = ref_decoder_block(trg, e_out, src_mask, trg_mask, params)
  assert out.shape == (B, S_TRG, D_MODEL)
  assert bool(jnp.all(jnp.isfinite(out)))
  max_err = float(jnp.max(jnp.abs(out - ref)))
  assert bool(jnp.allclose(out, ref, atol=5e-2, rtol=5e-2)), max_err

  print("KERNEL_OK")
</pallas_src>

<mosaic_0001>
module attributes {stable_mosaic.version = 11 : i64} {
  func.func @_decoder_block_kernel(%arg0: memref<16x32xf32, #tpu.memory_space<vmem>>, %arg1: memref<16x32xf32, #tpu.memory_space<vmem>>, %arg2: memref<64x64xf32, #tpu.memory_space<vmem>>, %arg3: memref<64x64xf32, #tpu.memory_space<vmem>>, %arg4: memref<1x32xf32, #tpu.memory_space<vmem>>, %arg5: memref<1x32xf32, #tpu.memory_space<vmem>>, %arg6: memref<1x32xf32, #tpu.memory_space<vmem>>, %arg7: memref<1x32xf32, #tpu.memory_space<vmem>>, %arg8: memref<1x32xf32, #tpu.memory_space<vmem>>, %arg9: memref<1x32xf32, #tpu.memory_space<vmem>>, %arg10: memref<32x96xbf16, #tpu.memory_space<vmem>>, %arg11: memref<1x96xf32, #tpu.memory_space<vmem>>, %arg12: memref<32x32xbf16, #tpu.memory_space<vmem>>, %arg13: memref<1x32xf32, #tpu.memory_space<vmem>>, %arg14: memref<32x32xbf16, #tpu.memory_space<vmem>>, %arg15: memref<1x32xf32, #tpu.memory_space<vmem>>, %arg16: memref<32x64xbf16, #tpu.memory_space<vmem>>, %arg17: memref<1x64xf32, #tpu.memory_space<vmem>>, %arg18: memref<32x32xbf16, #tpu.memory_space<vmem>>, %arg19: memref<1x32xf32, #tpu.memory_space<vmem>>, %arg20: memref<32x2048xbf16, #tpu.memory_space<vmem>>, %arg21: memref<1x2048xf32, #tpu.memory_space<vmem>>, %arg22: memref<2048x32xbf16, #tpu.memory_space<vmem>>, %arg23: memref<1x32xf32, #tpu.memory_space<vmem>>, %arg24: memref<1x32xf32, #tpu.memory_space<vmem>>, %arg25: memref<1x32xf32, #tpu.memory_space<vmem>>, %arg26: memref<16x32xf32, #tpu.memory_space<vmem>>) attributes {dimension_semantics = [], scalar_prefetch = 0 : i64, scratch_operands = 0 : i64, tpu.core_type = #tpu.core_type<tc>} {
    %c0 = arith.constant 0 : index
    %c0_0 = arith.constant 0 : index
    %0 = vector.load %arg1[%c0, %c0_0] : memref<16x32xf32, #tpu.memory_space<vmem>>, vector<16x32xf32>
    %1 = arith.truncf %0 : vector<16x32xf32> to vector<16x32xbf16>
    %c0_1 = arith.constant 0 : index
    %c0_2 = arith.constant 0 : index
    %2 = vector.load %arg16[%c0_1, %c0_2] : memref<32x64xbf16, #tpu.memory_space<vmem>>, vector<32x64xbf16>
    %cst = arith.constant dense<0.000000e+00> : vector<16x64xf32>
    %3 = tpu.matmul %1, %2, %cst {dimension_numbers = #tpu.dot_dimension_numbers<[1], [0], [0], [1], [0, 0, 1, 1], [], []>} : vector<16x32xbf16>, vector<32x64xbf16>, vector<16x64xf32> -> vector<16x64xf32>
    %c0_3 = arith.constant 0 : index
    %c0_4 = arith.constant 0 : index
    %4 = vector.load %arg17[%c0_3, %c0_4] : memref<1x64xf32, #tpu.memory_space<vmem>>, vector<1x64xf32>
    %5 = vector.broadcast %4 : vector<1x64xf32> to vector<16x64xf32>
    %6 = arith.addf %3, %5 : vector<16x64xf32>
    %7 = vector.extract_strided_slice %6 {offsets = [0, 0], sizes = [16, 32], strides = [1, 1]} : vector<16x64xf32> to vector<16x32xf32>
    %8 = vector.extract_strided_slice %7 {offsets = [0, 0], sizes = [16, 8], strides = [1, 1]} : vector<16x32xf32> to vector<16x8xf32>
    %9 = vector.extract_strided_slice %7 {offsets = [0, 8], sizes = [16, 8], strides = [1, 1]} : vector<16x32xf32> to vector<16x8xf32>
    %10 = vector.extract_strided_slice %7 {offsets = [0, 16], sizes = [16, 8], strides = [1, 1]} : vector<16x32xf32> to vector<16x8xf32>
    %11 = vector.extract_strided_slice %7 {offsets = [0, 24], sizes = [16, 8], strides = [1, 1]} : vector<16x32xf32> to vector<16x8xf32>
    %12 = tpu.concatenate %8, %9, %10, %11 in 0 : vector<16x8xf32>, vector<16x8xf32>, vector<16x8xf32>, vector<16x8xf32> -> vector<64x8xf32>
    %13 = vector.extract_strided_slice %6 {offsets = [0, 32], sizes = [16, 32], strides = [1, 1]} : vector<16x64xf32> to vector<16x32xf32>
    %14 = vector.extract_strided_slice %13 {offsets = [0, 0], sizes = [16, 8], strides = [1, 1]} : vector<16x32xf32> to vector<16x8xf32>
    %15 = vector.extract_strided_slice %13 {offsets = [0, 8], sizes = [16, 8], strides = [1, 1]} : vector<16x32xf32> to vector<16x8xf32>
    %16 = vector.extract_strided_slice %13 {offsets = [0, 16], sizes = [16, 8], strides = [1, 1]} : vector<16x32xf32> to vector<16x8xf32>
    %17 = vector.extract_strided_slice %13 {offsets = [0, 24], sizes = [16, 8], strides = [1, 1]} : vector<16x32xf32> to vector<16x8xf32>
    %18 = tpu.concatenate %14, %15, %16, %17 in 0 : vector<16x8xf32>, vector<16x8xf32>, vector<16x8xf32>, vector<16x8xf32> -> vector<64x8xf32>
    %c0_5 = arith.constant 0 : index
    %c0_6 = arith.constant 0 : index
    %19 = vector.load %arg0[%c0_5, %c0_6] : memref<16x32xf32, #tpu.memory_space<vmem>>, vector<16x32xf32>
    %cst_7 = arith.constant dense<0.000000e+00> : vector<16xf32>
    %20 = vector.multi_reduction <add>, %19, %cst_7 [1] : vector<16x32xf32> to vector<16xf32>
    %21 = vector.shape_cast %20 : vector<16xf32> to vector<16x1xf32>
    %cst_8 = arith.constant 3.200000e+01 : f32
    %22 = vector.broadcast %cst_8 : f32 to vector<16x1xf32>
    %23 = arith.divf %21, %22 : vector<16x1xf32>
    %24 = vector.broadcast %23 : vector<16x1xf32> to vector<16x32xf32>
    %25 = arith.subf %19, %24 : vector<16x32xf32>
    %26 = arith.mulf %25, %25 : vector<16x32xf32>
    %cst_9 = arith.constant dense<0.000000e+00> : vector<16xf32>
    %27 = vector.multi_reduction <add>, %26, %cst_9 [1] : vector<16x32xf32> to vector<16xf32>
    %28 = vector.shape_cast %27 : vector<16xf32> to vector<16x1xf32>
    %cst_10 = arith.constant 3.100000e+01 : f32
    %29 = vector.broadcast %cst_10 : f32 to vector<16x1xf32>
    %30 = arith.divf %28, %29 : vector<16x1xf32>
    %c0_11 = arith.constant 0 : index
    %c0_12 = arith.constant 0 : index
    %31 = vector.load %arg4[%c0_11, %c0_12] : memref<1x32xf32, #tpu.memory_space<vmem>>, vector<1x32xf32>
    %32 = vector.broadcast %31 : vector<1x32xf32> to vector<16x32xf32>
    %33 = arith.mulf %32, %25 : vector<16x32xf32>
    %34 = math.sqrt %30 : vector<16x1xf32>
    %cst_13 = arith.constant 1.000000e-07 : f32
    %35 = vector.broadcast %cst_13 : f32 to vector<16x1xf32>
    %36 = arith.addf %34, %35 : vector<16x1xf32>
    %37 = vector.broadcast %36 : vector<16x1xf32> to vector<16x32xf32>
    %38 = arith.divf %33, %37 : vector<16x32xf32>
    %c0_14 = arith.constant 0 : index
    %c0_15 = arith.constant 0 : index
    %39 = vector.load %arg5[%c0_14, %c0_15] : memref<1x32xf32, #tpu.memory_space<vmem>>, vector<1x32xf32>
    %40 = vector.broadcast %39 : vector<1x32xf32> to vector<16x32xf32>
    %41 = arith.addf %38, %40 : vector<16x32xf32>
    %42 = arith.truncf %41 : vector<16x32xf32> to vector<16x32xbf16>
    %c0_16 = arith.constant 0 : index
    %c0_17 = arith.constant 0 : index
    %43 = vector.load %arg10[%c0_16, %c0_17] : memref<32x96xbf16, #tpu.memory_space<vmem>>, vector<32x96xbf16>
    %cst_18 = arith.constant dense<0.000000e+00> : vector<16x96xf32>
    %44 = tpu.matmul %42, %43, %cst_18 {dimension_numbers = #tpu.dot_dimension_numbers<[1], [0], [0], [1], [0, 0, 1, 1], [], []>} : vector<16x32xbf16>, vector<32x96xbf16>, vector<16x96xf32> -> vector<16x96xf32>
    %c0_19 = arith.constant 0 : index
    %c0_20 = arith.constant 0 : index
    %45 = vector.load %arg11[%c0_19, %c0_20] : memref<1x96xf32, #tpu.memory_space<vmem>>, vector<1x96xf32>
    %46 = vector.broadcast %45 : vector<1x96xf32> to vector<16x96xf32>
    %47 = arith.addf %44, %46 : vector<16x96xf32>
    %48 = vector.extract_strided_slice %47 {offsets = [0, 0], sizes = [16, 32], strides = [1, 1]} : vector<16x96xf32> to vector<16x32xf32>
    %49 = vector.extract_strided_slice %48 {offsets = [0, 0], sizes = [16, 8], strides = [1, 1]} : vector<16x32xf32> to vector<16x8xf32>
    %50 = vector.extract_strided_slice %48 {offsets = [0, 8], sizes = [16, 8], strides = [1, 1]} : vector<16x32xf32> to vector<16x8xf32>
    %51 = vector.extract_strided_slice %48 {offsets = [0, 16], sizes = [16, 8], strides = [1, 1]} : vector<16x32xf32> to vector<16x8xf32>
    %52 = vector.extract_strided_slice %48 {offsets = [0, 24], sizes = [16, 8], strides = [1, 1]} : vector<16x32xf32> to vector<16x8xf32>
    %53 = tpu.concatenate %49, %50, %51, %52 in 0 : vector<16x8xf32>, vector<16x8xf32>, vector<16x8xf32>, vector<16x8xf32> -> vector<64x8xf32>
    %54 = vector.extract_strided_slice %47 {offsets = [0, 32], sizes = [16, 32], strides = [1, 1]} : vector<16x96xf32> to vector<16x32xf32>
    %55 = vector.extract_strided_slice %54 {offsets = [0, 0], sizes = [16, 8], strides = [1, 1]} : vector<16x32xf32> to vector<16x8xf32>
    %56 = vector.extract_strided_slice %54 {offsets = [0, 8], sizes = [16, 8], strides = [1, 1]} : vector<16x32xf32> to vector<16x8xf32>
    %57 = vector.extract_strided_slice %54 {offsets = [0, 16], sizes = [16, 8], strides = [1, 1]} : vector<16x32xf32> to vector<16x8xf32>
    %58 = vector.extract_strided_slice %54 {offsets = [0, 24], sizes = [16, 8], strides = [1, 1]} : vector<16x32xf32> to vector<16x8xf32>
    %59 = tpu.concatenate %55, %56, %57, %58 in 0 : vector<16x8xf32>, vector<16x8xf32>, vector<16x8xf32>, vector<16x8xf32> -> vector<64x8xf32>
    %60 = vector.extract_strided_slice %47 {offsets = [0, 64], sizes = [16, 32], strides = [1, 1]} : vector<16x96xf32> to vector<16x32xf32>
    %61 = vector.extract_strided_slice %60 {offsets = [0, 0], sizes = [16, 8], strides = [1, 1]} : vector<16x32xf32> to vector<16x8xf32>
    %62 = vector.extract_strided_slice %60 {offsets = [0, 8], sizes = [16, 8], strides = [1, 1]} : vector<16x32xf32> to vector<16x8xf32>
    %63 = vector.extract_strided_slice %60 {offsets = [0, 16], sizes = [16, 8], strides = [1, 1]} : vector<16x32xf32> to vector<16x8xf32>
    %64 = vector.extract_strided_slice %60 {offsets = [0, 24], sizes = [16, 8], strides = [1, 1]} : vector<16x32xf32> to vector<16x8xf32>
    %65 = tpu.concatenate %61, %62, %63, %64 in 0 : vector<16x8xf32>, vector<16x8xf32>, vector<16x8xf32>, vector<16x8xf32> -> vector<64x8xf32>
    %66 = arith.truncf %53 : vector<64x8xf32> to vector<64x8xbf16>
    %67 = arith.truncf %59 : vector<64x8xf32> to vector<64x8xbf16>
    %cst_21 = arith.constant dense<0.000000e+00> : vector<64x64xf32>
    %68 = tpu.matmul %66, %67, %cst_21 {dimension_numbers = #tpu.dot_dimension_numbers<[1], [1], [0], [0], [0, 0, 1, 0], [], []>} : vector<64x8xbf16>, vector<64x8xbf16>, vector<64x64xf32> -> vector<64x64xf32>
    %c0_22 = arith.constant 0 : index
    %c0_23 = arith.constant 0 : index
    %69 = vector.load %arg2[%c0_22, %c0_23] : memref<64x64xf32, #tpu.memory_space<vmem>>, vector<64x64xf32>
    %70 = arith.addf %68, %69 : vector<64x64xf32>
    %cst_24 = arith.constant dense<0xFF800000> : vector<64xf32>
    %71 = vector.multi_reduction <maximumf>, %70, %cst_24 [1] : vector<64x64xf32> to vector<64xf32>
    %72 = vector.shape_cast %71 : vector<64xf32> to vector<64x1xf32>
    %73 = vector.broadcast %72 : vector<64x1xf32> to vector<64x64xf32>
    %74 = arith.subf %70, %73 : vector<64x64xf32>
    %75 = math.exp %74 : vector<64x64xf32>
    %cst_25 = arith.constant dense<0.000000e+00> : vector<64xf32>
    %76 = vector.multi_reduction <add>, %75, %cst_25 [1] : vector<64x64xf32> to vector<64xf32>
    %77 = vector.shape_cast %76 : vector<64xf32> to vector<64x1xf32>
    %78 = tpu.reciprocal %77 {approx = true} : vector<64x1xf32> -> vector<64x1xf32>
    %79 = vector.broadcast %78 : vector<64x1xf32> to vector<64x64xf32>
    %80 = arith.mulf %75, %79 : vector<64x64xf32>
    %81 = arith.truncf %80 : vector<64x64xf32> to vector<64x64xbf16>
    %82 = arith.truncf %65 : vector<64x8xf32> to vector<64x8xbf16>
    %cst_26 = arith.constant dense<0.000000e+00> : vector<64x8xf32>
    %83 = tpu.matmul %81, %82, %cst_26 {dimension_numbers = #tpu.dot_dimension_numbers<[1], [0], [0], [1], [0, 0, 1, 1], [], []>} : vector<64x64xbf16>, vector<64x8xbf16>, vector<64x8xf32> -> vector<64x8xf32>
    %84 = vector.extract_strided_slice %83 {offsets = [0, 0], sizes = [16, 8], strides = [1, 1]} : vector<64x8xf32> to vector<16x8xf32>
    %85 = vector.extract_strided_slice %83 {offsets = [16, 0], sizes = [16, 8], strides = [1, 1]} : vector<64x8xf32> to vector<16x8xf32>
    %86 = vector.extract_strided_slice %83 {offsets = [32, 0], sizes = [16, 8], strides = [1, 1]} : vector<64x8xf32> to vector<16x8xf32>
    %87 = vector.extract_strided_slice %83 {offsets = [48, 0], sizes = [16, 8], strides = [1, 1]} : vector<64x8xf32> to vector<16x8xf32>
    %88 = tpu.concatenate %84, %85, %86, %87 in 1 : vector<16x8xf32>, vector<16x8xf32>, vector<16x8xf32>, vector<16x8xf32> -> vector<16x32xf32>
    %89 = arith.truncf %88 : vector<16x32xf32> to vector<16x32xbf16>
    %c0_27 = arith.constant 0 : index
    %c0_28 = arith.constant 0 : index
    %90 = vector.load %arg12[%c0_27, %c0_28] : memref<32x32xbf16, #tpu.memory_space<vmem>>, vector<32x32xbf16>
    %cst_29 = arith.constant dense<0.000000e+00> : vector<16x32xf32>
    %91 = tpu.matmul %89, %90, %cst_29 {dimension_numbers = #tpu.dot_dimension_numbers<[1], [0], [0], [1], [0, 0, 1, 1], [], []>} : vector<16x32xbf16>, vector<32x32xbf16>, vector<16x32xf32> -> vector<16x32xf32>
    %c0_30 = arith.constant 0 : index
    %c0_31 = arith.constant 0 : index
    %92 = vector.load %arg13[%c0_30, %c0_31] : memref<1x32xf32, #tpu.memory_space<vmem>>, vector<1x32xf32>
    %93 = vector.broadcast %92 : vector<1x32xf32> to vector<16x32xf32>
    %94 = arith.addf %91, %93 : vector<16x32xf32>
    %95 = arith.addf %19, %94 : vector<16x32xf32>
    %cst_32 = arith.constant dense<0.000000e+00> : vector<16xf32>
    %96 = vector.multi_reduction <add>, %95, %cst_32 [1] : vector<16x32xf32> to vector<16xf32>
    %97 = vector.shape_cast %96 : vector<16xf32> to vector<16x1xf32>
    %cst_33 = arith.constant 3.200000e+01 : f32
    %98 = vector.broadcast %cst_33 : f32 to vector<16x1xf32>
    %99 = arith.divf %97, %98 : vector<16x1xf32>
    %100 = vector.broadcast %99 : vector<16x1xf32> to vector<16x32xf32>
    %101 = arith.subf %95, %100 : vector<16x32xf32>
    %102 = arith.mulf %101, %101 : vector<16x32xf32>
    %cst_34 = arith.constant dense<0.000000e+00> : vector<16xf32>
    %103 = vector.multi_reduction <add>, %102, %cst_34 [1] : vector<16x32xf32> to vector<16xf32>
    %104 = vector.shape_cast %103 : vector<16xf32> to vector<16x1xf32>
    %cst_35 = arith.constant 3.100000e+01 : f32
    %105 = vector.broadcast %cst_35 : f32 to vector<16x1xf32>
    %106 = arith.divf %104, %105 : vector<16x1xf32>
    %c0_36 = arith.constant 0 : index
    %c0_37 = arith.constant 0 : index
    %107 = vector.load %arg6[%c0_36, %c0_37] : memref<1x32xf32, #tpu.memory_space<vmem>>, vector<1x32xf32>
    %108 = vector.broadcast %107 : vector<1x32xf32> to vector<16x32xf32>
    %109 = arith.mulf %108, %101 : vector<16x32xf32>
    %110 = math.sqrt %106 : vector<16x1xf32>
    %cst_38 = arith.constant 1.000000e-07 : f32
    %111 = vector.broadcast %cst_38 : f32 to vector<16x1xf32>
    %112 = arith.addf %110, %111 : vector<16x1xf32>
    %113 = vector.broadcast %112 : vector<16x1xf32> to vector<16x32xf32>
    %114 = arith.divf %109, %113 : vector<16x32xf32>
    %c0_39 = arith.constant 0 : index
    %c0_40 = arith.constant 0 : index
    %115 = vector.load %arg7[%c0_39, %c0_40] : memref<1x32xf32, #tpu.memory_space<vmem>>, vector<1x32xf32>
    %116 = vector.broadcast %115 : vector<1x32xf32> to vector<16x32xf32>
    %117 = arith.addf %114, %116 : vector<16x32xf32>
    %118 = arith.truncf %117 : vector<16x32xf32> to vector<16x32xbf16>
    %c0_41 = arith.constant 0 : index
    %c0_42 = arith.constant 0 : index
    %119 = vector.load %arg14[%c0_41, %c0_42] : memref<32x32xbf16, #tpu.memory_space<vmem>>, vector<32x32xbf16>
    %cst_43 = arith.constant dense<0.000000e+00> : vector<16x32xf32>
    %120 = tpu.matmul %118, %119, %cst_43 {dimension_numbers = #tpu.dot_dimension_numbers<[1], [0], [0], [1], [0, 0, 1, 1], [], []>} : vector<16x32xbf16>, vector<32x32xbf16>, vector<16x32xf32> -> vector<16x32xf32>
    %c0_44 = arith.constant 0 : index
    %c0_45 = arith.constant 0 : index
    %121 = vector.load %arg15[%c0_44, %c0_45] : memref<1x32xf32, #tpu.memory_space<vmem>>, vector<1x32xf32>
    %122 = vector.broadcast %121 : vector<1x32xf32> to vector<16x32xf32>
    %123 = arith.addf %120, %122 : vector<16x32xf32>
    %124 = vector.extract_strided_slice %123 {offsets = [0, 0], sizes = [16, 8], strides = [1, 1]} : vector<16x32xf32> to vector<16x8xf32>
    %125 = vector.extract_strided_slice %123 {offsets = [0, 8], sizes = [16, 8], strides = [1, 1]} : vector<16x32xf32> to vector<16x8xf32>
    %126 = vector.extract_strided_slice %123 {offsets = [0, 16], sizes = [16, 8], strides = [1, 1]} : vector<16x32xf32> to vector<16x8xf32>
    %127 = vector.extract_strided_slice %123 {offsets = [0, 24], sizes = [16, 8], strides = [1, 1]} : vector<16x32xf32> to vector<16x8xf32>
    %128 = tpu.concatenate %124, %125, %126, %127 in 0 : vector<16x8xf32>, vector<16x8xf32>, vector<16x8xf32>, vector<16x8xf32> -> vector<64x8xf32>
    %129 = arith.truncf %128 : vector<64x8xf32> to vector<64x8xbf16>
    %130 = arith.truncf %12 : vector<64x8xf32> to vector<64x8xbf16>
    %cst_46 = arith.constant dense<0.000000e+00> : vector<64x64xf32>
    %131 = tpu.matmul %129, %130, %cst_46 {dimension_numbers = #tpu.dot_dimension_numbers<[1], [1], [0], [0], [0, 0, 1, 0], [], []>} : vector<64x8xbf16>, vector<64x8xbf16>, vector<64x64xf32> -> vector<64x64xf32>
    %c0_47 = arith.constant 0 : index
    %c0_48 = arith.constant 0 : index
    %132 = vector.load %arg3[%c0_47, %c0_48] : memref<64x64xf32, #tpu.memory_space<vmem>>, vector<64x64xf32>
    %133 = arith.addf %131, %132 : vector<64x64xf32>
    %cst_49 = arith.constant dense<0xFF800000> : vector<64xf32>
    %134 = vector.multi_reduction <maximumf>, %133, %cst_49 [1] : vector<64x64xf32> to vector<64xf32>
    %135 = vector.shape_cast %134 : vector<64xf32> to vector<64x1xf32>
    %136 = vector.broadcast %135 : vector<64x1xf32> to vector<64x64xf32>
    %137 = arith.subf %133, %136 : vector<64x64xf32>
    %138 = math.exp %137 : vector<64x64xf32>
    %cst_50 = arith.constant dense<0.000000e+00> : vector<64xf32>
    %139 = vector.multi_reduction <add>, %138, %cst_50 [1] : vector<64x64xf32> to vector<64xf32>
    %140 = vector.shape_cast %139 : vector<64xf32> to vector<64x1xf32>
    %141 = tpu.reciprocal %140 {approx = true} : vector<64x1xf32> -> vector<64x1xf32>
    %142 = vector.broadcast %141 : vector<64x1xf32> to vector<64x64xf32>
    %143 = arith.mulf %138, %142 : vector<64x64xf32>
    %144 = arith.truncf %143 : vector<64x64xf32> to vector<64x64xbf16>
    %145 = arith.truncf %18 : vector<64x8xf32> to vector<64x8xbf16>
    %cst_51 = arith.constant dense<0.000000e+00> : vector<64x8xf32>
    %146 = tpu.matmul %144, %145, %cst_51 {dimension_numbers = #tpu.dot_dimension_numbers<[1], [0], [0], [1], [0, 0, 1, 1], [], []>} : vector<64x64xbf16>, vector<64x8xbf16>, vector<64x8xf32> -> vector<64x8xf32>
    %147 = vector.extract_strided_slice %146 {offsets = [0, 0], sizes = [16, 8], strides = [1, 1]} : vector<64x8xf32> to vector<16x8xf32>
    %148 = vector.extract_strided_slice %146 {offsets = [16, 0], sizes = [16, 8], strides = [1, 1]} : vector<64x8xf32> to vector<16x8xf32>
    %149 = vector.extract_strided_slice %146 {offsets = [32, 0], sizes = [16, 8], strides = [1, 1]} : vector<64x8xf32> to vector<16x8xf32>
    %150 = vector.extract_strided_slice %146 {offsets = [48, 0], sizes = [16, 8], strides = [1, 1]} : vector<64x8xf32> to vector<16x8xf32>
    %151 = tpu.concatenate %147, %148, %149, %150 in 1 : vector<16x8xf32>, vector<16x8xf32>, vector<16x8xf32>, vector<16x8xf32> -> vector<16x32xf32>
    %152 = arith.truncf %151 : vector<16x32xf32> to vector<16x32xbf16>
    %c0_52 = arith.constant 0 : index
    %c0_53 = arith.constant 0 : index
    %153 = vector.load %arg18[%c0_52, %c0_53] : memref<32x32xbf16, #tpu.memory_space<vmem>>, vector<32x32xbf16>
    %cst_54 = arith.constant dense<0.000000e+00> : vector<16x32xf32>
    %154 = tpu.matmul %152, %153, %cst_54 {dimension_numbers = #tpu.dot_dimension_numbers<[1], [0], [0], [1], [0, 0, 1, 1], [], []>} : vector<16x32xbf16>, vector<32x32xbf16>, vector<16x32xf32> -> vector<16x32xf32>
    %c0_55 = arith.constant 0 : index
    %c0_56 = arith.constant 0 : index
    %155 = vector.load %arg19[%c0_55, %c0_56] : memref<1x32xf32, #tpu.memory_space<vmem>>, vector<1x32xf32>
    %156 = vector.broadcast %155 : vector<1x32xf32> to vector<16x32xf32>
    %157 = arith.addf %154, %156 : vector<16x32xf32>
    %158 = arith.addf %95, %157 : vector<16x32xf32>
    %cst_57 = arith.constant dense<0.000000e+00> : vector<16xf32>
    %159 = vector.multi_reduction <add>, %158, %cst_57 [1] : vector<16x32xf32> to vector<16xf32>
    %160 = vector.shape_cast %159 : vector<16xf32> to vector<16x1xf32>
    %cst_58 = arith.constant 3.200000e+01 : f32
    %161 = vector.broadcast %cst_58 : f32 to vector<16x1xf32>
    %162 = arith.divf %160, %161 : vector<16x1xf32>
    %163 = vector.broadcast %162 : vector<16x1xf32> to vector<16x32xf32>
    %164 = arith.subf %158, %163 : vector<16x32xf32>
    %165 = arith.mulf %164, %164 : vector<16x32xf32>
    %cst_59 = arith.constant dense<0.000000e+00> : vector<16xf32>
    %166 = vector.multi_reduction <add>, %165, %cst_59 [1] : vector<16x32xf32> to vector<16xf32>
    %167 = vector.shape_cast %166 : vector<16xf32> to vector<16x1xf32>
    %cst_60 = arith.constant 3.100000e+01 : f32
    %168 = vector.broadcast %cst_60 : f32 to vector<16x1xf32>
    %169 = arith.divf %167, %168 : vector<16x1xf32>
    %c0_61 = arith.constant 0 : index
    %c0_62 = arith.constant 0 : index
    %170 = vector.load %arg8[%c0_61, %c0_62] : memref<1x32xf32, #tpu.memory_space<vmem>>, vector<1x32xf32>
    %171 = vector.broadcast %170 : vector<1x32xf32> to vector<16x32xf32>
    %172 = arith.mulf %171, %164 : vector<16x32xf32>
    %173 = math.sqrt %169 : vector<16x1xf32>
    %cst_63 = arith.constant 1.000000e-07 : f32
    %174 = vector.broadcast %cst_63 : f32 to vector<16x1xf32>
    %175 = arith.addf %173, %174 : vector<16x1xf32>
    %176 = vector.broadcast %175 : vector<16x1xf32> to vector<16x32xf32>
    %177 = arith.divf %172, %176 : vector<16x32xf32>
    %c0_64 = arith.constant 0 : index
    %c0_65 = arith.constant 0 : index
    %178 = vector.load %arg9[%c0_64, %c0_65] : memref<1x32xf32, #tpu.memory_space<vmem>>, vector<1x32xf32>
    %179 = vector.broadcast %178 : vector<1x32xf32> to vector<16x32xf32>
    %180 = arith.addf %177, %179 : vector<16x32xf32>
    %181 = arith.truncf %180 : vector<16x32xf32> to vector<16x32xbf16>
    %c0_66 = arith.constant 0 : index
    %c0_67 = arith.constant 0 : index
    %182 = vector.load %arg20[%c0_66, %c0_67] : memref<32x2048xbf16, #tpu.memory_space<vmem>>, vector<32x2048xbf16>
    %cst_68 = arith.constant dense<0.000000e+00> : vector<16x2048xf32>
    %183 = tpu.matmul %181, %182, %cst_68 {dimension_numbers = #tpu.dot_dimension_numbers<[1], [0], [0], [1], [0, 0, 1, 1], [], []>} : vector<16x32xbf16>, vector<32x2048xbf16>, vector<16x2048xf32> -> vector<16x2048xf32>
    %c0_69 = arith.constant 0 : index
    %c0_70 = arith.constant 0 : index
    %184 = vector.load %arg21[%c0_69, %c0_70] : memref<1x2048xf32, #tpu.memory_space<vmem>>, vector<1x2048xf32>
    %185 = vector.broadcast %184 : vector<1x2048xf32> to vector<16x2048xf32>
    %186 = arith.addf %183, %185 : vector<16x2048xf32>
    %cst_71 = arith.constant 0.000000e+00 : f32
    %187 = vector.broadcast %cst_71 : f32 to vector<16x2048xf32>
    %188 = arith.maximumf %186, %187 : vector<16x2048xf32>
    %189 = arith.truncf %188 : vector<16x2048xf32> to vector<16x2048xbf16>
    %c0_72 = arith.constant 0 : index
    %c0_73 = arith.constant 0 : index
    %190 = vector.load %arg22[%c0_72, %c0_73] : memref<2048x32xbf16, #tpu.memory_space<vmem>>, vector<2048x32xbf16>
    %cst_74 = arith.constant dense<0.000000e+00> : vector<16x32xf32>
    %191 = tpu.matmul %189, %190, %cst_74 {dimension_numbers = #tpu.dot_dimension_numbers<[1], [0], [0], [1], [0, 0, 1, 1], [], []>} : vector<16x2048xbf16>, vector<2048x32xbf16>, vector<16x32xf32> -> vector<16x32xf32>
    %192 = arith.addf %158, %191 : vector<16x32xf32>
    %c0_75 = arith.constant 0 : index
    %c0_76 = arith.constant 0 : index
    %193 = vector.load %arg23[%c0_75, %c0_76] : memref<1x32xf32, #tpu.memory_space<vmem>>, vector<1x32xf32>
    %194 = vector.broadcast %193 : vector<1x32xf32> to vector<16x32xf32>
    %195 = arith.addf %192, %194 : vector<16x32xf32>
    %cst_77 = arith.constant dense<0.000000e+00> : vector<16xf32>
    %196 = vector.multi_reduction <add>, %195, %cst_77 [1] : vector<16x32xf32> to vector<16xf32>
    %197 = vector.shape_cast %196 : vector<16xf32> to vector<16x1xf32>
    %cst_78 = arith.constant 3.200000e+01 : f32
    %198 = vector.broadcast %cst_78 : f32 to vector<16x1xf32>
    %199 = arith.divf %197, %198 : vector<16x1xf32>
    %200 = vector.broadcast %199 : vector<16x1xf32> to vector<16x32xf32>
    %201 = arith.subf %195, %200 : vector<16x32xf32>
    %202 = arith.mulf %201, %201 : vector<16x32xf32>
    %cst_79 = arith.constant dense<0.000000e+00> : vector<16xf32>
    %203 = vector.multi_reduction <add>, %202, %cst_79 [1] : vector<16x32xf32> to vector<16xf32>
    %204 = vector.shape_cast %203 : vector<16xf32> to vector<16x1xf32>
    %cst_80 = arith.constant 3.100000e+01 : f32
    %205 = vector.broadcast %cst_80 : f32 to vector<16x1xf32>
    %206 = arith.divf %204, %205 : vector<16x1xf32>
    %c0_81 = arith.constant 0 : index
    %c0_82 = arith.constant 0 : index
    %207 = vector.load %arg4[%c0_81, %c0_82] : memref<1x32xf32, #tpu.memory_space<vmem>>, vector<1x32xf32>
    %208 = vector.broadcast %207 : vector<1x32xf32> to vector<16x32xf32>
    %209 = arith.mulf %208, %201 : vector<16x32xf32>
    %210 = math.sqrt %206 : vector<16x1xf32>
    %cst_83 = arith.constant 1.000000e-07 : f32
    %211 = vector.broadcast %cst_83 : f32 to vector<16x1xf32>
    %212 = arith.addf %210, %211 : vector<16x1xf32>
    %213 = vector.broadcast %212 : vector<16x1xf32> to vector<16x32xf32>
    %214 = arith.divf %209, %213 : vector<16x32xf32>
    %c0_84 = arith.constant 0 : index
    %c0_85 = arith.constant 0 : index
    %215 = vector.load %arg5[%c0_84, %c0_85] : memref<1x32xf32, #tpu.memory_space<vmem>>, vector<1x32xf32>
    %216 = vector.broadcast %215 : vector<1x32xf32> to vector<16x32xf32>
    %217 = arith.addf %214, %216 : vector<16x32xf32>
    %218 = arith.truncf %217 : vector<16x32xf32> to vector<16x32xbf16>
    %c0_86 = arith.constant 0 : index
    %c0_87 = arith.constant 0 : index
    %219 = vector.load %arg10[%c0_86, %c0_87] : memref<32x96xbf16, #tpu.memory_space<vmem>>, vector<32x96xbf16>
    %cst_88 = arith.constant dense<0.000000e+00> : vector<16x96xf32>
    %220 = tpu.matmul %218, %219, %cst_88 {dimension_numbers = #tpu.dot_dimension_numbers<[1], [0], [0], [1], [0, 0, 1, 1], [], []>} : vector<16x32xbf16>, vector<32x96xbf16>, vector<16x96xf32> -> vector<16x96xf32>
    %c0_89 = arith.constant 0 : index
    %c0_90 = arith.constant 0 : index
    %221 = vector.load %arg11[%c0_89, %c0_90] : memref<1x96xf32, #tpu.memory_space<vmem>>, vector<1x96xf32>
    %222 = vector.broadcast %221 : vector<1x96xf32> to vector<16x96xf32>
    %223 = arith.addf %220, %222 : vector<16x96xf32>
    %224 = vector.extract_strided_slice %223 {offsets = [0, 0], sizes = [16, 32], strides = [1, 1]} : vector<16x96xf32> to vector<16x32xf32>
    %225 = vector.extract_strided_slice %224 {offsets = [0, 0], sizes = [16, 8], strides = [1, 1]} : vector<16x32xf32> to vector<16x8xf32>
    %226 = vector.extract_strided_slice %224 {offsets = [0, 8], sizes = [16, 8], strides = [1, 1]} : vector<16x32xf32> to vector<16x8xf32>
    %227 = vector.extract_strided_slice %224 {offsets = [0, 16], sizes = [16, 8], strides = [1, 1]} : vector<16x32xf32> to vector<16x8xf32>
    %228 = vector.extract_strided_slice %224 {offsets = [0, 24], sizes = [16, 8], strides = [1, 1]} : vector<16x32xf32> to vector<16x8xf32>
    %229 = tpu.concatenate %225, %226, %227, %228 in 0 : vector<16x8xf32>, vector<16x8xf32>, vector<16x8xf32>, vector<16x8xf32> -> vector<64x8xf32>
    %230 = vector.extract_strided_slice %223 {offsets = [0, 32], sizes = [16, 32], strides = [1, 1]} : vector<16x96xf32> to vector<16x32xf32>
    %231 = vector.extract_strided_slice %230 {offsets = [0, 0], sizes = [16, 8], strides = [1, 1]} : vector<16x32xf32> to vector<16x8xf32>
    %232 = vector.extract_strided_slice %230 {offsets = [0, 8], sizes = [16, 8], strides = [1, 1]} : vector<16x32xf32> to vector<16x8xf32>
    %233 = vector.extract_strided_slice %230 {offsets = [0, 16], sizes = [16, 8], strides = [1, 1]} : vector<16x32xf32> to vector<16x8xf32>
    %234 = vector.extract_strided_slice %230 {offsets = [0, 24], sizes = [16, 8], strides = [1, 1]} : vector<16x32xf32> to vector<16x8xf32>
    %235 = tpu.concatenate %231, %232, %233, %234 in 0 : vector<16x8xf32>, vector<16x8xf32>, vector<16x8xf32>, vector<16x8xf32> -> vector<64x8xf32>
    %236 = vector.extract_strided_slice %223 {offsets = [0, 64], sizes = [16, 32], strides = [1, 1]} : vector<16x96xf32> to vector<16x32xf32>
    %237 = vector.extract_strided_slice %236 {offsets = [0, 0], sizes = [16, 8], strides = [1, 1]} : vector<16x32xf32> to vector<16x8xf32>
    %238 = vector.extract_strided_slice %236 {offsets = [0, 8], sizes = [16, 8], strides = [1, 1]} : vector<16x32xf32> to vector<16x8xf32>
    %239 = vector.extract_strided_slice %236 {offsets = [0, 16], sizes = [16, 8], strides = [1, 1]} : vector<16x32xf32> to vector<16x8xf32>
    %240 = vector.extract_strided_slice %236 {offsets = [0, 24], sizes = [16, 8], strides = [1, 1]} : vector<16x32xf32> to vector<16x8xf32>
    %241 = tpu.concatenate %237, %238, %239, %240 in 0 : vector<16x8xf32>, vector<16x8xf32>, vector<16x8xf32>, vector<16x8xf32> -> vector<64x8xf32>
    %242 = arith.truncf %229 : vector<64x8xf32> to vector<64x8xbf16>
    %243 = arith.truncf %235 : vector<64x8xf32> to vector<64x8xbf16>
    %cst_91 = arith.constant dense<0.000000e+00> : vector<64x64xf32>
    %244 = tpu.matmul %242, %243, %cst_91 {dimension_numbers = #tpu.dot_dimension_numbers<[1], [1], [0], [0], [0, 0, 1, 0], [], []>} : vector<64x8xbf16>, vector<64x8xbf16>, vector<64x64xf32> -> vector<64x64xf32>
    %c0_92 = arith.constant 0 : index
    %c0_93 = arith.constant 0 : index
    %245 = vector.load %arg2[%c0_92, %c0_93] : memref<64x64xf32, #tpu.memory_space<vmem>>, vector<64x64xf32>
    %246 = arith.addf %244, %245 : vector<64x64xf32>
    %cst_94 = arith.constant dense<0xFF800000> : vector<64xf32>
    %247 = vector.multi_reduction <maximumf>, %246, %cst_94 [1] : vector<64x64xf32> to vector<64xf32>
    %248 = vector.shape_cast %247 : vector<64xf32> to vector<64x1xf32>
    %249 = vector.broadcast %248 : vector<64x1xf32> to vector<64x64xf32>
    %250 = arith.subf %246, %249 : vector<64x64xf32>
    %251 = math.exp %250 : vector<64x64xf32>
    %cst_95 = arith.constant dense<0.000000e+00> : vector<64xf32>
    %252 = vector.multi_reduction <add>, %251, %cst_95 [1] : vector<64x64xf32> to vector<64xf32>
    %253 = vector.shape_cast %252 : vector<64xf32> to vector<64x1xf32>
    %254 = tpu.reciprocal %253 {approx = true} : vector<64x1xf32> -> vector<64x1xf32>
    %255 = vector.broadcast %254 : vector<64x1xf32> to vector<64x64xf32>
    %256 = arith.mulf %251, %255 : vector<64x64xf32>
    %257 = arith.truncf %256 : vector<64x64xf32> to vector<64x64xbf16>
    %258 = arith.truncf %241 : vector<64x8xf32> to vector<64x8xbf16>
    %cst_96 = arith.constant dense<0.000000e+00> : vector<64x8xf32>
    %259 = tpu.matmul %257, %258, %cst_96 {dimension_numbers = #tpu.dot_dimension_numbers<[1], [0], [0], [1], [0, 0, 1, 1], [], []>} : vector<64x64xbf16>, vector<64x8xbf16>, vector<64x8xf32> -> vector<64x8xf32>
    %260 = vector.extract_strided_slice %259 {offsets = [0, 0], sizes = [16, 8], strides = [1, 1]} : vector<64x8xf32> to vector<16x8xf32>
    %261 = vector.extract_strided_slice %259 {offsets = [16, 0], sizes = [16, 8], strides = [1, 1]} : vector<64x8xf32> to vector<16x8xf32>
    %262 = vector.extract_strided_slice %259 {offsets = [32, 0], sizes = [16, 8], strides = [1, 1]} : vector<64x8xf32> to vector<16x8xf32>
    %263 = vector.extract_strided_slice %259 {offsets = [48, 0], sizes = [16, 8], strides = [1, 1]} : vector<64x8xf32> to vector<16x8xf32>
    %264 = tpu.concatenate %260, %261, %262, %263 in 1 : vector<16x8xf32>, vector<16x8xf32>, vector<16x8xf32>, vector<16x8xf32> -> vector<16x32xf32>
    %265 = arith.truncf %264 : vector<16x32xf32> to vector<16x32xbf16>
    %c0_97 = arith.constant 0 : index
    %c0_98 = arith.constant 0 : index
    %266 = vector.load %arg12[%c0_97, %c0_98] : memref<32x32xbf16, #tpu.memory_space<vmem>>, vector<32x32xbf16>
    %cst_99 = arith.constant dense<0.000000e+00> : vector<16x32xf32>
    %267 = tpu.matmul %265, %266, %cst_99 {dimension_numbers = #tpu.dot_dimension_numbers<[1], [0], [0], [1], [0, 0, 1, 1], [], []>} : vector<16x32xbf16>, vector<32x32xbf16>, vector<16x32xf32> -> vector<16x32xf32>
    %c0_100 = arith.constant 0 : index
    %c0_101 = arith.constant 0 : index
    %268 = vector.load %arg13[%c0_100, %c0_101] : memref<1x32xf32, #tpu.memory_space<vmem>>, vector<1x32xf32>
    %269 = vector.broadcast %268 : vector<1x32xf32> to vector<16x32xf32>
    %270 = arith.addf %267, %269 : vector<16x32xf32>
    %271 = arith.addf %195, %270 : vector<16x32xf32>
    %cst_102 = arith.constant dense<0.000000e+00> : vector<16xf32>
    %272 = vector.multi_reduction <add>, %271, %cst_102 [1] : vector<16x32xf32> to vector<16xf32>
    %273 = vector.shape_cast %272 : vector<16xf32> to vector<16x1xf32>
    %cst_103 = arith.constant 3.200000e+01 : f32
    %274 = vector.broadcast %cst_103 : f32 to vector<16x1xf32>
    %275 = arith.divf %273, %274 : vector<16x1xf32>
    %276 = vector.broadcast %275 : vector<16x1xf32> to vector<16x32xf32>
    %277 = arith.subf %271, %276 : vector<16x32xf32>
    %278 = arith.mulf %277, %277 : vector<16x32xf32>
    %cst_104 = arith.constant dense<0.000000e+00> : vector<16xf32>
    %279 = vector.multi_reduction <add>, %278, %cst_104 [1] : vector<16x32xf32> to vector<16xf32>
    %280 = vector.shape_cast %279 : vector<16xf32> to vector<16x1xf32>
    %cst_105 = arith.constant 3.100000e+01 : f32
    %281 = vector.broadcast %cst_105 : f32 to vector<16x1xf32>
    %282 = arith.divf %280, %281 : vector<16x1xf32>
    %c0_106 = arith.constant 0 : index
    %c0_107 = arith.constant 0 : index
    %283 = vector.load %arg6[%c0_106, %c0_107] : memref<1x32xf32, #tpu.memory_space<vmem>>, vector<1x32xf32>
    %284 = vector.broadcast %283 : vector<1x32xf32> to vector<16x32xf32>
    %285 = arith.mulf %284, %277 : vector<16x32xf32>
    %286 = math.sqrt %282 : vector<16x1xf32>
    %cst_108 = arith.constant 1.000000e-07 : f32
    %287 = vector.broadcast %cst_108 : f32 to vector<16x1xf32>
    %288 = arith.addf %286, %287 : vector<16x1xf32>
    %289 = vector.broadcast %288 : vector<16x1xf32> to vector<16x32xf32>
    %290 = arith.divf %285, %289 : vector<16x32xf32>
    %c0_109 = arith.constant 0 : index
    %c0_110 = arith.constant 0 : index
    %291 = vector.load %arg7[%c0_109, %c0_110] : memref<1x32xf32, #tpu.memory_space<vmem>>, vector<1x32xf32>
    %292 = vector.broadcast %291 : vector<1x32xf32> to vector<16x32xf32>
    %293 = arith.addf %290, %292 : vector<16x32xf32>
    %294 = arith.truncf %293 : vector<16x32xf32> to vector<16x32xbf16>
    %c0_111 = arith.constant 0 : index
    %c0_112 = arith.constant 0 : index
    %295 = vector.load %arg14[%c0_111, %c0_112] : memref<32x32xbf16, #tpu.memory_space<vmem>>, vector<32x32xbf16>
    %cst_113 = arith.constant dense<0.000000e+00> : vector<16x32xf32>
    %296 = tpu.matmul %294, %295, %cst_113 {dimension_numbers = #tpu.dot_dimension_numbers<[1], [0], [0], [1], [0, 0, 1, 1], [], []>} : vector<16x32xbf16>, vector<32x32xbf16>, vector<16x32xf32> -> vector<16x32xf32>
    %c0_114 = arith.constant 0 : index
    %c0_115 = arith.constant 0 : index
    %297 = vector.load %arg15[%c0_114, %c0_115] : memref<1x32xf32, #tpu.memory_space<vmem>>, vector<1x32xf32>
    %298 = vector.broadcast %297 : vector<1x32xf32> to vector<16x32xf32>
    %299 = arith.addf %296, %298 : vector<16x32xf32>
    %300 = vector.extract_strided_slice %299 {offsets = [0, 0], sizes = [16, 8], strides = [1, 1]} : vector<16x32xf32> to vector<16x8xf32>
    %301 = vector.extract_strided_slice %299 {offsets = [0, 8], sizes = [16, 8], strides = [1, 1]} : vector<16x32xf32> to vector<16x8xf32>
    %302 = vector.extract_strided_slice %299 {offsets = [0, 16], sizes = [16, 8], strides = [1, 1]} : vector<16x32xf32> to vector<16x8xf32>
    %303 = vector.extract_strided_slice %299 {offsets = [0, 24], sizes = [16, 8], strides = [1, 1]} : vector<16x32xf32> to vector<16x8xf32>
    %304 = tpu.concatenate %300, %301, %302, %303 in 0 : vector<16x8xf32>, vector<16x8xf32>, vector<16x8xf32>, vector<16x8xf32> -> vector<64x8xf32>
    %305 = arith.truncf %304 : vector<64x8xf32> to vector<64x8xbf16>
    %306 = arith.truncf %12 : vector<64x8xf32> to vector<64x8xbf16>
    %cst_116 = arith.constant dense<0.000000e+00> : vector<64x64xf32>
    %307 = tpu.matmul %305, %306, %cst_116 {dimension_numbers = #tpu.dot_dimension_numbers<[1], [1], [0], [0], [0, 0, 1, 0], [], []>} : vector<64x8xbf16>, vector<64x8xbf16>, vector<64x64xf32> -> vector<64x64xf32>
    %c0_117 = arith.constant 0 : index
    %c0_118 = arith.constant 0 : index
    %308 = vector.load %arg3[%c0_117, %c0_118] : memref<64x64xf32, #tpu.memory_space<vmem>>, vector<64x64xf32>
    %309 = arith.addf %307, %308 : vector<64x64xf32>
    %cst_119 = arith.constant dense<0xFF800000> : vector<64xf32>
    %310 = vector.multi_reduction <maximumf>, %309, %cst_119 [1] : vector<64x64xf32> to vector<64xf32>
    %311 = vector.shape_cast %310 : vector<64xf32> to vector<64x1xf32>
    %312 = vector.broadcast %311 : vector<64x1xf32> to vector<64x64xf32>
    %313 = arith.subf %309, %312 : vector<64x64xf32>
    %314 = math.exp %313 : vector<64x64xf32>
    %cst_120 = arith.constant dense<0.000000e+00> : vector<64xf32>
    %315 = vector.multi_reduction <add>, %314, %cst_120 [1] : vector<64x64xf32> to vector<64xf32>
    %316 = vector.shape_cast %315 : vector<64xf32> to vector<64x1xf32>
    %317 = tpu.reciprocal %316 {approx = true} : vector<64x1xf32> -> vector<64x1xf32>
    %318 = vector.broadcast %317 : vector<64x1xf32> to vector<64x64xf32>
    %319 = arith.mulf %314, %318 : vector<64x64xf32>
    %320 = arith.truncf %319 : vector<64x64xf32> to vector<64x64xbf16>
    %321 = arith.truncf %18 : vector<64x8xf32> to vector<64x8xbf16>
    %cst_121 = arith.constant dense<0.000000e+00> : vector<64x8xf32>
    %322 = tpu.matmul %320, %321, %cst_121 {dimension_numbers = #tpu.dot_dimension_numbers<[1], [0], [0], [1], [0, 0, 1, 1], [], []>} : vector<64x64xbf16>, vector<64x8xbf16>, vector<64x8xf32> -> vector<64x8xf32>
    %323 = vector.extract_strided_slice %322 {offsets = [0, 0], sizes = [16, 8], strides = [1, 1]} : vector<64x8xf32> to vector<16x8xf32>
    %324 = vector.extract_strided_slice %322 {offsets = [16, 0], sizes = [16, 8], strides = [1, 1]} : vector<64x8xf32> to vector<16x8xf32>
    %325 = vector.extract_strided_slice %322 {offsets = [32, 0], sizes = [16, 8], strides = [1, 1]} : vector<64x8xf32> to vector<16x8xf32>
    %326 = vector.extract_strided_slice %322 {offsets = [48, 0], sizes = [16, 8], strides = [1, 1]} : vector<64x8xf32> to vector<16x8xf32>
    %327 = tpu.concatenate %323, %324, %325, %326 in 1 : vector<16x8xf32>, vector<16x8xf32>, vector<16x8xf32>, vector<16x8xf32> -> vector<16x32xf32>
    %328 = arith.truncf %327 : vector<16x32xf32> to vector<16x32xbf16>
    %c0_122 = arith.constant 0 : index
    %c0_123 = arith.constant 0 : index
    %329 = vector.load %arg18[%c0_122, %c0_123] : memref<32x32xbf16, #tpu.memory_space<vmem>>, vector<32x32xbf16>
    %cst_124 = arith.constant dense<0.000000e+00> : vector<16x32xf32>
    %330 = tpu.matmul %328, %329, %cst_124 {dimension_numbers = #tpu.dot_dimension_numbers<[1], [0], [0], [1], [0, 0, 1, 1], [], []>} : vector<16x32xbf16>, vector<32x32xbf16>, vector<16x32xf32> -> vector<16x32xf32>
    %c0_125 = arith.constant 0 : index
    %c0_126 = arith.constant 0 : index
    %331 = vector.load %arg19[%c0_125, %c0_126] : memref<1x32xf32, #tpu.memory_space<vmem>>, vector<1x32xf32>
    %332 = vector.broadcast %331 : vector<1x32xf32> to vector<16x32xf32>
    %333 = arith.addf %330, %332 : vector<16x32xf32>
    %334 = arith.addf %271, %333 : vector<16x32xf32>
    %cst_127 = arith.constant dense<0.000000e+00> : vector<16xf32>
    %335 = vector.multi_reduction <add>, %334, %cst_127 [1] : vector<16x32xf32> to vector<16xf32>
    %336 = vector.shape_cast %335 : vector<16xf32> to vector<16x1xf32>
    %cst_128 = arith.constant 3.200000e+01 : f32
    %337 = vector.broadcast %cst_128 : f32 to vector<16x1xf32>
    %338 = arith.divf %336, %337 : vector<16x1xf32>
    %339 = vector.broadcast %338 : vector<16x1xf32> to vector<16x32xf32>
    %340 = arith.subf %334, %339 : vector<16x32xf32>
    %341 = arith.mulf %340, %340 : vector<16x32xf32>
    %cst_129 = arith.constant dense<0.000000e+00> : vector<16xf32>
    %342 = vector.multi_reduction <add>, %341, %cst_129 [1] : vector<16x32xf32> to vector<16xf32>
    %343 = vector.shape_cast %342 : vector<16xf32> to vector<16x1xf32>
    %cst_130 = arith.constant 3.100000e+01 : f32
    %344 = vector.broadcast %cst_130 : f32 to vector<16x1xf32>
    %345 = arith.divf %343, %344 : vector<16x1xf32>
    %c0_131 = arith.constant 0 : index
    %c0_132 = arith.constant 0 : index
    %346 = vector.load %arg8[%c0_131, %c0_132] : memref<1x32xf32, #tpu.memory_space<vmem>>, vector<1x32xf32>
    %347 = vector.broadcast %346 : vector<1x32xf32> to vector<16x32xf32>
    %348 = arith.mulf %347, %340 : vector<16x32xf32>
    %349 = math.sqrt %345 : vector<16x1xf32>
    %cst_133 = arith.constant 1.000000e-07 : f32
    %350 = vector.broadcast %cst_133 : f32 to vector<16x1xf32>
    %351 = arith.addf %349, %350 : vector<16x1xf32>
    %352 = vector.broadcast %351 : vector<16x1xf32> to vector<16x32xf32>
    %353 = arith.divf %348, %352 : vector<16x32xf32>
    %c0_134 = arith.constant 0 : index
    %c0_135 = arith.constant 0 : index
    %354 = vector.load %arg9[%c0_134, %c0_135] : memref<1x32xf32, #tpu.memory_space<vmem>>, vector<1x32xf32>
    %355 = vector.broadcast %354 : vector<1x32xf32> to vector<16x32xf32>
    %356 = arith.addf %353, %355 : vector<16x32xf32>
    %357 = arith.truncf %356 : vector<16x32xf32> to vector<16x32xbf16>
    %c0_136 = arith.constant 0 : index
    %c0_137 = arith.constant 0 : index
    %358 = vector.load %arg20[%c0_136, %c0_137] : memref<32x2048xbf16, #tpu.memory_space<vmem>>, vector<32x2048xbf16>
    %cst_138 = arith.constant dense<0.000000e+00> : vector<16x2048xf32>
    %359 = tpu.matmul %357, %358, %cst_138 {dimension_numbers = #tpu.dot_dimension_numbers<[1], [0], [0], [1], [0, 0, 1, 1], [], []>} : vector<16x32xbf16>, vector<32x2048xbf16>, vector<16x2048xf32> -> vector<16x2048xf32>
    %c0_139 = arith.constant 0 : index
    %c0_140 = arith.constant 0 : index
    %360 = vector.load %arg21[%c0_139, %c0_140] : memref<1x2048xf32, #tpu.memory_space<vmem>>, vector<1x2048xf32>
    %361 = vector.broadcast %360 : vector<1x2048xf32> to vector<16x2048xf32>
    %362 = arith.addf %359, %361 : vector<16x2048xf32>
    %cst_141 = arith.constant 0.000000e+00 : f32
    %363 = vector.broadcast %cst_141 : f32 to vector<16x2048xf32>
    %364 = arith.maximumf %362, %363 : vector<16x2048xf32>
    %365 = arith.truncf %364 : vector<16x2048xf32> to vector<16x2048xbf16>
    %c0_142 = arith.constant 0 : index
    %c0_143 = arith.constant 0 : index
    %366 = vector.load %arg22[%c0_142, %c0_143] : memref<2048x32xbf16, #tpu.memory_space<vmem>>, vector<2048x32xbf16>
    %cst_144 = arith.constant dense<0.000000e+00> : vector<16x32xf32>
    %367 = tpu.matmul %365, %366, %cst_144 {dimension_numbers = #tpu.dot_dimension_numbers<[1], [0], [0], [1], [0, 0, 1, 1], [], []>} : vector<16x2048xbf16>, vector<2048x32xbf16>, vector<16x32xf32> -> vector<16x32xf32>
    %368 = arith.addf %334, %367 : vector<16x32xf32>
    %c0_145 = arith.constant 0 : index
    %c0_146 = arith.constant 0 : index
    %369 = vector.load %arg23[%c0_145, %c0_146] : memref<1x32xf32, #tpu.memory_space<vmem>>, vector<1x32xf32>
    %370 = vector.broadcast %369 : vector<1x32xf32> to vector<16x32xf32>
    %371 = arith.addf %368, %370 : vector<16x32xf32>
    %cst_147 = arith.constant dense<0.000000e+00> : vector<16xf32>
    %372 = vector.multi_reduction <add>, %371, %cst_147 [1] : vector<16x32xf32> to vector<16xf32>
    %373 = vector.shape_cast %372 : vector<16xf32> to vector<16x1xf32>
    %cst_148 = arith.constant 3.200000e+01 : f32
    %374 = vector.broadcast %cst_148 : f32 to vector<16x1xf32>
    %375 = arith.divf %373, %374 : vector<16x1xf32>
    %376 = vector.broadcast %375 : vector<16x1xf32> to vector<16x32xf32>
    %377 = arith.subf %371, %376 : vector<16x32xf32>
    %378 = arith.mulf %377, %377 : vector<16x32xf32>
    %cst_149 = arith.constant dense<0.000000e+00> : vector<16xf32>
    %379 = vector.multi_reduction <add>, %378, %cst_149 [1] : vector<16x32xf32> to vector<16xf32>
    %380 = vector.shape_cast %379 : vector<16xf32> to vector<16x1xf32>
    %cst_150 = arith.constant 3.100000e+01 : f32
    %381 = vector.broadcast %cst_150 : f32 to vector<16x1xf32>
    %382 = arith.divf %380, %381 : vector<16x1xf32>
    %c0_151 = arith.constant 0 : index
    %c0_152 = arith.constant 0 : index
    %383 = vector.load %arg24[%c0_151, %c0_152] : memref<1x32xf32, #tpu.memory_space<vmem>>, vector<1x32xf32>
    %384 = vector.broadcast %383 : vector<1x32xf32> to vector<16x32xf32>
    %385 = arith.mulf %384, %377 : vector<16x32xf32>
    %386 = math.sqrt %382 : vector<16x1xf32>
    %cst_153 = arith.constant 1.000000e-07 : f32
    %387 = vector.broadcast %cst_153 : f32 to vector<16x1xf32>
    %388 = arith.addf %386, %387 : vector<16x1xf32>
    %389 = vector.broadcast %388 : vector<16x1xf32> to vector<16x32xf32>
    %390 = arith.divf %385, %389 : vector<16x32xf32>
    %c0_154 = arith.constant 0 : index
    %c0_155 = arith.constant 0 : index
    %391 = vector.load %arg25[%c0_154, %c0_155] : memref<1x32xf32, #tpu.memory_space<vmem>>, vector<1x32xf32>
    %392 = vector.broadcast %391 : vector<1x32xf32> to vector<16x32xf32>
    %393 = arith.addf %390, %392 : vector<16x32xf32>
    %c0_156 = arith.constant 0 : index
    %c0_157 = arith.constant 0 : index
    %394 = vector.load %arg26[%c0_156, %c0_157] : memref<16x32xf32, #tpu.memory_space<vmem>>, vector<16x32xf32>
    tpu.vector_store %arg26[%c0_156, %c0_157], %393 {strides = array<i32>} : memref<16x32xf32, #tpu.memory_space<vmem>>, vector<16x32xf32>,
    return
  }
}

</mosaic_0001>

<llo_original>
// kernel: decoder_block.1
$region0: #{decoder_block.1}
  #allocation0 [shape = 'u32[]', space=smem, size = 0x4, offset = 0x4, fixed_abs, tag = 'smem constant byte address 0x4 - core index']
  #allocation1 [shape = 'u32[144,128]{1,0:T(1,128)}', space=vmem, size = 0x12000, scoped, tag = 'internal scratch']
  %s0 = inlined_call_operand.vmem [shape: f32[16,32], index: 0, kind: input, shape index: {}]
  %s1 = inlined_call_operand.vmem [shape: f32[16,32], index: 1, kind: input, shape index: {}]
  %s2 = inlined_call_operand.vmem [shape: f32[64,64], index: 2, kind: input, shape index: {}]
  %s3 = inlined_call_operand.vmem [shape: f32[64,64], index: 3, kind: input, shape index: {}]
  %s4 = inlined_call_operand.vmem [shape: f32[1,32], index: 4, kind: input, shape index: {}]
  %s5 = inlined_call_operand.vmem [shape: f32[1,32], index: 5, kind: input, shape index: {}]
  %s6 = inlined_call_operand.vmem [shape: f32[1,32], index: 6, kind: input, shape index: {}]
  %s7 = inlined_call_operand.vmem [shape: f32[1,32], index: 7, kind: input, shape index: {}]
  %s8 = inlined_call_operand.vmem [shape: f32[1,32], index: 8, kind: input, shape index: {}]
  %s9 = inlined_call_operand.vmem [shape: f32[1,32], index: 9, kind: input, shape index: {}]
  %s10 = inlined_call_operand.vmem [shape: bf16[32,96], index: 10, kind: input, shape index: {}]
  %s11 = inlined_call_operand.vmem [shape: f32[1,96], index: 11, kind: input, shape index: {}]
  %s12 = inlined_call_operand.vmem [shape: bf16[32,32], index: 12, kind: input, shape index: {}]
  %s13 = inlined_call_operand.vmem [shape: f32[1,32], index: 13, kind: input, shape index: {}]
  %s14 = inlined_call_operand.vmem [shape: bf16[32,32], index: 14, kind: input, shape index: {}]
  %s15 = inlined_call_operand.vmem [shape: f32[1,32], index: 15, kind: input, shape index: {}]
  %s16 = inlined_call_operand.vmem [shape: bf16[32,64], index: 16, kind: input, shape index: {}]
  %s17 = inlined_call_operand.vmem [shape: f32[1,64], index: 17, kind: input, shape index: {}]
  %s18 = inlined_call_operand.vmem [shape: bf16[32,32], index: 18, kind: input, shape index: {}]
  %s19 = inlined_call_operand.vmem [shape: f32[1,32], index: 19, kind: input, shape index: {}]
  %s20 = inlined_call_operand.vmem [shape: bf16[32,2048], index: 20, kind: input, shape index: {}]
  %s21 = inlined_call_operand.vmem [shape: f32[1,2048], index: 21, kind: input, shape index: {}]
  %s22 = inlined_call_operand.vmem [shape: bf16[2048,32], index: 22, kind: input, shape index: {}]
  %s23 = inlined_call_operand.vmem [shape: f32[1,32], index: 23, kind: input, shape index: {}]
  %s24 = inlined_call_operand.vmem [shape: f32[1,32], index: 24, kind: input, shape index: {}]
  %s25 = inlined_call_operand.vmem [shape: f32[1,32], index: 25, kind: input, shape index: {}]
  %s26 = inlined_call_operand.hbm [shape: f32[16,32], index: 26, kind: output, shape index: {}]
  %s27 = sld [smem:[#allocation0]]
  $region114: #{decoder_block.1} parent=0
    _
  %s29 = ssub.s32 1, %s27
  %s30 = scalar_select 0, %s29, %s27
  $region1: #{decoder_block.1} parent=0
    #allocation2 [shape = 'u8[8192]{0}', space=vmem, size = 0x2000, scoped, tag = 'output window, operand 0, single buffered']
    #allocation3 [shape = 's32[1]{0}', space=sflag, size = 0x4, scoped, tag = 'scoped memory for decoder_block.1']
    %31 = vsyncpa [#allocation3], 0
    // Predicated region
    $region2: #{decoder_block.1} parent=1 // pred_check
      _
    $region3: #{decoder_block.1} parent=1 // pred_check_branch
      %33 = sbr.rel (0) target = $region5
    $region4: #{decoder_block.1} parent=1 // pred_region
      _
    $region5: #{decoder_block.1} parent=1 // pred_fallthru
      _
    // Predicated region
    $region6: #{decoder_block.1} parent=1 // pred_check
      _
    $region7: #{decoder_block.1} parent=1 // pred_check_branch
      %35 = sbr.rel (0) target = $region9
    $region8: #{decoder_block.1} parent=1 // pred_region
      _
    $region9: #{decoder_block.1} parent=1 // pred_fallthru
      _
    // Predicated region
    $region10: #{decoder_block.1} parent=1 // pred_check
      _
    $region11: #{decoder_block.1} parent=1 // pred_check_branch
      %37 = sbr.rel (0) target = $region13
    $region12: #{decoder_block.1} parent=1 // pred_region
      _
    $region13: #{decoder_block.1} parent=1 // pred_fallthru
      _
    // Predicated region
    $region14: #{decoder_block.1} parent=1 // pred_check
      _
    $region15: #{decoder_block.1} parent=1 // pred_check_branch
      %39 = sbr.rel (0) target = $region17
    $region16: #{decoder_block.1} parent=1 // pred_region
      _
    $region17: #{decoder_block.1} parent=1 // pred_fallthru
      _
    // Predicated region
    $region18: #{decoder_block.1} parent=1 // pred_check
      _
    $region19: #{decoder_block.1} parent=1 // pred_check_branch
      %41 = sbr.rel (0) target = $region21
    $region20: #{decoder_block.1} parent=1 // pred_region
      _
    $region21: #{decoder_block.1} parent=1 // pred_fallthru
      _
    // Predicated region
    $region22: #{decoder_block.1} parent=1 // pred_check
      _
    $region23: #{decoder_block.1} parent=1 // pred_check_branch
      %43 = sbr.rel (0) target = $region25
    $region24: #{decoder_block.1} parent=1 // pred_region
      _
    $region25: #{decoder_block.1} parent=1 // pred_fallthru
      _
    // Predicated region
    $region26: #{decoder_block.1} parent=1 // pred_check
      _
    $region27: #{decoder_block.1} parent=1 // pred_check_branch
      %45 = sbr.rel (0) target = $region29
    $region28: #{decoder_block.1} parent=1 // pred_region
      _
    $region29: #{decoder_block.1} parent=1 // pred_fallthru
      _
    // Predicated region
    $region30: #{decoder_block.1} parent=1 // pred_check
      _
    $region31: #{decoder_block.1} parent=1 // pred_check_branch
      %47 = sbr.rel (0) target = $region33
    $region32: #{decoder_block.1} parent=1 // pred_region
      _
    $region33: #{decoder_block.1} parent=1 // pred_fallthru
      _
    // Predicated region
    $region34: #{decoder_block.1} parent=1 // pred_check
      _
    $region35: #{decoder_block.1} parent=1 // pred_check_branch
      %49 = sbr.rel (0) target = $region37
    $region36: #{decoder_block.1} parent=1 // pred_region
      _
    $region37: #{decoder_block.1} parent=1 // pred_fallthru
      _
    // Predicated region
    $region38: #{decoder_block.1} parent=1 // pred_check
      _
    $region39: #{decoder_block.1} parent=1 // pred_check_branch
      %51 = sbr.rel (0) target = $region41
    $region40: #{decoder_block.1} parent=1 // pred_region
      _
    $region41: #{decoder_block.1} parent=1 // pred_fallthru
      _
    // Predicated region
    $region42: #{decoder_block.1} parent=1 // pred_check
      _
    $region43: #{decoder_block.1} parent=1 // pred_check_branch
      %53 = sbr.rel (0) target = $region45
    $region44: #{decoder_block.1} parent=1 // pred_region
      _
    $region45: #{decoder_block.1} parent=1 // pred_fallthru
      _
    // Predicated region
    $region46: #{decoder_block.1} parent=1 // pred_check
      _
    $region47: #{decoder_block.1} parent=1 // pred_check_branch
      %55 = sbr.rel (0) target = $region49
    $region48: #{decoder_block.1} parent=1 // pred_region
      _
    $region49: #{decoder_block.1} parent=1 // pred_fallthru
      _
    // Predicated region
    $region50: #{decoder_block.1} parent=1 // pred_check
      _
    $region51: #{decoder_block.1} parent=1 // pred_check_branch
      %57 = sbr.rel (0) target = $region53
    $region52: #{decoder_block.1} parent=1 // pred_region
      _
    $region53: #{decoder_block.1} parent=1 // pred_fallthru
      _
    // Predicated region
    $region54: #{decoder_block.1} parent=1 // pred_check
      _
    $region55: #{decoder_block.1} parent=1 // pred_check_branch
      %59 = sbr.rel (0) target = $region57
    $region56: #{decoder_block.1} parent=1 // pred_region
      _
    $region57: #{decoder_block.1} parent=1 // pred_fallthru
      _
    // Predicated region
    $region58: #{decoder_block.1} parent=1 // pred_check
      _
    $region59: #{decoder_block.1} parent=1 // pred_check_branch
      %61 = sbr.rel (0) target = $region61
    $region60: #{decoder_block.1} parent=1 // pred_region
      _
    $region61: #{decoder_block.1} parent=1 // pred_fallthru
      _
    // Predicated region
    $region62: #{decoder_block.1} parent=1 // pred_check
      _
    $region63: #{decoder_block.1} parent=1 // pred_check_branch
      %63 = sbr.rel (0) target = $region65
    $region64: #{decoder_block.1} parent=1 // pred_region
      _
    $region65: #{decoder_block.1} parent=1 // pred_fallthru
      _
    // Predicated region
    $region66: #{decoder_block.1} parent=1 // pred_check
      _
    $region67: #{decoder_block.1} parent=1 // pred_check_branch
      %65 = sbr.rel (0) target = $region69
    $region68: #{decoder_block.1} parent=1 // pred_region
      _
    $region69: #{decoder_block.1} parent=1 // pred_fallthru
      _
    // Predicated region
    $region70: #{decoder_block.1} parent=1 // pred_check
      _
    $region71: #{decoder_block.1} parent=1 // pred_check_branch
      %67 = sbr.rel (0) target = $region73
    $region72: #{decoder_block.1} parent=1 // pred_region
      _
    $region73: #{decoder_block.1} parent=1 // pred_fallthru
      _
    // Predicated region
    $region74: #{decoder_block.1} parent=1 // pred_check
      _
    $region75: #{decoder_block.1} parent=1 // pred_check_branch
      %69 = sbr.rel (0) target = $region77
    $region76: #{decoder_block.1} parent=1 // pred_region
      _
    $region77: #{decoder_block.1} parent=1 // pred_fallthru
      _
    // Predicated region
    $region78: #{decoder_block.1} parent=1 // pred_check
      _
    $region79: #{decoder_block.1} parent=1 // pred_check_branch
      %71 = sbr.rel (0) target = $region81
    $region80: #{decoder_block.1} parent=1 // pred_region
      _
    $region81: #{decoder_block.1} parent=1 // pred_fallthru
      _
    // Predicated region
    $region82: #{decoder_block.1} parent=1 // pred_check
      _
    $region83: #{decoder_block.1} parent=1 // pred_check_branch
      %73 = sbr.rel (0) target = $region85
    $region84: #{decoder_block.1} parent=1 // pred_region
      _
    $region85: #{decoder_block.1} parent=1 // pred_fallthru
      _
    // Predicated region
    $region86: #{decoder_block.1} parent=1 // pred_check
      _
    $region87: #{decoder_block.1} parent=1 // pred_check_branch
      %75 = sbr.rel (0) target = $region89
    $region88: #{decoder_block.1} parent=1 // pred_region
      _
    $region89: #{decoder_block.1} parent=1 // pred_fallthru
      _
    // Predicated region
    $region90: #{decoder_block.1} parent=1 // pred_check
      _
    $region91: #{decoder_block.1} parent=1 // pred_check_branch
      %77 = sbr.rel (0) target = $region93
    $region92: #{decoder_block.1} parent=1 // pred_region
      _
    $region93: #{decoder_block.1} parent=1 // pred_fallthru
      _
    // Predicated region
    $region94: #{decoder_block.1} parent=1 // pred_check
      _
    $region95: #{decoder_block.1} parent=1 // pred_check_branch
      %79 = sbr.rel (0) target = $region97
    $region96: #{decoder_block.1} parent=1 // pred_region
      _
    $region97: #{decoder_block.1} parent=1 // pred_fallthru
      _
    // Predicated region
    $region98: #{decoder_block.1} parent=1 // pred_check
      _
    $region99: #{decoder_block.1} parent=1 // pred_check_branch
      %81 = sbr.rel (0) target = $region101
    $region100: #{decoder_block.1} parent=1 // pred_region
      _
    $region101: #{decoder_block.1} parent=1 // pred_fallthru
      _
    // Predicated region
    $region102: #{decoder_block.1} parent=1 // pred_check
      _
    $region103: #{decoder_block.1} parent=1 // pred_check_branch
      %83 = sbr.rel (0) target = $region105
    $region104: #{decoder_block.1} parent=1 // pred_region
      _
    $region105: #{decoder_block.1} parent=1 // pred_fallthru
      _
    %v85 = vld [vmem:[%s1] sm:$0xff]
    %v86 = vld [vmem:[%s1 + $0x8] sm:$0xff]
    %v87 = vpack.c.bf16 %v86, %v85
    %v88 = vld [vmem:[%s16] sm:$0xf]
    %v89 = vld [vmem:[%s16 + $0x4] sm:$0xf]
    %v90 = vld [vmem:[%s16 + $0x8] sm:$0xf]
    %v91 = vld [vmem:[%s16 + $0xc] sm:$0xf]
    %v92 = vld [vmem:[%s17] sm:$0x1]
    %v94 = vlaneseq
    %v95 = vshrl.u32 %v94, 7
    %v96 = vsub.s32 0, %v95
    %v97 = vrot.slane %v92, %v96
    %v103 = vunpack.c.l.b16 %v88
    %v104 = vunpack.c.l.b16 %v89
    %v105 = vunpack.c.l.b16 %v90
    %v106 = vunpack.c.l.b16 %v91
    %v107 = vpack.c.b16 %v104, %v103
    %v108 = vpack.c.b16 %v106, %v105
    %vm111 = vcmask 261120
    %v113 = vsel %vm111, %v87, 0
    %115 = vmatprep.subr.bf16.mxu0 0
    %116 = vmatpush1.bf16.msra.mxu0 %v107
    %117 = vmatprep.subr.bf16.mxu0 0
    %118 = vmatpush1.bf16.msra.mxu0 %v108
    %119 = vmatprep.subr.bf16.mxu0 0
    %120 = vmatpush1.bf16.msra.mxu0 0
    %121 = vmatprep.subr.bf16.mxu0 0
    %122 = vmatpush1.bf16.msra.mxu0 0
    %123 = vmatprep.subr.bf16.mxu0 0
    %124 = vmatpush1.bf16.msra.mxu0 0
    %125 = vmatprep.subr.bf16.mxu0 0
    %126 = vmatpush1.bf16.msra.mxu0 0
    %127 = vmatprep.subr.bf16.mxu0 0
    %128 = vmatpush1.bf16.msra.mxu0 0
    %129 = vmatprep.subr.bf16.mxu0 0
    %130 = vmatpush1.bf16.msra.mxu0 0
    %131 = vmatprep.subr.bf16.mxu0 0
    %132 = vmatpush1.bf16.msra.mxu0 0
    %133 = vmatprep.subr.bf16.mxu0 0
    %134 = vmatpush1.bf16.msra.mxu0 0
    %135 = vmatprep.subr.bf16.mxu0 0
    %136 = vmatpush1.bf16.msra.mxu0 0
    %137 = vmatprep.subr.bf16.mxu0 0
    %138 = vmatpush1.bf16.msra.mxu0 0
    %139 = vmatprep.subr.bf16.mxu0 0
    %140 = vmatpush1.bf16.msra.mxu0 0
    %141 = vmatprep.subr.bf16.mxu0 0
    %142 = vmatpush1.bf16.msra.mxu0 0
    %143 = vmatprep.subr.bf16.mxu0 0
    %144 = vmatpush1.bf16.msra.mxu0 0
    %145 = vmatprep.subr.bf16.mxu0 0
    %146 = vmatpush1.bf16.msra.mxu0 0
    %147 = vmatprep.mubr.bf16.mxu0 0
    %148 = vmatmul.mubr.bf16.gmra.mrb[0].mxu0 %v113
    %v149 = vpop.f32.mrb[0].mxu0
    %v150 = vadd.f32 %v97, %v149
    %v151 = vpop.f32.mrb[0].mxu0
    %v152 = vpop.f32.mrb[0].mxu0
    %v153 = vadd.f32 %v97, %v152
    %v154 = vpop.f32.mrb[0].mxu0
    %155 = vdwg.mxu0
    %158 = vrot.lane.b32.xlu0 %v150, 120
    %v159 = vpop.permute.xlu0 %158
    %160 = vrot.lane.b32.xlu0 %v153, 120
    %v161 = vpop.permute.xlu0 %160
    %164 = vrot.lane.b32.xlu0 %v150, 112
    %v165 = vpop.permute.xlu0 %164
    %166 = vrot.lane.b32.xlu0 %v153, 112
    %v167 = vpop.permute.xlu0 %166
    %170 = vrot.lane.b32.xlu0 %v150, 104
    %v171 = vpop.permute.xlu0 %170
    %172 = vrot.lane.b32.xlu0 %v153, 104
    %v173 = vpop.permute.xlu0 %172
    %v176 = vld [vmem:[%s0] sm:$0xff]
    %v177 = vld [vmem:[%s0 + $0x8] sm:$0xff]
    %v178 = vsel %vm111, %v176, 0.0
    %179 = vadd.xlane.f32.xlu0 %v178
    %v180 = vpop.xlane.xlu0 %179
    %v181 = vsel %vm111, %v177, 0.0
    %182 = vadd.xlane.f32.xlu0 %v181
    %v183 = vpop.xlane.xlu0 %182
    %v184 = vrcp.pop 32.0
    %v185 = vmul.f32 %v180, %v184
    %v186 = vmul.f32 %v183, %v184
    %v187 = vsub.f32 %v176, %v185
    %v188 = vsub.f32 %v177, %v186
    %v189 = vmul.f32 %v187, %v187
    %v190 = vmul.f32 %v188, %v188
    %v191 = vsel %vm111, %v189, 0.0
    %192 = vadd.xlane.f32.xlu0 %v191
    %v193 = vpop.xlane.xlu0 %192
    %v194 = vsel %vm111, %v190, 0.0
    %195 = vadd.xlane.f32.xlu0 %v194
    %v196 = vpop.xlane.xlu0 %195
    %v197 = vrcp.pop 31.0
    %v198 = vmul.f32 %v193, %v197
    %v199 = vmul.f32 %v196, %v197
    %v200 = vld [vmem:[%s4] sm:$0x1]
    %v202 = vlaneseq
    %v203 = vshrl.u32 %v202, 7
    %v204 = vsub.s32 0, %v203
    %v205 = vrot.slane %v200, %v204
    %v207 = vmul.f32 %v205, %v187
    %v208 = vmul.f32 %v205, %v188
    %v209 = vrsqrt.pop %v198
    %v210 = vmul.f32 %v198, %v209
    %vm211 = vcmp.eq.f32.partialorder %v198, inf
    %v212 = vsel %vm211, %v198, %v210
    %vm213 = vcmp.eq.f32.partialorder %v198, 0.0
    %v214 = vand.u32 %v198, 2147483648
    %v215 = vsel %vm213, %v214, %v212
    %v216 = vrsqrt.pop %v199
    %v217 = vmul.f32 %v199, %v216
    %vm218 = vcmp.eq.f32.partialorder %v199, inf
    %v219 = vsel %vm218, %v199, %v217
    %vm220 = vcmp.eq.f32.partialorder %v199, 0.0
    %v221 = vand.u32 %v199, 2147483648
    %v222 = vsel %vm220, %v221, %v219
    %v223 = vadd.f32 %v215, 1e-07
    %v224 = vadd.f32 %v222, 1e-07
    %v225 = vrcp.pop %v223
    %v226 = vmul.f32 %v207, %v225
    %v227 = vrcp.pop %v224
    %v228 = vmul.f32 %v208, %v227
    %v229 = vld [vmem:[%s5] sm:$0x1]
    %v231 = vlaneseq
    %v232 = vshrl.u32 %v231, 7
    %v233 = vsub.s32 0, %v232
    %v234 = vrot.slane %v229, %v233
    %v236 = vadd.f32 %v226, %v234
    %v237 = vadd.f32 %v228, %v234
    %v238 = vpack.c.bf16 %v237, %v236
    %v239 = vld [vmem:[%s10] sm:$0xf]
    %v240 = vld [vmem:[%s10 + $0x4] sm:$0xf]
    %v241 = vld [vmem:[%s10 + $0x8] sm:$0xf]
    %v242 = vld [vmem:[%s10 + $0xc] sm:$0xf]
    %v243 = vld [vmem:[%s11] sm:$0x1]
    %v245 = vlaneseq
    %v246 = vshrl.u32 %v245, 7
    %v247 = vsub.s32 0, %v246
    %v248 = vrot.slane %v243, %v247
    %v254 = vunpack.c.l.b16 %v239
    %v255 = vunpack.c.l.b16 %v240
    %v256 = vunpack.c.l.b16 %v241
    %v257 = vunpack.c.l.b16 %v242
    %v258 = vpack.c.b16 %v255, %v254
    %v259 = vpack.c.b16 %v257, %v256
    %v263 = vsel %vm111, %v238, 0
    %265 = vmatprep.subr.bf16.mxu0 0
    %266 = vmatpush1.bf16.msra.mxu0 %v258
    %267 = vmatprep.subr.bf16.mxu0 0
    %268 = vmatpush1.bf16.msra.mxu0 %v259
    %269 = vmatprep.subr.bf16.mxu0 0
    %270 = vmatpush1.bf16.msra.mxu0 0
    %271 = vmatprep.subr.bf16.mxu0 0
    %272 = vmatpush1.bf16.msra.mxu0 0
    %273 = vmatprep.subr.bf16.mxu0 0
    %274 = vmatpush1.bf16.msra.mxu0 0
    %275 = vmatprep.subr.bf16.mxu0 0
    %276 = vmatpush1.bf16.msra.mxu0 0
    %277 = vmatprep.subr.bf16.mxu0 0
    %278 = vmatpush1.bf16.msra.mxu0 0
    %279 = vmatprep.subr.bf16.mxu0 0
    %280 = vmatpush1.bf16.msra.mxu0 0
    %281 = vmatprep.subr.bf16.mxu0 0
    %282 = vmatpush1.bf16.msra.mxu0 0
    %283 = vmatprep.subr.bf16.mxu0 0
    %284 = vmatpush1.bf16.msra.mxu0 0
    %285 = vmatprep.subr.bf16.mxu0 0
    %286 = vmatpush1.bf16.msra.mxu0 0
    %287 = vmatprep.subr.bf16.mxu0 0
    %288 = vmatpush1.bf16.msra.mxu0 0
    %289 = vmatprep.subr.bf16.mxu0 0
    %290 = vmatpush1.bf16.msra.mxu0 0
    %291 = vmatprep.subr.bf16.mxu0 0
    %292 = vmatpush1.bf16.msra.mxu0 0
    %293 = vmatprep.subr.bf16.mxu0 0
    %294 = vmatpush1.bf16.msra.mxu0 0
    %295 = vmatprep.subr.bf16.mxu0 0
    %296 = vmatpush1.bf16.msra.mxu0 0
    %297 = vmatprep.mubr.bf16.mxu0 0
    %298 = vmatmul.mubr.bf16.gmra.mrb[0].mxu0 %v263
    %v299 = vpop.f32.mrb[0].mxu0
    %v300 = vadd.f32 %v248, %v299
    %v301 = vpop.f32.mrb[0].mxu0
    %v302 = vpop.f32.mrb[0].mxu0
    %v303 = vadd.f32 %v248, %v302
    %v304 = vpop.f32.mrb[0].mxu0
    %305 = vdwg.mxu0
    %308 = vrot.lane.b32.xlu0 %v300, 120
    %v309 = vpop.permute.xlu0 %308
    %310 = vrot.lane.b32.xlu0 %v303, 120
    %v311 = vpop.permute.xlu0 %310
    %314 = vrot.lane.b32.xlu0 %v300, 112
    %v315 = vpop.permute.xlu0 %314
    %316 = vrot.lane.b32.xlu0 %v303, 112
    %v317 = vpop.permute.xlu0 %316
    %320 = vrot.lane.b32.xlu0 %v300, 104
    %v321 = vpop.permute.xlu0 %320
    %322 = vrot.lane.b32.xlu0 %v303, 104
    %v323 = vpop.permute.xlu0 %322
    %v326 = vpack.c.bf16 %v303, %v300
    %v327 = vpack.c.bf16 %v311, %v309
    %v328 = vpack.c.bf16 %v317, %v315
    %v329 = vpack.c.bf16 %v323, %v321
    %v330 = vld [vmem:[%s2] sm:$0xff]
    %v331 = vld [vmem:[%s2 + $0x8] sm:$0xff]
    %v332 = vld [vmem:[%s2 + $0x10] sm:$0xff]
    %v333 = vld [vmem:[%s2 + $0x18] sm:$0xff]
    %v334 = vld [vmem:[%s2 + $0x20] sm:$0xff]
    %v335 = vld [vmem:[%s2 + $0x28] sm:$0xff]
    %v336 = vld [vmem:[%s2 + $0x30] sm:$0xff]
    %v337 = vld [vmem:[%s2 + $0x38] sm:$0xff]
    %342 = vrot.lane.b32.xlu0 %v326, 96
    %v343 = vpop.permute.xlu0 %342
    %344 = vrot.lane.b32.xlu0 %v327, 96
    %v345 = vpop.permute.xlu0 %344
    %346 = vrot.lane.b32.xlu0 %v328, 96
    %v347 = vpop.permute.xlu0 %346
    %348 = vrot.lane.b32.xlu0 %v329, 96
    %v349 = vpop.permute.xlu0 %348
    %vm350 = vcmask 64512
    %v352 = vsel %vm350, %v326, 0
    %v355 = vsel %vm350, %v327, 0
    %v358 = vsel %vm350, %v328, 0
    %v361 = vsel %vm350, %v329, 0
    %v364 = vsel %vm350, %v343, 0
    %v367 = vsel %vm350, %v345, 0
    %v370 = vsel %vm350, %v347, 0
    %v373 = vsel %vm350, %v349, 0
    %375 = vmatprep.subr.bf16.mxu0 0
    %376 = vmatpush1.bf16.xpose.msra.mxu0 %v364
    %377 = vmatprep.subr.bf16.mxu0 0
    %378 = vmatpush1.bf16.xpose.msra.mxu0 %v367
    %379 = vmatprep.subr.bf16.mxu0 0
    %380 = vmatpush1.bf16.xpose.msra.mxu0 %v370
    %381 = vmatprep.subr.bf16.mxu0 0
    %382 = vmatpush1.bf16.xpose.msra.mxu0 %v373
    %383 = vmatprep.subr.bf16.mxu0 0
    %384 = vmatpush1.bf16.xpose.msra.mxu0 0
    %385 = vmatprep.subr.bf16.mxu0 0
    %386 = vmatpush1.bf16.xpose.msra.mxu0 0
    %387 = vmatprep.subr.bf16.mxu0 0
    %388 = vmatpush1.bf16.xpose.msra.mxu0 0
    %389 = vmatprep.subr.bf16.mxu0 0
    %390 = vmatpush1.bf16.xpose.msra.mxu0 0
    %391 = vmatprep.subr.bf16.mxu0 0
    %392 = vmatpush1.bf16.xpose.msra.mxu0 0
    %393 = vmatprep.subr.bf16.mxu0 0
    %394 = vmatpush1.bf16.xpose.msra.mxu0 0
    %395 = vmatprep.subr.bf16.mxu0 0
    %396 = vmatpush1.bf16.xpose.msra.mxu0 0
    %397 = vmatprep.subr.bf16.mxu0 0
    %398 = vmatpush1.bf16.xpose.msra.mxu0 0
    %399 = vmatprep.subr.bf16.mxu0 0
    %400 = vmatpush1.bf16.xpose.msra.mxu0 0
    %401 = vmatprep.subr.bf16.mxu0 0
    %402 = vmatpush1.bf16.xpose.msra.mxu0 0
    %403 = vmatprep.subr.bf16.mxu0 0
    %404 = vmatpush1.bf16.xpose.msra.mxu0 0
    %405 = vmatprep.subr.bf16.mxu0 0
    %406 = vmatpush1.bf16.xpose.msra.mxu0 0
    %407 = vmatprep.mubr.bf16.mxu0 0
    %408 = vmatmul.mubr.bf16.gmra.mrb[0].mxu0 %v352
    %v409 = vpop.f32.mrb[0].mxu0
    %v410 = vadd.f32 %v330, %v409
    %v411 = vpop.f32.mrb[0].mxu0
    %v412 = vpop.f32.mrb[0].mxu0
    %v413 = vadd.f32 %v331, %v412
    %v414 = vpop.f32.mrb[0].mxu0
    %415 = vmatprep.mubr.bf16.mxu0 0
    %416 = vmatmul.mubr.bf16.gmra.mrb[0].mxu0 %v355
    %v417 = vpop.f32.mrb[0].mxu0
    %v418 = vadd.f32 %v332, %v417
    %v419 = vpop.f32.mrb[0].mxu0
    %v420 = vpop.f32.mrb[0].mxu0
    %v421 = vadd.f32 %v333, %v420
    %v422 = vpop.f32.mrb[0].mxu0
    %423 = vmatprep.mubr.bf16.mxu0 0
    %424 = vmatmul.mubr.bf16.gmra.mrb[0].mxu0 %v358
    %v425 = vpop.f32.mrb[0].mxu0
    %v426 = vadd.f32 %v334, %v425
    %v427 = vpop.f32.mrb[0].mxu0
    %v428 = vpop.f32.mrb[0].mxu0
    %v429 = vadd.f32 %v335, %v428
    %v430 = vpop.f32.mrb[0].mxu0
    %431 = vmatprep.mubr.bf16.mxu0 0
    %432 = vmatmul.mubr.bf16.gmra.mrb[0].mxu0 %v361
    %v433 = vpop.f32.mrb[0].mxu0
    %v434 = vadd.f32 %v336, %v433
    %v435 = vpop.f32.mrb[0].mxu0
    %v436 = vpop.f32.mrb[0].mxu0
    %v437 = vadd.f32 %v337, %v436
    %v438 = vpop.f32.mrb[0].mxu0
    %439 = vdwg.mxu0
    %vm440 = vcmask 523264
    %v441 = vsel %vm440, %v410, -inf
    %442 = vmax.xlane.f32.xlu0 %v441
    %v443 = vpop.xlane.xlu0 %442
    %v444 = vsel %vm440, %v413, -inf
    %445 = vmax.xlane.f32.xlu0 %v444
    %v446 = vpop.xlane.xlu0 %445
    %v447 = vsel %vm440, %v418, -inf
    %448 = vmax.xlane.f32.xlu0 %v447
    %v449 = vpop.xlane.xlu0 %448
    %v450 = vsel %vm440, %v421, -inf
    %451 = vmax.xlane.f32.xlu0 %v450
    %v452 = vpop.xlane.xlu0 %451
    %v453 = vsel %vm440, %v426, -inf
    %454 = vmax.xlane.f32.xlu0 %v453
    %v455 = vpop.xlane.xlu0 %454
    %v456 = vsel %vm440, %v429, -inf
    %457 = vmax.xlane.f32.xlu0 %v456
    %v458 = vpop.xlane.xlu0 %457
    %v459 = vsel %vm440, %v434, -inf
    %460 = vmax.xlane.f32.xlu0 %v459
    %v461 = vpop.xlane.xlu0 %460
    %v462 = vsel %vm440, %v437, -inf
    %463 = vmax.xlane.f32.xlu0 %v462
    %v464 = vpop.xlane.xlu0 %463
    %v465 = vsub.f32 %v410, %v443
    %v466 = vsub.f32 %v413, %v446
    %v467 = vsub.f32 %v418, %v449
    %v468 = vsub.f32 %v421, %v452
    %v469 = vsub.f32 %v426, %v455
    %v470 = vsub.f32 %v429, %v458
    %v471 = vsub.f32 %v434, %v461
    %v472 = vsub.f32 %v437, %v464
    %v473 = vmul.f32 %v465, 1.442695
    %v474 = vpow.pop %v473
    %v475 = vmul.f32 %v466, 1.442695
    %v476 = vpow.pop %v475
    %v477 = vmul.f32 %v467, 1.442695
    %v478 = vpow.pop %v477
    %v479 = vmul.f32 %v468, 1.442695
    %v480 = vpow.pop %v479
    %v481 = vmul.f32 %v469, 1.442695
    %v482 = vpow.pop %v481
    %v483 = vmul.f32 %v470, 1.442695
    %v484 = vpow.pop %v483
    %v485 = vmul.f32 %v471, 1.442695
    %v486 = vpow.pop %v485
    %v487 = vmul.f32 %v472, 1.442695
    %v488 = vpow.pop %v487
    %v489 = vsel %vm440, %v474, 0.0
    %490 = vadd.xlane.f32.xlu0 %v489
    %v491 = vpop.xlane.xlu0 %490
    %v492 = vsel %vm440, %v476, 0.0
    %493 = vadd.xlane.f32.xlu0 %v492
    %v494 = vpop.xlane.xlu0 %493
    %v495 = vsel %vm440, %v478, 0.0
    %496 = vadd.xlane.f32.xlu0 %v495
    %v497 = vpop.xlane.xlu0 %496
    %v498 = vsel %vm440, %v480, 0.0
    %499 = vadd.xlane.f32.xlu0 %v498
    %v500 = vpop.xlane.xlu0 %499
    %v501 = vsel %vm440, %v482, 0.0
    %502 = vadd.xlane.f32.xlu0 %v501
    %v503 = vpop.xlane.xlu0 %502
    %v504 = vsel %vm440, %v484, 0.0
    %505 = vadd.xlane.f32.xlu0 %v504
    %v506 = vpop.xlane.xlu0 %505
    %v507 = vsel %vm440, %v486, 0.0
    %508 = vadd.xlane.f32.xlu0 %v507
    %v509 = vpop.xlane.xlu0 %508
    %v510 = vsel %vm440, %v488, 0.0
    %511 = vadd.xlane.f32.xlu0 %v510
    %v512 = vpop.xlane.xlu0 %511
    %v513 = vrcp.pop %v491
    %v514 = vrcp.pop %v494
    %v515 = vrcp.pop %v497
    %v516 = vrcp.pop %v500
    %v517 = vrcp.pop %v503
    %v518 = vrcp.pop %v506
    %v519 = vrcp.pop %v509
    %v520 = vrcp.pop %v512
    %v521 = vmul.f32 %v474, %v513
    %v522 = vmul.f32 %v476, %v514
    %v523 = vmul.f32 %v478, %v515
    %v524 = vmul.f32 %v480, %v516
    %v525 = vmul.f32 %v482, %v517
    %v526 = vmul.f32 %v484, %v518
    %v527 = vmul.f32 %v486, %v519
    %v528 = vmul.f32 %v488, %v520
    %v529 = vpack.c.bf16 %v522, %v521
    %v530 = vpack.c.bf16 %v524, %v523
    %v531 = vpack.c.bf16 %v526, %v525
    %v532 = vpack.c.bf16 %v528, %v527
    %533 = vrot.lane.b32.xlu0 %v326, 64
    %v534 = vpop.permute.xlu0 %533
    %535 = vrot.lane.b32.xlu0 %v327, 64
    %v536 = vpop.permute.xlu0 %535
    %537 = vrot.lane.b32.xlu0 %v328, 64
    %v538 = vpop.permute.xlu0 %537
    %539 = vrot.lane.b32.xlu0 %v329, 64
    %v540 = vpop.permute.xlu0 %539
    %v546 = vsel %vm440, %v529, 0
    %v549 = vsel %vm440, %v530, 0
    %v552 = vsel %vm440, %v531, 0
    %v555 = vsel %vm440, %v532, 0
    %557 = vmatprep.subr.bf16.mxu0 0
    %558 = vmatpush1.bf16.msra.mxu0 %v534
    %559 = vmatprep.subr.bf16.mxu0 0
    %560 = vmatpush1.bf16.msra.mxu0 %v536
    %561 = vmatprep.subr.bf16.mxu0 0
    %562 = vmatpush1.bf16.msra.mxu0 %v538
    %563 = vmatprep.subr.bf16.mxu0 0
    %564 = vmatpush1.bf16.msra.mxu0 %v540
    %565 = vmatprep.subr.bf16.mxu0 0
    %566 = vmatpush1.bf16.msra.mxu0 0
    %567 = vmatprep.subr.bf16.mxu0 0
    %568 = vmatpush1.bf16.msra.mxu0 0
    %569 = vmatprep.subr.bf16.mxu0 0
    %570 = vmatpush1.bf16.msra.mxu0 0
    %571 = vmatprep.subr.bf16.mxu0 0
    %572 = vmatpush1.bf16.msra.mxu0 0
    %573 = vmatprep.subr.bf16.mxu0 0
    %574 = vmatpush1.bf16.msra.mxu0 0
    %575 = vmatprep.subr.bf16.mxu0 0
    %576 = vmatpush1.bf16.msra.mxu0 0
    %577 = vmatprep.subr.bf16.mxu0 0
    %578 = vmatpush1.bf16.msra.mxu0 0
    %579 = vmatprep.subr.bf16.mxu0 0
    %580 = vmatpush1.bf16.msra.mxu0 0
    %581 = vmatprep.subr.bf16.mxu0 0
    %582 = vmatpush1.bf16.msra.mxu0 0
    %583 = vmatprep.subr.bf16.mxu0 0
    %584 = vmatpush1.bf16.msra.mxu0 0
    %585 = vmatprep.subr.bf16.mxu0 0
    %586 = vmatpush1.bf16.msra.mxu0 0
    %587 = vmatprep.subr.bf16.mxu0 0
    %588 = vmatpush1.bf16.msra.mxu0 0
    %589 = vmatprep.mubr.bf16.mxu0 0
    %590 = vmatmul.mubr.bf16.gmra.mrb[0].mxu0 %v546
    %v591 = vpop.f32.mrb[0].mxu0
    %v592 = vadd.f32 0.0, %v591
    %v593 = vpop.f32.mrb[0].mxu0
    %v594 = vpop.f32.mrb[0].mxu0
    %v595 = vadd.f32 0.0, %v594
    %v596 = vpop.f32.mrb[0].mxu0
    %597 = vmatprep.mubr.bf16.mxu0 0
    %598 = vmatmul.mubr.bf16.gmra.mrb[0].mxu0 %v549
    %v599 = vpop.f32.mrb[0].mxu0
    %v600 = vadd.f32 0.0, %v599
    %v601 = vpop.f32.mrb[0].mxu0
    %v602 = vpop.f32.mrb[0].mxu0
    %v603 = vadd.f32 0.0, %v602
    %v604 = vpop.f32.mrb[0].mxu0
    %605 = vmatprep.mubr.bf16.mxu0 0
    %606 = vmatmul.mubr.bf16.gmra.mrb[0].mxu0 %v552
    %v607 = vpop.f32.mrb[0].mxu0
    %v608 = vadd.f32 0.0, %v607
    %v609 = vpop.f32.mrb[0].mxu0
    %v610 = vpop.f32.mrb[0].mxu0
    %v611 = vadd.f32 0.0, %v610
    %v612 = vpop.f32.mrb[0].mxu0
    %613 = vmatprep.mubr.bf16.mxu0 0
    %614 = vmatmul.mubr.bf16.gmra.mrb[0].mxu0 %v555
    %v615 = vpop.f32.mrb[0].mxu0
    %v616 = vadd.f32 0.0, %v615
    %v617 = vpop.f32.mrb[0].mxu0
    %v618 = vpop.f32.mrb[0].mxu0
    %v619 = vadd.f32 0.0, %v618
    %v620 = vpop.f32.mrb[0].mxu0
    %621 = vdwg.mxu0
    %624 = vrot.lane.b32.xlu0 %v600, 8
    %v625 = vpop.permute.xlu0 %624
    %626 = vrot.lane.b32.xlu0 %v603, 8
    %v627 = vpop.permute.xlu0 %626
    %632 = vrot.lane.b32.xlu0 %v608, 16
    %v633 = vpop.permute.xlu0 %632
    %634 = vrot.lane.b32.xlu0 %v611, 16
    %v635 = vpop.permute.xlu0 %634
    %640 = vrot.lane.b32.xlu0 %v616, 24
    %v641 = vpop.permute.xlu0 %640
    %642 = vrot.lane.b32.xlu0 %v619, 24
    %v643 = vpop.permute.xlu0 %642
    %v646 = vsel %vm350, %v592, %v625
    %v647 = vsel %vm350, %v595, %v627
    %vm648 = vcmask 130048
    %v649 = vsel %vm648, %v646, %v633
    %v650 = vsel %vm648, %v647, %v635
    %vm651 = vcmask 195584
    %v652 = vsel %vm651, %v649, %v641
    %v653 = vsel %vm651, %v650, %v643
    %v654 = vpack.c.bf16 %v653, %v652
    %v655 = vld [vmem:[%s12] sm:$0xf]
    %v656 = vld [vmem:[%s12 + $0x4] sm:$0xf]
    %v657 = vld [vmem:[%s12 + $0x8] sm:$0xf]
    %v658 = vld [vmem:[%s12 + $0xc] sm:$0xf]
    %v659 = vld [vmem:[%s13] sm:$0x1]
    %v661 = vlaneseq
    %v662 = vshrl.u32 %v661, 7
    %v663 = vsub.s32 0, %v662
    %v664 = vrot.slane %v659, %v663
    %v670 = vunpack.c.l.b16 %v655
    %v671 = vunpack.c.l.b16 %v656
    %v672 = vunpack.c.l.b16 %v657
    %v673 = vunpack.c.l.b16 %v658
    %v674 = vpack.c.b16 %v671, %v670
    %v675 = vpack.c.b16 %v673, %v672
    %v679 = vsel %vm111, %v654, 0
    %681 = vmatprep.subr.bf16.mxu0 0
    %682 = vmatpush1.bf16.msra.mxu0 %v674
    %683 = vmatprep.subr.bf16.mxu0 0
    %684 = vmatpush1.bf16.msra.mxu0 %v675
    %685 = vmatprep.subr.bf16.mxu0 0
    %686 = vmatpush1.bf16.msra.mxu0 0
    %687 = vmatprep.subr.bf16.mxu0 0
    %688 = vmatpush1.bf16.msra.mxu0 0
    %689 = vmatprep.subr.bf16.mxu0 0
    %690 = vmatpush1.bf16.msra.mxu0 0
    %691 = vmatprep.subr.bf16.mxu0 0
    %692 = vmatpush1.bf16.msra.mxu0 0
    %693 = vmatprep.subr.bf16.mxu0 0
    %694 = vmatpush1.bf16.msra.mxu0 0
    %695 = vmatprep.subr.bf16.mxu0 0
    %696 = vmatpush1.bf16.msra.mxu0 0
    %697 = vmatprep.subr.bf16.mxu0 0
    %698 = vmatpush1.bf16.msra.mxu0 0
    %699 = vmatprep.subr.bf16.mxu0 0
    %700 = vmatpush1.bf16.msra.mxu0 0
    %701 = vmatprep.subr.bf16.mxu0 0
    %702 = vmatpush1.bf16.msra.mxu0 0
    %703 = vmatprep.subr.bf16.mxu0 0
    %704 = vmatpush1.bf16.msra.mxu0 0
    %705 = vmatprep.subr.bf16.mxu0 0
    %706 = vmatpush1.bf16.msra.mxu0 0
    %707 = vmatprep.subr.bf16.mxu0 0
    %708 = vmatpush1.bf16.msra.mxu0 0
    %709 = vmatprep.subr.bf16.mxu0 0
    %710 = vmatpush1.bf16.msra.mxu0 0
    %711 = vmatprep.subr.bf16.mxu0 0
    %712 = vmatpush1.bf16.msra.mxu0 0
    %713 = vmatprep.mubr.bf16.mxu0 0
    %714 = vmatmul.mubr.bf16.gmra.mrb[0].mxu0 %v679
    %v715 = vpop.f32.mrb[0].mxu0
    %v716 = vadd.f32 %v664, %v715
    %v717 = vpop.f32.mrb[0].mxu0
    %v718 = vpop.f32.mrb[0].mxu0
    %v719 = vadd.f32 %v664, %v718
    %v720 = vpop.f32.mrb[0].mxu0
    %721 = vdwg.mxu0
    %v722 = vadd.f32 %v176, %v716
    %v723 = vadd.f32 %v177, %v719
    %v724 = vsel %vm111, %v722, 0.0
    %725 = vadd.xlane.f32.xlu0 %v724
    %v726 = vpop.xlane.xlu0 %725
    %v727 = vsel %vm111, %v723, 0.0
    %728 = vadd.xlane.f32.xlu0 %v727
    %v729 = vpop.xlane.xlu0 %728
    %v730 = vmul.f32 %v726, %v184
    %v731 = vmul.f32 %v729, %v184
    %v732 = vsub.f32 %v722, %v730
    %v733 = vsub.f32 %v723, %v731
    %v734 = vmul.f32 %v732, %v732
    %v735 = vmul.f32 %v733, %v733
    %v736 = vsel %vm111, %v734, 0.0
    %737 = vadd.xlane.f32.xlu0 %v736
    %v738 = vpop.xlane.xlu0 %737
    %v739 = vsel %vm111, %v735, 0.0
    %740 = vadd.xlane.f32.xlu0 %v739
    %v741 = vpop.xlane.xlu0 %740
    %v742 = vmul.f32 %v738, %v197
    %v743 = vmul.f32 %v741, %v197
    %v744 = vld [vmem:[%s6] sm:$0x1]
    %v746 = vlaneseq
    %v747 = vshrl.u32 %v746, 7
    %v748 = vsub.s32 0, %v747
    %v749 = vrot.slane %v744, %v748
    %v751 = vmul.f32 %v749, %v732
    %v752 = vmul.f32 %v749, %v733
    %v753 = vrsqrt.pop %v742
    %v754 = vmul.f32 %v742, %v753
    %vm755 = vcmp.eq.f32.partialorder %v742, inf
    %v756 = vsel %vm755, %v742, %v754
    %vm757 = vcmp.eq.f32.partialorder %v742, 0.0
    %v758 = vand.u32 %v742, 2147483648
    %v759 = vsel %vm757, %v758, %v756
    %v760 = vrsqrt.pop %v743
    %v761 = vmul.f32 %v743, %v760
    %vm762 = vcmp.eq.f32.partialorder %v743, inf
    %v763 = vsel %vm762, %v743, %v761
    %vm764 = vcmp.eq.f32.partialorder %v743, 0.0
    %v765 = vand.u32 %v743, 2147483648
    %v766 = vsel %vm764, %v765, %v763
    %v767 = vadd.f32 %v759, 1e-07
    %v768 = vadd.f32 %v766, 1e-07
    %v769 = vrcp.pop %v767
    %v770 = vmul.f32 %v751, %v769
    %v771 = vrcp.pop %v768
    %v772 = vmul.f32 %v752, %v771
    %v773 = vld [vmem:[%s7] sm:$0x1]
    %v775 = vlaneseq
    %v776 = vshrl.u32 %v775, 7
    %v777 = vsub.s32 0, %v776
    %v778 = vrot.slane %v773, %v777
    %v780 = vadd.f32 %v770, %v778
    %v781 = vadd.f32 %v772, %v778
    %v782 = vpack.c.bf16 %v781, %v780
    %v783 = vld [vmem:[%s14] sm:$0xf]
    %v784 = vld [vmem:[%s14 + $0x4] sm:$0xf]
    %v785 = vld [vmem:[%s14 + $0x8] sm:$0xf]
    %v786 = vld [vmem:[%s14 + $0xc] sm:$0xf]
    %v787 = vld [vmem:[%s15] sm:$0x1]
    %v789 = vlaneseq
    %v790 = vshrl.u32 %v789, 7
    %v791 = vsub.s32 0, %v790
    %v792 = vrot.slane %v787, %v791
    %v798 = vunpack.c.l.b16 %v783
    %v799 = vunpack.c.l.b16 %v784
    %v800 = vunpack.c.l.b16 %v785
    %v801 = vunpack.c.l.b16 %v786
    %v802 = vpack.c.b16 %v799, %v798
    %v803 = vpack.c.b16 %v801, %v800
    %v807 = vsel %vm111, %v782, 0
    %809 = vmatprep.subr.bf16.mxu0 0
    %810 = vmatpush1.bf16.msra.mxu0 %v802
    %811 = vmatprep.subr.bf16.mxu0 0
    %812 = vmatpush1.bf16.msra.mxu0 %v803
    %813 = vmatprep.subr.bf16.mxu0 0
    %814 = vmatpush1.bf16.msra.mxu0 0
    %815 = vmatprep.subr.bf16.mxu0 0
    %816 = vmatpush1.bf16.msra.mxu0 0
    %817 = vmatprep.subr.bf16.mxu0 0
    %818 = vmatpush1.bf16.msra.mxu0 0
    %819 = vmatprep.subr.bf16.mxu0 0
    %820 = vmatpush1.bf16.msra.mxu0 0
    %821 = vmatprep.subr.bf16.mxu0 0
    %822 = vmatpush1.bf16.msra.mxu0 0
    %823 = vmatprep.subr.bf16.mxu0 0
    %824 = vmatpush1.bf16.msra.mxu0 0
    %825 = vmatprep.subr.bf16.mxu0 0
    %826 = vmatpush1.bf16.msra.mxu0 0
    %827 = vmatprep.subr.bf16.mxu0 0
    %828 = vmatpush1.bf16.msra.mxu0 0
    %829 = vmatprep.subr.bf16.mxu0 0
    %830 = vmatpush1.bf16.msra.mxu0 0
    %831 = vmatprep.subr.bf16.mxu0 0
    %832 = vmatpush1.bf16.msra.mxu0 0
    %833 = vmatprep.subr.bf16.mxu0 0
    %834 = vmatpush1.bf16.msra.mxu0 0
    %835 = vmatprep.subr.bf16.mxu0 0
    %836 = vmatpush1.bf16.msra.mxu0 0
    %837 = vmatprep.subr.bf16.mxu0 0
    %838 = vmatpush1.bf16.msra.mxu0 0
    %839 = vmatprep.subr.bf16.mxu0 0
    %840 = vmatpush1.bf16.msra.mxu0 0
    %841 = vmatprep.mubr.bf16.mxu0 0
    %842 = vmatmul.mubr.bf16.gmra.mrb[0].mxu0 %v807
    %v843 = vpop.f32.mrb[0].mxu0
    %v844 = vadd.f32 %v792, %v843
    %v845 = vpop.f32.mrb[0].mxu0
    %v846 = vpop.f32.mrb[0].mxu0
    %v847 = vadd.f32 %v792, %v846
    %v848 = vpop.f32.mrb[0].mxu0
    %849 = vdwg.mxu0
    %852 = vrot.lane.b32.xlu0 %v844, 120
    %v853 = vpop.permute.xlu0 %852
    %854 = vrot.lane.b32.xlu0 %v847, 120
    %v855 = vpop.permute.xlu0 %854
    %858 = vrot.lane.b32.xlu0 %v844, 112
    %v859 = vpop.permute.xlu0 %858
    %860 = vrot.lane.b32.xlu0 %v847, 112
    %v861 = vpop.permute.xlu0 %860
    %864 = vrot.lane.b32.xlu0 %v844, 104
    %v865 = vpop.permute.xlu0 %864
    %866 = vrot.lane.b32.xlu0 %v847, 104
    %v867 = vpop.permute.xlu0 %866
    %v870 = vpack.c.bf16 %v847, %v844
    %v871 = vpack.c.bf16 %v855, %v853
    %v872 = vpack.c.bf16 %v861, %v859
    %v873 = vpack.c.bf16 %v867, %v865
    %v874 = vpack.c.bf16 %v153, %v150
    %v875 = vpack.c.bf16 %v161, %v159
    %v876 = vpack.c.bf16 %v167, %v165
    %v877 = vpack.c.bf16 %v173, %v171
    %v878 = vld [vmem:[%s3] sm:$0xff]
    %v879 = vld [vmem:[%s3 + $0x8] sm:$0xff]
    %v880 = vld [vmem:[%s3 + $0x10] sm:$0xff]
    %v881 = vld [vmem:[%s3 + $0x18] sm:$0xff]
    %v882 = vld [vmem:[%s3 + $0x20] sm:$0xff]
    %v883 = vld [vmem:[%s3 + $0x28] sm:$0xff]
    %v884 = vld [vmem:[%s3 + $0x30] sm:$0xff]
    %v885 = vld [vmem:[%s3 + $0x38] sm:$0xff]
    %v887 = vsel %vm350, %v870, 0
    %v890 = vsel %vm350, %v871, 0
    %v893 = vsel %vm350, %v872, 0
    %v896 = vsel %vm350, %v873, 0
    %v899 = vsel %vm350, %v874, 0
    %v902 = vsel %vm350, %v875, 0
    %v905 = vsel %vm350, %v876, 0
    %v908 = vsel %vm350, %v877, 0
    %910 = vmatprep.subr.bf16.mxu0 0
    %911 = vmatpush1.bf16.xpose.msra.mxu0 %v899
    %912 = vmatprep.subr.bf16.mxu0 0
    %913 = vmatpush1.bf16.xpose.msra.mxu0 %v902
    %914 = vmatprep.subr.bf16.mxu0 0
    %915 = vmatpush1.bf16.xpose.msra.mxu0 %v905
    %916 = vmatprep.subr.bf16.mxu0 0
    %917 = vmatpush1.bf16.xpose.msra.mxu0 %v908
    %918 = vmatprep.subr.bf16.mxu0 0
    %919 = vmatpush1.bf16.xpose.msra.mxu0 0
    %920 = vmatprep.subr.bf16.mxu0 0
    %921 = vmatpush1.bf16.xpose.msra.mxu0 0
    %922 = vmatprep.subr.bf16.mxu0 0
    %923 = vmatpush1.bf16.xpose.msra.mxu0 0
    %924 = vmatprep.subr.bf16.mxu0 0
    %925 = vmatpush1.bf16.xpose.msra.mxu0 0
    %926 = vmatprep.subr.bf16.mxu0 0
    %927 = vmatpush1.bf16.xpose.msra.mxu0 0
    %928 = vmatprep.subr.bf16.mxu0 0
    %929 = vmatpush1.bf16.xpose.msra.mxu0 0
    %930 = vmatprep.subr.bf16.mxu0 0
    %931 = vmatpush1.bf16.xpose.msra.mxu0 0
    %932 = vmatprep.subr.bf16.mxu0 0
    %933 = vmatpush1.bf16.xpose.msra.mxu0 0
    %934 = vmatprep.subr.bf16.mxu0 0
    %935 = vmatpush1.bf16.xpose.msra.mxu0 0
    %936 = vmatprep.subr.bf16.mxu0 0
    %937 = vmatpush1.bf16.xpose.msra.mxu0 0
    %938 = vmatprep.subr.bf16.mxu0 0
    %939 = vmatpush1.bf16.xpose.msra.mxu0 0
    %940 = vmatprep.subr.bf16.mxu0 0
    %941 = vmatpush1.bf16.xpose.msra.mxu0 0
    %942 = vmatprep.mubr.bf16.mxu0 0
    %943 = vmatmul.mubr.bf16.gmra.mrb[0].mxu0 %v887
    %v944 = vpop.f32.mrb[0].mxu0
    %v945 = vadd.f32 %v878, %v944
    %v946 = vpop.f32.mrb[0].mxu0
    %v947 = vpop.f32.mrb[0].mxu0
    %v948 = vadd.f32 %v879, %v947
    %v949 = vpop.f32.mrb[0].mxu0
    %950 = vmatprep.mubr.bf16.mxu0 0
    %951 = vmatmul.mubr.bf16.gmra.mrb[0].mxu0 %v890
    %v952 = vpop.f32.mrb[0].mxu0
    %v953 = vadd.f32 %v880, %v952
    %v954 = vpop.f32.mrb[0].mxu0
    %v955 = vpop.f32.mrb[0].mxu0
    %v956 = vadd.f32 %v881, %v955
    %v957 = vpop.f32.mrb[0].mxu0
    %958 = vmatprep.mubr.bf16.mxu0 0
    %959 = vmatmul.mubr.bf16.gmra.mrb[0].mxu0 %v893
    %v960 = vpop.f32.mrb[0].mxu0
    %v961 = vadd.f32 %v882, %v960
    %v962 = vpop.f32.mrb[0].mxu0
    %v963 = vpop.f32.mrb[0].mxu0
    %v964 = vadd.f32 %v883, %v963
    %v965 = vpop.f32.mrb[0].mxu0
    %966 = vmatprep.mubr.bf16.mxu0 0
    %967 = vmatmul.mubr.bf16.gmra.mrb[0].mxu0 %v896
    %v968 = vpop.f32.mrb[0].mxu0
    %v969 = vadd.f32 %v884, %v968
    %v970 = vpop.f32.mrb[0].mxu0
    %v971 = vpop.f32.mrb[0].mxu0
    %v972 = vadd.f32 %v885, %v971
    %v973 = vpop.f32.mrb[0].mxu0
    %974 = vdwg.mxu0
    %v975 = vsel %vm440, %v945, -inf
    %976 = vmax.xlane.f32.xlu0 %v975
    %v977 = vpop.xlane.xlu0 %976
    %v978 = vsel %vm440, %v948, -inf
    %979 = vmax.xlane.f32.xlu0 %v978
    %v980 = vpop.xlane.xlu0 %979
    %v981 = vsel %vm440, %v953, -inf
    %982 = vmax.xlane.f32.xlu0 %v981
    %v983 = vpop.xlane.xlu0 %982
    %v984 = vsel %vm440, %v956, -inf
    %985 = vmax.xlane.f32.xlu0 %v984
    %v986 = vpop.xlane.xlu0 %985
    %v987 = vsel %vm440, %v961, -inf
    %988 = vmax.xlane.f32.xlu0 %v987
    %v989 = vpop.xlane.xlu0 %988
    %v990 = vsel %vm440, %v964, -inf
    %991 = vmax.xlane.f32.xlu0 %v990
    %v992 = vpop.xlane.xlu0 %991
    %v993 = vsel %vm440, %v969, -inf
    %994 = vmax.xlane.f32.xlu0 %v993
    %v995 = vpop.xlane.xlu0 %994
    %v996 = vsel %vm440, %v972, -inf
    %997 = vmax.xlane.f32.xlu0 %v996
    %v998 = vpop.xlane.xlu0 %997
    %v999 = vsub.f32 %v945, %v977
    %v1000 = vsub.f32 %v948, %v980
    %v1001 = vsub.f32 %v953, %v983
    %v1002 = vsub.f32 %v956, %v986
    %v1003 = vsub.f32 %v961, %v989
    %v1004 = vsub.f32 %v964, %v992
    %v1005 = vsub.f32 %v969, %v995
    %v1006 = vsub.f32 %v972, %v998
    %v1007 = vmul.f32 %v999, 1.442695
    %v1008 = vpow.pop %v1007
    %v1009 = vmul.f32 %v1000, 1.442695
    %v1010 = vpow.pop %v1009
    %v1011 = vmul.f32 %v1001, 1.442695
    %v1012 = vpow.pop %v1011
    %v1013 = vmul.f32 %v1002, 1.442695
    %v1014 = vpow.pop %v1013
    %v1015 = vmul.f32 %v1003, 1.442695
    %v1016 = vpow.pop %v1015
    %v1017 = vmul.f32 %v1004, 1.442695
    %v1018 = vpow.pop %v1017
    %v1019 = vmul.f32 %v1005, 1.442695
    %v1020 = vpow.pop %v1019
    %v1021 = vmul.f32 %v1006, 1.442695
    %v1022 = vpow.pop %v1021
    %v1023 = vsel %vm440, %v1008, 0.0
    %1024 = vadd.xlane.f32.xlu0 %v1023
    %v1025 = vpop.xlane.xlu0 %1024
    %v1026 = vsel %vm440, %v1010, 0.0
    %1027 = vadd.xlane.f32.xlu0 %v1026
    %v1028 = vpop.xlane.xlu0 %1027
    %v1029 = vsel %vm440, %v1012, 0.0
    %1030 = vadd.xlane.f32.xlu0 %v1029
    %v1031 = vpop.xlane.xlu0 %1030
    %v1032 = vsel %vm440, %v1014, 0.0
    %1033 = vadd.xlane.f32.xlu0 %v1032
    %v1034 = vpop.xlane.xlu0 %1033
    %v1035 = vsel %vm440, %v1016, 0.0
    %1036 = vadd.xlane.f32.xlu0 %v1035
    %v1037 = vpop.xlane.xlu0 %1036
    %v1038 = vsel %vm440, %v1018, 0.0
    %1039 = vadd.xlane.f32.xlu0 %v1038
    %v1040 = vpop.xlane.xlu0 %1039
    %v1041 = vsel %vm440, %v1020, 0.0
    %1042 = vadd.xlane.f32.xlu0 %v1041
    %v1043 = vpop.xlane.xlu0 %1042
    %v1044 = vsel %vm440, %v1022, 0.0
    %1045 = vadd.xlane.f32.xlu0 %v1044
    %v1046 = vpop.xlane.xlu0 %1045
    %v1047 = vrcp.pop %v1025
    %v1048 = vrcp.pop %v1028
    %v1049 = vrcp.pop %v1031
    %v1050 = vrcp.pop %v1034
    %v1051 = vrcp.pop %v1037
    %v1052 = vrcp.pop %v1040
    %v1053 = vrcp.pop %v1043
    %v1054 = vrcp.pop %v1046
    %v1055 = vmul.f32 %v1008, %v1047
    %v1056 = vmul.f32 %v1010, %v1048
    %v1057 = vmul.f32 %v1012, %v1049
    %v1058 = vmul.f32 %v1014, %v1050
    %v1059 = vmul.f32 %v1016, %v1051
    %v1060 = vmul.f32 %v1018, %v1052
    %v1061 = vmul.f32 %v1020, %v1053
    %v1062 = vmul.f32 %v1022, %v1054
    %v1063 = vpack.c.bf16 %v1056, %v1055
    %v1064 = vpack.c.bf16 %v1058, %v1057
    %v1065 = vpack.c.bf16 %v1060, %v1059
    %v1066 = vpack.c.bf16 %v1062, %v1061
    %1071 = vrot.lane.b32.xlu0 %v874, 96
    %v1072 = vpop.permute.xlu0 %1071
    %1073 = vrot.lane.b32.xlu0 %v875, 96
    %v1074 = vpop.permute.xlu0 %1073
    %1075 = vrot.lane.b32.xlu0 %v876, 96
    %v1076 = vpop.permute.xlu0 %1075
    %1077 = vrot.lane.b32.xlu0 %v877, 96
    %v1078 = vpop.permute.xlu0 %1077
    %v1084 = vsel %vm440, %v1063, 0
    %v1087 = vsel %vm440, %v1064, 0
    %v1090 = vsel %vm440, %v1065, 0
    %v1093 = vsel %vm440, %v1066, 0
    %1095 = vmatprep.subr.bf16.mxu0 0
    %1096 = vmatpush1.bf16.msra.mxu0 %v1072
    %1097 = vmatprep.subr.bf16.mxu0 0
    %1098 = vmatpush1.bf16.msra.mxu0 %v1074
    %1099 = vmatprep.subr.bf16.mxu0 0
    %1100 = vmatpush1.bf16.msra.mxu0 %v1076
    %1101 = vmatprep.subr.bf16.mxu0 0
    %1102 = vmatpush1.bf16.msra.mxu0 %v1078
    %1103 = vmatprep.subr.bf16.mxu0 0
    %1104 = vmatpush1.bf16.msra.mxu0 0
    %1105 = vmatprep.subr.bf16.mxu0 0
    %1106 = vmatpush1.bf16.msra.mxu0 0
    %1107 = vmatprep.subr.bf16.mxu0 0
    %1108 = vmatpush1.bf16.msra.mxu0 0
    %1109 = vmatprep.subr.bf16.mxu0 0
    %1110 = vmatpush1.bf16.msra.mxu0 0
    %1111 = vmatprep.subr.bf16.mxu0 0
    %1112 = vmatpush1.bf16.msra.mxu0 0
    %1113 = vmatprep.subr.bf16.mxu0 0
    %1114 = vmatpush1.bf16.msra.mxu0 0
    %1115 = vmatprep.subr.bf16.mxu0 0
    %1116 = vmatpush1.bf16.msra.mxu0 0
    %1117 = vmatprep.subr.bf16.mxu0 0
    %1118 = vmatpush1.bf16.msra.mxu0 0
    %1119 = vmatprep.subr.bf16.mxu0 0
    %1120 = vmatpush1.bf16.msra.mxu0 0
    %1121 = vmatprep.subr.bf16.mxu0 0
    %1122 = vmatpush1.bf16.msra.mxu0 0
    %1123 = vmatprep.subr.bf16.mxu0 0
    %1124 = vmatpush1.bf16.msra.mxu0 0
    %1125 = vmatprep.subr.bf16.mxu0 0
    %1126 = vmatpush1.bf16.msra.mxu0 0
    %1127 = vmatprep.mubr.bf16.mxu0 0
    %1128 = vmatmul.mubr.bf16.gmra.mrb[0].mxu0 %v1084
    %v1129 = vpop.f32.mrb[0].mxu0
    %v1130 = vadd.f32 0.0, %v1129
    %v1131 = vpop.f32.mrb[0].mxu0
    %v1132 = vpop.f32.mrb[0].mxu0
    %v1133 = vadd.f32 0.0, %v1132
    %v1134 = vpop.f32.mrb[0].mxu0
    %1135 = vmatprep.mubr.bf16.mxu0 0
    %1136 = vmatmul.mubr.bf16.gmra.mrb[0].mxu0 %v1087
    %v1137 = vpop.f32.mrb[0].mxu0
    %v1138 = vadd.f32 0.0, %v1137
    %v1139 = vpop.f32.mrb[0].mxu0
    %v1140 = vpop.f32.mrb[0].mxu0
    %v1141 = vadd.f32 0.0, %v1140
    %v1142 = vpop.f32.mrb[0].mxu0
    %1143 = vmatprep.mubr.bf16.mxu0 0
    %1144 = vmatmul.mubr.bf16.gmra.mrb[0].mxu0 %v1090
    %v1145 = vpop.f32.mrb[0].mxu0
    %v1146 = vadd.f32 0.0, %v1145
    %v1147 = vpop.f32.mrb[0].mxu0
    %v1148 = vpop.f32.mrb[0].mxu0
    %v1149 = vadd.f32 0.0, %v1148
    %v1150 = vpop.f32.mrb[0].mxu0
    %1151 = vmatprep.mubr.bf16.mxu0 0
    %1152 = vmatmul.mubr.bf16.gmra.mrb[0].mxu0 %v1093
    %v1153 = vpop.f32.mrb[0].mxu0
    %v1154 = vadd.f32 0.0, %v1153
    %v1155 = vpop.f32.mrb[0].mxu0
    %v1156 = vpop.f32.mrb[0].mxu0
    %v1157 = vadd.f32 0.0, %v1156
    %v1158 = vpop.f32.mrb[0].mxu0
    %1159 = vdwg.mxu0
    %1162 = vrot.lane.b32.xlu0 %v1138, 8
    %v1163 = vpop.permute.xlu0 %1162
    %1164 = vrot.lane.b32.xlu0 %v1141, 8
    %v1165 = vpop.permute.xlu0 %1164
    %1170 = vrot.lane.b32.xlu0 %v1146, 16
    %v1171 = vpop.permute.xlu0 %1170
    %1172 = vrot.lane.b32.xlu0 %v1149, 16
    %v1173 = vpop.permute.xlu0 %1172
    %1178 = vrot.lane.b32.xlu0 %v1154, 24
    %v1179 = vpop.permute.xlu0 %1178
    %1180 = vrot.lane.b32.xlu0 %v1157, 24
    %v1181 = vpop.permute.xlu0 %1180
    %v1184 = vsel %vm350, %v1130, %v1163
    %v1185 = vsel %vm350, %v1133, %v1165
    %v1186 = vsel %vm648, %v1184, %v1171
    %v1187 = vsel %vm648, %v1185, %v1173
    %v1188 = vsel %vm651, %v1186, %v1179
    %v1189 = vsel %vm651, %v1187, %v1181
    %v1190 = vpack.c.bf16 %v1189, %v1188
    %v1191 = vld [vmem:[%s18] sm:$0xf]
    %v1192 = vld [vmem:[%s18 + $0x4] sm:$0xf]
    %v1193 = vld [vmem:[%s18 + $0x8] sm:$0xf]
    %v1194 = vld [vmem:[%s18 + $0xc] sm:$0xf]
    %v1195 = vld [vmem:[%s19] sm:$0x1]
    %v1197 = vlaneseq
    %v1198 = vshrl.u32 %v1197, 7
    %v1199 = vsub.s32 0, %v1198
    %v1200 = vrot.slane %v1195, %v1199
    %v1206 = vunpack.c.l.b16 %v1191
    %v1207 = vunpack.c.l.b16 %v1192
    %v1208 = vunpack.c.l.b16 %v1193
    %v1209 = vunpack.c.l.b16 %v1194
    %v1210 = vpack.c.b16 %v1207, %v1206
    %v1211 = vpack.c.b16 %v1209, %v1208
    %v1215 = vsel %vm111, %v1190, 0
    %1217 = vmatprep.subr.bf16.mxu0 0
    %1218 = vmatpush1.bf16.msra.mxu0 %v1210
    %1219 = vmatprep.subr.bf16.mxu0 0
    %1220 = vmatpush1.bf16.msra.mxu0 %v1211
    %1221 = vmatprep.subr.bf16.mxu0 0
    %1222 = vmatpush1.bf16.msra.mxu0 0
    %1223 = vmatprep.subr.bf16.mxu0 0
    %1224 = vmatpush1.bf16.msra.mxu0 0
    %1225 = vmatprep.subr.bf16.mxu0 0
    %1226 = vmatpush1.bf16.msra.mxu0 0
    %1227 = vmatprep.subr.bf16.mxu0 0
    %1228 = vmatpush1.bf16.msra.mxu0 0
    %1229 = vmatprep.subr.bf16.mxu0 0
    %1230 = vmatpush1.bf16.msra.mxu0 0
    %1231 = vmatprep.subr.bf16.mxu0 0
    %1232 = vmatpush1.bf16.msra.mxu0 0
    %1233 = vmatprep.subr.bf16.mxu0 0
    %1234 = vmatpush1.bf16.msra.mxu0 0
    %1235 = vmatprep.subr.bf16.mxu0 0
    %1236 = vmatpush1.bf16.msra.mxu0 0
    %1237 = vmatprep.subr.bf16.mxu0 0
    %1238 = vmatpush1.bf16.msra.mxu0 0
    %1239 = vmatprep.subr.bf16.mxu0 0
    %1240 = vmatpush1.bf16.msra.mxu0 0
    %1241 = vmatprep.subr.bf16.mxu0 0
    %1242 = vmatpush1.bf16.msra.mxu0 0
    %1243 = vmatprep.subr.bf16.mxu0 0
    %1244 = vmatpush1.bf16.msra.mxu0 0
    %1245 = vmatprep.subr.bf16.mxu0 0
    %1246 = vmatpush1.bf16.msra.mxu0 0
    %1247 = vmatprep.subr.bf16.mxu0 0
    %1248 = vmatpush1.bf16.msra.mxu0 0
    %1249 = vmatprep.mubr.bf16.mxu0 0
    %1250 = vmatmul.mubr.bf16.gmra.mrb[0].mxu0 %v1215
    %v1251 = vpop.f32.mrb[0].mxu0
    %v1252 = vadd.f32 %v1200, %v1251
    %v1253 = vpop.f32.mrb[0].mxu0
    %v1254 = vpop.f32.mrb[0].mxu0
    %v1255 = vadd.f32 %v1200, %v1254
    %v1256 = vpop.f32.mrb[0].mxu0
    %1257 = vdwg.mxu0
    %v1258 = vadd.f32 %v722, %v1252
    %v1259 = vadd.f32 %v723, %v1255
    %v1260 = vsel %vm111, %v1258, 0.0
    %1261 = vadd.xlane.f32.xlu0 %v1260
    %v1262 = vpop.xlane.xlu0 %1261
    %v1263 = vsel %vm111, %v1259, 0.0
    %1264 = vadd.xlane.f32.xlu0 %v1263
    %v1265 = vpop.xlane.xlu0 %1264
    %v1266 = vmul.f32 %v1262, %v184
    %v1267 = vmul.f32 %v1265, %v184
    %v1268 = vsub.f32 %v1258, %v1266
    %v1269 = vsub.f32 %v1259, %v1267
    %v1270 = vmul.f32 %v1268, %v1268
    %v1271 = vmul.f32 %v1269, %v1269
    %v1272 = vsel %vm111, %v1270, 0.0
    %1273 = vadd.xlane.f32.xlu0 %v1272
    %v1274 = vpop.xlane.xlu0 %1273
    %v1275 = vsel %vm111, %v1271, 0.0
    %1276 = vadd.xlane.f32.xlu0 %v1275
    %v1277 = vpop.xlane.xlu0 %1276
    %v1278 = vmul.f32 %v1274, %v197
    %v1279 = vmul.f32 %v1277, %v197
    %v1280 = vld [vmem:[%s8] sm:$0x1]
    %v1282 = vlaneseq
    %v1283 = vshrl.u32 %v1282, 7
    %v1284 = vsub.s32 0, %v1283
    %v1285 = vrot.slane %v1280, %v1284
    %v1287 = vmul.f32 %v1285, %v1268
    %v1288 = vmul.f32 %v1285, %v1269
    %v1289 = vrsqrt.pop %v1278
    %v1290 = vmul.f32 %v1278, %v1289
    %vm1291 = vcmp.eq.f32.partialorder %v1278, inf
    %v1292 = vsel %vm1291, %v1278, %v1290
    %vm1293 = vcmp.eq.f32.partialorder %v1278, 0.0
    %v1294 = vand.u32 %v1278, 2147483648
    %v1295 = vsel %vm1293, %v1294, %v1292
    %v1296 = vrsqrt.pop %v1279
    %v1297 = vmul.f32 %v1279, %v1296
    %vm1298 = vcmp.eq.f32.partialorder %v1279, inf
    %v1299 = vsel %vm1298, %v1279, %v1297
    %vm1300 = vcmp.eq.f32.partialorder %v1279, 0.0
    %v1301 = vand.u32 %v1279, 2147483648
    %v1302 = vsel %vm1300, %v1301, %v1299
    %v1303 = vadd.f32 %v1295, 1e-07
    %v1304 = vadd.f32 %v1302, 1e-07
    %v1305 = vrcp.pop %v1303
    %v1306 = vmul.f32 %v1287, %v1305
    %v1307 = vrcp.pop %v1304
    %v1308 = vmul.f32 %v1288, %v1307
    %v1309 = vld [vmem:[%s9] sm:$0x1]
    %v1311 = vlaneseq
    %v1312 = vshrl.u32 %v1311, 7
    %v1313 = vsub.s32 0, %v1312
    %v1314 = vrot.slane %v1309, %v1313
    %v1316 = vadd.f32 %v1306, %v1314
    %v1317 = vadd.f32 %v1308, %v1314
    %v1318 = vpack.c.bf16 %v1317, %v1316
    %v1319 = vld [vmem:[%s20] sm:$0xff]
    %v1320 = vld [vmem:[%s20 + $0x8] sm:$0xff]
    %v1321 = vld [vmem:[%s20 + $0x10] sm:$0xff]
    %v1322 = vld [vmem:[%s20 + $0x18] sm:$0xff]
    %v1323 = vld [vmem:[%s20 + $0x20] sm:$0xff]
    %v1324 = vld [vmem:[%s20 + $0x28] sm:$0xff]
    %v1325 = vld [vmem:[%s20 + $0x30] sm:$0xff]
    %v1326 = vld [vmem:[%s20 + $0x38] sm:$0xff]
    %v1327 = vld [vmem:[%s20 + $0x40] sm:$0xff]
    %v1328 = vld [vmem:[%s20 + $0x48] sm:$0xff]
    %v1329 = vld [vmem:[%s20 + $0x50] sm:$0xff]
    %v1330 = vld [vmem:[%s20 + $0x58] sm:$0xff]
    %v1331 = vld [vmem:[%s20 + $0x60] sm:$0xff]
    %v1332 = vld [vmem:[%s20 + $0x68] sm:$0xff]
    %v1333 = vld [vmem:[%s20 + $0x70] sm:$0xff]
    %v1334 = vld [vmem:[%s20 + $0x78] sm:$0xff]
    %v1335 = vld [vmem:[%s20 + $0x80] sm:$0xff]
    %v1336 = vld [vmem:[%s20 + $0x88] sm:$0xff]
    %v1337 = vld [vmem:[%s20 + $0x90] sm:$0xff]
    %v1338 = vld [vmem:[%s20 + $0x98] sm:$0xff]
    %v1339 = vld [vmem:[%s20 + $0xa0] sm:$0xff]
    %v1340 = vld [vmem:[%s20 + $0xa8] sm:$0xff]
    %v1341 = vld [vmem:[%s20 + $0xb0] sm:$0xff]
    %v1342 = vld [vmem:[%s20 + $0xb8] sm:$0xff]
    %v1343 = vld [vmem:[%s20 + $0xc0] sm:$0xff]
    %v1344 = vld [vmem:[%s20 + $0xc8] sm:$0xff]
    %v1345 = vld [vmem:[%s20 + $0xd0] sm:$0xff]
    %v1346 = vld [vmem:[%s20 + $0xd8] sm:$0xff]
    %v1347 = vld [vmem:[%s20 + $0xe0] sm:$0xff]
    %v1348 = vld [vmem:[%s20 + $0xe8] sm:$0xff]
    %v1349 = vld [vmem:[%s20 + $0xf0] sm:$0xff]
    %v1350 = vld [vmem:[%s20 + $0xf8] sm:$0xff]
    %v1351 = vld [vmem:[%s21] sm:$0xff]
    %v1352 = vld [vmem:[%s21 + $0x8] sm:$0xff]
    %v1355 = vlaneseq
    %v1356 = vshrl.u32 %v1355, 7
    %v1357 = vsub.s32 0, %v1356
    %v1358 = vrot.slane %v1351, %v1357
    %v1359 = vlaneseq
    %v1360 = vshrl.u32 %v1359, 7
    %v1361 = vsub.s32 1, %v1360
    %v1362 = vrot.slane %v1351, %v1361
    %v1363 = vlaneseq
    %v1364 = vshrl.u32 %v1363, 7
    %v1365 = vsub.s32 2, %v1364
    %v1366 = vrot.slane %v1351, %v1365
    %v1367 = vlaneseq
    %v1368 = vshrl.u32 %v1367, 7
    %v1369 = vsub.s32 3, %v1368
    %v1370 = vrot.slane %v1351, %v1369
    %v1371 = vlaneseq
    %v1372 = vshrl.u32 %v1371, 7
    %v1373 = vsub.s32 4, %v1372
    %v1374 = vrot.slane %v1351, %v1373
    %v1375 = vlaneseq
    %v1376 = vshrl.u32 %v1375, 7
    %v1377 = vsub.s32 5, %v1376
    %v1378 = vrot.slane %v1351, %v1377
    %v1379 = vlaneseq
    %v1380 = vshrl.u32 %v1379, 7
    %v1381 = vsub.s32 6, %v1380
    %v1382 = vrot.slane %v1351, %v1381
    %v1383 = vlaneseq
    %v1384 = vshrl.u32 %v1383, 7
    %v1385 = vsub.s32 7, %v1384
    %v1386 = vrot.slane %v1351, %v1385
    %v1387 = vlaneseq
    %v1388 = vshrl.u32 %v1387, 7
    %v1389 = vsub.s32 0, %v1388
    %v1390 = vrot.slane %v1352, %v1389
    %v1391 = vlaneseq
    %v1392 = vshrl.u32 %v1391, 7
    %v1393 = vsub.s32 1, %v1392
    %v1394 = vrot.slane %v1352, %v1393
    %v1395 = vlaneseq
    %v1396 = vshrl.u32 %v1395, 7
    %v1397 = vsub.s32 2, %v1396
    %v1398 = vrot.slane %v1352, %v1397
    %v1399 = vlaneseq
    %v1400 = vshrl.u32 %v1399, 7
    %v1401 = vsub.s32 3, %v1400
    %v1402 = vrot.slane %v1352, %v1401
    %v1403 = vlaneseq
    %v1404 = vshrl.u32 %v1403, 7
    %v1405 = vsub.s32 4, %v1404
    %v1406 = vrot.slane %v1352, %v1405
    %v1407 = vlaneseq
    %v1408 = vshrl.u32 %v1407, 7
    %v1409 = vsub.s32 5, %v1408
    %v1410 = vrot.slane %v1352, %v1409
    %v1411 = vlaneseq
    %v1412 = vshrl.u32 %v1411, 7
    %v1413 = vsub.s32 6, %v1412
    %v1414 = vrot.slane %v1352, %v1413
    %v1415 = vlaneseq
    %v1416 = vshrl.u32 %v1415, 7
    %v1417 = vsub.s32 7, %v1416
    %v1418 = vrot.slane %v1352, %v1417
    %v1467 = vunpack.c.l.b16 %v1319
    %v1468 = vunpack.c.h.b16 %v1319
    %v1469 = vunpack.c.l.b16 %v1320
    %v1470 = vunpack.c.h.b16 %v1320
    %v1471 = vunpack.c.l.b16 %v1321
    %v1472 = vunpack.c.h.b16 %v1321
    %v1473 = vunpack.c.l.b16 %v1322
    %v1474 = vunpack.c.h.b16 %v1322
    %v1475 = vunpack.c.l.b16 %v1323
    %v1476 = vunpack.c.h.b16 %v1323
    %v1477 = vunpack.c.l.b16 %v1324
    %v1478 = vunpack.c.h.b16 %v1324
    %v1479 = vunpack.c.l.b16 %v1325
    %v1480 = vunpack.c.h.b16 %v1325
    %v1481 = vunpack.c.l.b16 %v1326
    %v1482 = vunpack.c.h.b16 %v1326
    %v1483 = vunpack.c.l.b16 %v1327
    %v1484 = vunpack.c.h.b16 %v1327
    %v1485 = vunpack.c.l.b16 %v1328
    %v1486 = vunpack.c.h.b16 %v1328
    %v1487 = vunpack.c.l.b16 %v1329
    %v1488 = vunpack.c.h.b16 %v1329
    %v1489 = vunpack.c.l.b16 %v1330
    %v1490 = vunpack.c.h.b16 %v1330
    %v1491 = vunpack.c.l.b16 %v1331
    %v1492 = vunpack.c.h.b16 %v1331
    %v1493 = vunpack.c.l.b16 %v1332
    %v1494 = vunpack.c.h.b16 %v1332
    %v1495 = vunpack.c.l.b16 %v1333
    %v1496 = vunpack.c.h.b16 %v1333
    %v1497 = vunpack.c.l.b16 %v1334
    %v1498 = vunpack.c.h.b16 %v1334
    %v1499 = vunpack.c.l.b16 %v1335
    %v1500 = vunpack.c.h.b16 %v1335
    %v1501 = vunpack.c.l.b16 %v1336
    %v1502 = vunpack.c.h.b16 %v1336
    %v1503 = vunpack.c.l.b16 %v1337
    %v1504 = vunpack.c.h.b16 %v1337
    %v1505 = vunpack.c.l.b16 %v1338
    %v1506 = vunpack.c.h.b16 %v1338
    %v1507 = vunpack.c.l.b16 %v1339
    %v1508 = vunpack.c.h.b16 %v1339
    %v1509 = vunpack.c.l.b16 %v1340
    %v1510 = vunpack.c.h.b16 %v1340
    %v1511 = vunpack.c.l.b16 %v1341
    %v1512 = vunpack.c.h.b16 %v1341
    %v1513 = vunpack.c.l.b16 %v1342
    %v1514 = vunpack.c.h.b16 %v1342
    %v1515 = vunpack.c.l.b16 %v1343
    %v1516 = vunpack.c.h.b16 %v1343
    %v1517 = vunpack.c.l.b16 %v1344
    %v1518 = vunpack.c.h.b16 %v1344
    %v1519 = vunpack.c.l.b16 %v1345
    %v1520 = vunpack.c.h.b16 %v1345
    %v1521 = vunpack.c.l.b16 %v1346
    %v1522 = vunpack.c.h.b16 %v1346
    %v1523 = vunpack.c.l.b16 %v1347
    %v1524 = vunpack.c.h.b16 %v1347
    %v1525 = vunpack.c.l.b16 %v1348
    %v1526 = vunpack.c.h.b16 %v1348
    %v1527 = vunpack.c.l.b16 %v1349
    %v1528 = vunpack.c.h.b16 %v1349
    %v1529 = vunpack.c.l.b16 %v1350
    %v1530 = vunpack.c.h.b16 %v1350
    %v1531 = vpack.c.b16 %v1483, %v1467
    %v1532 = vpack.c.b16 %v1484, %v1468
    %v1533 = vpack.c.b16 %v1485, %v1469
    %v1534 = vpack.c.b16 %v1486, %v1470
    %v1535 = vpack.c.b16 %v1487, %v1471
    %v1536 = vpack.c.b16 %v1488, %v1472
    %v1537 = vpack.c.b16 %v1489, %v1473
    %v1538 = vpack.c.b16 %v1490, %v1474
    %v1539 = vpack.c.b16 %v1491, %v1475
    %v1540 = vpack.c.b16 %v1492, %v1476
    %v1541 = vpack.c.b16 %v1493, %v1477
    %v1542 = vpack.c.b16 %v1494, %v1478
    %v1543 = vpack.c.b16 %v1495, %v1479
    %v1544 = vpack.c.b16 %v1496, %v1480
    %v1545 = vpack.c.b16 %v1497, %v1481
    %v1546 = vpack.c.b16 %v1498, %v1482
    %v1547 = vpack.c.b16 %v1515, %v1499
    %v1548 = vpack.c.b16 %v1516, %v1500
    %v1549 = vpack.c.b16 %v1517, %v1501
    %v1550 = vpack.c.b16 %v1518, %v1502
    %v1551 = vpack.c.b16 %v1519, %v1503
    %v1552 = vpack.c.b16 %v1520, %v1504
    %v1553 = vpack.c.b16 %v1521, %v1505
    %v1554 = vpack.c.b16 %v1522, %v1506
    %v1555 = vpack.c.b16 %v1523, %v1507
    %v1556 = vpack.c.b16 %v1524, %v1508
    %v1557 = vpack.c.b16 %v1525, %v1509
    %v1558 = vpack.c.b16 %v1526, %v1510
    %v1559 = vpack.c.b16 %v1527, %v1511
    %v1560 = vpack.c.b16 %v1528, %v1512
    %v1561 = vpack.c.b16 %v1529, %v1513
    %v1562 = vpack.c.b16 %v1530, %v1514
    %v1596 = vsel %vm111, %v1318, 0
    %1598 = vmatprep.subr.bf16.mxu0 %v1532
    %1599 = vmatpush1.bf16.msra.mxu0 %v1531
    %1600 = vmatprep.subr.bf16.mxu0 %v1548
    %1601 = vmatpush1.bf16.msra.mxu0 %v1547
    %1602 = vmatprep.subr.bf16.mxu0 0
    %1603 = vmatpush1.bf16.msra.mxu0 0
    %1604 = vmatprep.subr.bf16.mxu0 0
    %1605 = vmatpush1.bf16.msra.mxu0 0
    %1606 = vmatprep.subr.bf16.mxu0 0
    %1607 = vmatpush1.bf16.msra.mxu0 0
    %1608 = vmatprep.subr.bf16.mxu0 0
    %1609 = vmatpush1.bf16.msra.mxu0 0
    %1610 = vmatprep.subr.bf16.mxu0 0
    %1611 = vmatpush1.bf16.msra.mxu0 0
    %1612 = vmatprep.subr.bf16.mxu0 0
    %1613 = vmatpush1.bf16.msra.mxu0 0
    %1614 = vmatprep.subr.bf16.mxu0 0
    %1615 = vmatpush1.bf16.msra.mxu0 0
    %1616 = vmatprep.subr.bf16.mxu0 0
    %1617 = vmatpush1.bf16.msra.mxu0 0
    %1618 = vmatprep.subr.bf16.mxu0 0
    %1619 = vmatpush1.bf16.msra.mxu0 0
    %1620 = vmatprep.subr.bf16.mxu0 0
    %1621 = vmatpush1.bf16.msra.mxu0 0
    %1622 = vmatprep.subr.bf16.mxu0 0
    %1623 = vmatpush1.bf16.msra.mxu0 0
    %1624 = vmatprep.subr.bf16.mxu0 0
    %1625 = vmatpush1.bf16.msra.mxu0 0
    %1626 = vmatprep.subr.bf16.mxu0 0
    %1627 = vmatpush1.bf16.msra.mxu0 0
    %1628 = vmatprep.subr.bf16.mxu0 0
    %1629 = vmatpush1.bf16.msra.mxu0 0
    %1630 = vmatprep.mubr.bf16.mxu0 0
    %1631 = vmatmul.mubr.bf16.gmra.mrb[0].mxu0 %v1596
    %v1632 = vpop.f32.mrb[0].mxu0
    %v1633 = vadd.f32 %v1358, %v1632
    %v1634 = vpop.f32.mrb[0].mxu0
    %v1635 = vadd.f32 %v1362, %v1634
    %v1636 = vpop.f32.mrb[0].mxu0
    %v1637 = vadd.f32 %v1358, %v1636
    %v1638 = vpop.f32.mrb[0].mxu0
    %v1639 = vadd.f32 %v1362, %v1638
    %1640 = vdwg.mxu0
    %1641 = vmatprep.subr.bf16.mxu0 %v1534
    %1642 = vmatpush1.bf16.msra.mxu0 %v1533
    %1643 = vmatprep.subr.bf16.mxu0 %v1550
    %1644 = vmatpush1.bf16.msra.mxu0 %v1549
    %1645 = vmatprep.subr.bf16.mxu0 0
    %1646 = vmatpush1.bf16.msra.mxu0 0
    %1647 = vmatprep.subr.bf16.mxu0 0
    %1648 = vmatpush1.bf16.msra.mxu0 0
    %1649 = vmatprep.subr.bf16.mxu0 0
    %1650 = vmatpush1.bf16.msra.mxu0 0
    %1651 = vmatprep.subr.bf16.mxu0 0
    %1652 = vmatpush1.bf16.msra.mxu0 0
    %1653 = vmatprep.subr.bf16.mxu0 0
    %1654 = vmatpush1.bf16.msra.mxu0 0
    %1655 = vmatprep.subr.bf16.mxu0 0
    %1656 = vmatpush1.bf16.msra.mxu0 0
    %1657 = vmatprep.subr.bf16.mxu0 0
    %1658 = vmatpush1.bf16.msra.mxu0 0
    %1659 = vmatprep.subr.bf16.mxu0 0
    %1660 = vmatpush1.bf16.msra.mxu0 0
    %1661 = vmatprep.subr.bf16.mxu0 0
    %1662 = vmatpush1.bf16.msra.mxu0 0
    %1663 = vmatprep.subr.bf16.mxu0 0
    %1664 = vmatpush1.bf16.msra.mxu0 0
    %1665 = vmatprep.subr.bf16.mxu0 0
    %1666 = vmatpush1.bf16.msra.mxu0 0
    %1667 = vmatprep.subr.bf16.mxu0 0
    %1668 = vmatpush1.bf16.msra.mxu0 0
    %1669 = vmatprep.subr.bf16.mxu0 0
    %1670 = vmatpush1.bf16.msra.mxu0 0
    %1671 = vmatprep.subr.bf16.mxu0 0
    %1672 = vmatpush1.bf16.msra.mxu0 0
    %1673 = vmatprep.mubr.bf16.mxu0 0
    %1674 = vmatmul.mubr.bf16.gmra.mrb[0].mxu0 %v1596
    %v1675 = vpop.f32.mrb[0].mxu0
    %v1676 = vadd.f32 %v1366, %v1675
    %v1677 = vpop.f32.mrb[0].mxu0
    %v1678 = vadd.f32 %v1370, %v1677
    %v1679 = vpop.f32.mrb[0].mxu0
    %v1680 = vadd.f32 %v1366, %v1679
    %v1681 = vpop.f32.mrb[0].mxu0
    %v1682 = vadd.f32 %v1370, %v1681
    %1683 = vdwg.mxu0
    %1684 = vmatprep.subr.bf16.mxu0 %v1536
    %1685 = vmatpush1.bf16.msra.mxu0 %v1535
    %1686 = vmatprep.subr.bf16.mxu0 %v1552
    %1687 = vmatpush1.bf16.msra.mxu0 %v1551
    %1688 = vmatprep.subr.bf16.mxu0 0
    %1689 = vmatpush1.bf16.msra.mxu0 0
    %1690 = vmatprep.subr.bf16.mxu0 0
    %1691 = vmatpush1.bf16.msra.mxu0 0
    %1692 = vmatprep.subr.bf16.mxu0 0
    %1693 = vmatpush1.bf16.msra.mxu0 0
    %1694 = vmatprep.subr.bf16.mxu0 0
    %1695 = vmatpush1.bf16.msra.mxu0 0
    %1696 = vmatprep.subr.bf16.mxu0 0
    %1697 = vmatpush1.bf16.msra.mxu0 0
    %1698 = vmatprep.subr.bf16.mxu0 0
    %1699 = vmatpush1.bf16.msra.mxu0 0
    %1700 = vmatprep.subr.bf16.mxu0 0
    %1701 = vmatpush1.bf16.msra.mxu0 0
    %1702 = vmatprep.subr.bf16.mxu0 0
    %1703 = vmatpush1.bf16.msra.mxu0 0
    %1704 = vmatprep.subr.bf16.mxu0 0
    %1705 = vmatpush1.bf16.msra.mxu0 0
    %1706 = vmatprep.subr.bf16.mxu0 0
    %1707 = vmatpush1.bf16.msra.mxu0 0
    %1708 = vmatprep.subr.bf16.mxu0 0
    %1709 = vmatpush1.bf16.msra.mxu0 0
    %1710 = vmatprep.subr.bf16.mxu0 0
    %1711 = vmatpush1.bf16.msra.mxu0 0
    %1712 = vmatprep.subr.bf16.mxu0 0
    %1713 = vmatpush1.bf16.msra.mxu0 0
    %1714 = vmatprep.subr.bf16.mxu0 0
    %1715 = vmatpush1.bf16.msra.mxu0 0
    %1716 = vmatprep.mubr.bf16.mxu0 0
    %1717 = vmatmul.mubr.bf16.gmra.mrb[0].mxu0 %v1596
    %v1718 = vpop.f32.mrb[0].mxu0
    %v1719 = vadd.f32 %v1374, %v1718
    %v1720 = vpop.f32.mrb[0].mxu0
    %v1721 = vadd.f32 %v1378, %v1720
    %v1722 = vpop.f32.mrb[0].mxu0
    %v1723 = vadd.f32 %v1374, %v1722
    %v1724 = vpop.f32.mrb[0].mxu0
    %v1725 = vadd.f32 %v1378, %v1724
    %1726 = vdwg.mxu0
    %1727 = vmatprep.subr.bf16.mxu0 %v1538
    %1728 = vmatpush1.bf16.msra.mxu0 %v1537
    %1729 = vmatprep.subr.bf16.mxu0 %v1554
    %1730 = vmatpush1.bf16.msra.mxu0 %v1553
    %1731 = vmatprep.subr.bf16.mxu0 0
    %1732 = vmatpush1.bf16.msra.mxu0 0
    %1733 = vmatprep.subr.bf16.mxu0 0
    %1734 = vmatpush1.bf16.msra.mxu0 0
    %1735 = vmatprep.subr.bf16.mxu0 0
    %1736 = vmatpush1.bf16.msra.mxu0 0
    %1737 = vmatprep.subr.bf16.mxu0 0
    %1738 = vmatpush1.bf16.msra.mxu0 0
    %1739 = vmatprep.subr.bf16.mxu0 0
    %1740 = vmatpush1.bf16.msra.mxu0 0
    %1741 = vmatprep.subr.bf16.mxu0 0
    %1742 = vmatpush1.bf16.msra.mxu0 0
    %1743 = vmatprep.subr.bf16.mxu0 0
    %1744 = vmatpush1.bf16.msra.mxu0 0
    %1745 = vmatprep.subr.bf16.mxu0 0
    %1746 = vmatpush1.bf16.msra.mxu0 0
    %1747 = vmatprep.subr.bf16.mxu0 0
    %1748 = vmatpush1.bf16.msra.mxu0 0
    %1749 = vmatprep.subr.bf16.mxu0 0
    %1750 = vmatpush1.bf16.msra.mxu0 0
    %1751 = vmatprep.subr.bf16.mxu0 0
    %1752 = vmatpush1.bf16.msra.mxu0 0
    %1753 = vmatprep.subr.bf16.mxu0 0
    %1754 = vmatpush1.bf16.msra.mxu0 0
    %1755 = vmatprep.subr.bf16.mxu0 0
    %1756 = vmatpush1.bf16.msra.mxu0 0
    %1757 = vmatprep.subr.bf16.mxu0 0
    %1758 = vmatpush1.bf16.msra.mxu0 0
    %1759 = vmatprep.mubr.bf16.mxu0 0
    %1760 = vmatmul.mubr.bf16.gmra.mrb[0].mxu0 %v1596
    %v1761 = vpop.f32.mrb[0].mxu0
    %v1762 = vadd.f32 %v1382, %v1761
    %v1763 = vpop.f32.mrb[0].mxu0
    %v1764 = vadd.f32 %v1386, %v1763
    %v1765 = vpop.f32.mrb[0].mxu0
    %v1766 = vadd.f32 %v1382, %v1765
    %v1767 = vpop.f32.mrb[0].mxu0
    %v1768 = vadd.f32 %v1386, %v1767
    %1769 = vdwg.mxu0
    %1770 = vmatprep.subr.bf16.mxu0 %v1540
    %1771 = vmatpush1.bf16.msra.mxu0 %v1539
    %1772 = vmatprep.subr.bf16.mxu0 %v1556
    %1773 = vmatpush1.bf16.msra.mxu0 %v1555
    %1774 = vmatprep.subr.bf16.mxu0 0
    %1775 = vmatpush1.bf16.msra.mxu0 0
    %1776 = vmatprep.subr.bf16.mxu0 0
    %1777 = vmatpush1.bf16.msra.mxu0 0
    %1778 = vmatprep.subr.bf16.mxu0 0
    %1779 = vmatpush1.bf16.msra.mxu0 0
    %1780 = vmatprep.subr.bf16.mxu0 0
    %1781 = vmatpush1.bf16.msra.mxu0 0
    %1782 = vmatprep.subr.bf16.mxu0 0
    %1783 = vmatpush1.bf16.msra.mxu0 0
    %1784 = vmatprep.subr.bf16.mxu0 0
    %1785 = vmatpush1.bf16.msra.mxu0 0
    %1786 = vmatprep.subr.bf16.mxu0 0
    %1787 = vmatpush1.bf16.msra.mxu0 0
    %1788 = vmatprep.subr.bf16.mxu0 0
    %1789 = vmatpush1.bf16.msra.mxu0 0
    %1790 = vmatprep.subr.bf16.mxu0 0
    %1791 = vmatpush1.bf16.msra.mxu0 0
    %1792 = vmatprep.subr.bf16.mxu0 0
    %1793 = vmatpush1.bf16.msra.mxu0 0
    %1794 = vmatprep.subr.bf16.mxu0 0
    %1795 = vmatpush1.bf16.msra.mxu0 0
    %1796 = vmatprep.subr.bf16.mxu0 0
    %1797 = vmatpush1.bf16.msra.mxu0 0
    %1798 = vmatprep.subr.bf16.mxu0 0
    %1799 = vmatpush1.bf16.msra.mxu0 0
    %1800 = vmatprep.subr.bf16.mxu0 0
    %1801 = vmatpush1.bf16.msra.mxu0 0
    %1802 = vmatprep.mubr.bf16.mxu0 0
    %1803 = vmatmul.mubr.bf16.gmra.mrb[0].mxu0 %v1596
    %v1804 = vpop.f32.mrb[0].mxu0
    %v1805 = vadd.f32 %v1390, %v1804
    %v1806 = vpop.f32.mrb[0].mxu0
    %v1807 = vadd.f32 %v1394, %v1806
    %v1808 = vpop.f32.mrb[0].mxu0
    %v1809 = vadd.f32 %v1390, %v1808
    %v1810 = vpop.f32.mrb[0].mxu0
    %v1811 = vadd.f32 %v1394, %v1810
    %1812 = vdwg.mxu0
    %1813 = vmatprep.subr.bf16.mxu0 %v1542
    %1814 = vmatpush1.bf16.msra.mxu0 %v1541
    %1815 = vmatprep.subr.bf16.mxu0 %v1558
    %1816 = vmatpush1.bf16.msra.mxu0 %v1557
    %1817 = vmatprep.subr.bf16.mxu0 0
    %1818 = vmatpush1.bf16.msra.mxu0 0
    %1819 = vmatprep.subr.bf16.mxu0 0
    %1820 = vmatpush1.bf16.msra.mxu0 0
    %1821 = vmatprep.subr.bf16.mxu0 0
    %1822 = vmatpush1.bf16.msra.mxu0 0
    %1823 = vmatprep.subr.bf16.mxu0 0
    %1824 = vmatpush1.bf16.msra.mxu0 0
    %1825 = vmatprep.subr.bf16.mxu0 0
    %1826 = vmatpush1.bf16.msra.mxu0 0
    %1827 = vmatprep.subr.bf16.mxu0 0
    %1828 = vmatpush1.bf16.msra.mxu0 0
    %1829 = vmatprep.subr.bf16.mxu0 0
    %1830 = vmatpush1.bf16.msra.mxu0 0
    %1831 = vmatprep.subr.bf16.mxu0 0
    %1832 = vmatpush1.bf16.msra.mxu0 0
    %1833 = vmatprep.subr.bf16.mxu0 0
    %1834 = vmatpush1.bf16.msra.mxu0 0
    %1835 = vmatprep.subr.bf16.mxu0 0
    %1836 = vmatpush1.bf16.msra.mxu0 0
    %1837 = vmatprep.subr.bf16.mxu0 0
    %1838 = vmatpush1.bf16.msra.mxu0 0
    %1839 = vmatprep.subr.bf16.mxu0 0
    %1840 = vmatpush1.bf16.msra.mxu0 0
    %1841 = vmatprep.subr.bf16.mxu0 0
    %1842 = vmatpush1.bf16.msra.mxu0 0
    %1843 = vmatprep.subr.bf16.mxu0 0
    %1844 = vmatpush1.bf16.msra.mxu0 0
    %1845 = vmatprep.mubr.bf16.mxu0 0
    %1846 = vmatmul.mubr.bf16.gmra.mrb[0].mxu0 %v1596
    %v1847 = vpop.f32.mrb[0].mxu0
    %v1848 = vadd.f32 %v1398, %v1847
    %v1849 = vpop.f32.mrb[0].mxu0
    %v1850 = vadd.f32 %v1402, %v1849
    %v1851 = vpop.f32.mrb[0].mxu0
    %v1852 = vadd.f32 %v1398, %v1851
    %v1853 = vpop.f32.mrb[0].mxu0
    %v1854 = vadd.f32 %v1402, %v1853
    %1855 = vdwg.mxu0
    %1856 = vmatprep.subr.bf16.mxu0 %v1544
    %1857 = vmatpush1.bf16.msra.mxu0 %v1543
    %1858 = vmatprep.subr.bf16.mxu0 %v1560
    %1859 = vmatpush1.bf16.msra.mxu0 %v1559
    %1860 = vmatprep.subr.bf16.mxu0 0
    %1861 = vmatpush1.bf16.msra.mxu0 0
    %1862 = vmatprep.subr.bf16.mxu0 0
    %1863 = vmatpush1.bf16.msra.mxu0 0
    %1864 = vmatprep.subr.bf16.mxu0 0
    %1865 = vmatpush1.bf16.msra.mxu0 0
    %1866 = vmatprep.subr.bf16.mxu0 0
    %1867 = vmatpush1.bf16.msra.mxu0 0
    %1868 = vmatprep.subr.bf16.mxu0 0
    %1869 = vmatpush1.bf16.msra.mxu0 0
    %1870 = vmatprep.subr.bf16.mxu0 0
    %1871 = vmatpush1.bf16.msra.mxu0 0
    %1872 = vmatprep.subr.bf16.mxu0 0
    %1873 = vmatpush1.bf16.msra.mxu0 0
    %1874 = vmatprep.subr.bf16.mxu0 0
    %1875 = vmatpush1.bf16.msra.mxu0 0
    %1876 = vmatprep.subr.bf16.mxu0 0
    %1877 = vmatpush1.bf16.msra.mxu0 0
    %1878 = vmatprep.subr.bf16.mxu0 0
    %1879 = vmatpush1.bf16.msra.mxu0 0
    %1880 = vmatprep.subr.bf16.mxu0 0
    %1881 = vmatpush1.bf16.msra.mxu0 0
    %1882 = vmatprep.subr.bf16.mxu0 0
    %1883 = vmatpush1.bf16.msra.mxu0 0
    %1884 = vmatprep.subr.bf16.mxu0 0
    %1885 = vmatpush1.bf16.msra.mxu0 0
    %1886 = vmatprep.subr.bf16.mxu0 0
    %1887 = vmatpush1.bf16.msra.mxu0 0
    %1888 = vmatprep.mubr.bf16.mxu0 0
    %1889 = vmatmul.mubr.bf16.gmra.mrb[0].mxu0 %v1596
    %v1890 = vpop.f32.mrb[0].mxu0
    %v1891 = vadd.f32 %v1406, %v1890
    %v1892 = vpop.f32.mrb[0].mxu0
    %v1893 = vadd.f32 %v1410, %v1892
    %v1894 = vpop.f32.mrb[0].mxu0
    %v1895 = vadd.f32 %v1406, %v1894
    %v1896 = vpop.f32.mrb[0].mxu0
    %v1897 = vadd.f32 %v1410, %v1896
    %1898 = vdwg.mxu0
    %1899 = vmatprep.subr.bf16.mxu0 %v1546
    %1900 = vmatpush1.bf16.msra.mxu0 %v1545
    %1901 = vmatprep.subr.bf16.mxu0 %v1562
    %1902 = vmatpush1.bf16.msra.mxu0 %v1561
    %1903 = vmatprep.subr.bf16.mxu0 0
    %1904 = vmatpush1.bf16.msra.mxu0 0
    %1905 = vmatprep.subr.bf16.mxu0 0
    %1906 = vmatpush1.bf16.msra.mxu0 0
    %1907 = vmatprep.subr.bf16.mxu0 0
    %1908 = vmatpush1.bf16.msra.mxu0 0
    %1909 = vmatprep.subr.bf16.mxu0 0
    %1910 = vmatpush1.bf16.msra.mxu0 0
    %1911 = vmatprep.subr.bf16.mxu0 0
    %1912 = vmatpush1.bf16.msra.mxu0 0
    %1913 = vmatprep.subr.bf16.mxu0 0
    %1914 = vmatpush1.bf16.msra.mxu0 0
    %1915 = vmatprep.subr.bf16.mxu0 0
    %1916 = vmatpush1.bf16.msra.mxu0 0
    %1917 = vmatprep.subr.bf16.mxu0 0
    %1918 = vmatpush1.bf16.msra.mxu0 0
    %1919 = vmatprep.subr.bf16.mxu0 0
    %1920 = vmatpush1.bf16.msra.mxu0 0
    %1921 = vmatprep.subr.bf16.mxu0 0
    %1922 = vmatpush1.bf16.msra.mxu0 0
    %1923 = vmatprep.subr.bf16.mxu0 0
    %1924 = vmatpush1.bf16.msra.mxu0 0
    %1925 = vmatprep.subr.bf16.mxu0 0
    %1926 = vmatpush1.bf16.msra.mxu0 0
    %1927 = vmatprep.subr.bf16.mxu0 0
    %1928 = vmatpush1.bf16.msra.mxu0 0
    %1929 = vmatprep.subr.bf16.mxu0 0
    %1930 = vmatpush1.bf16.msra.mxu0 0
    %1931 = vmatprep.mubr.bf16.mxu0 0
    %1932 = vmatmul.mubr.bf16.gmra.mrb[0].mxu0 %v1596
    %v1933 = vpop.f32.mrb[0].mxu0
    %v1934 = vadd.f32 %v1414, %v1933
    %v1935 = vpop.f32.mrb[0].mxu0
    %v1936 = vadd.f32 %v1418, %v1935
    %v1937 = vpop.f32.mrb[0].mxu0
    %v1938 = vadd.f32 %v1414, %v1937
    %v1939 = vpop.f32.mrb[0].mxu0
    %v1940 = vadd.f32 %v1418, %v1939
    %1941 = vdwg.mxu0
    %v1942 = vmax.f32 %v1633, 0.0
    %v1943 = vmax.f32 %v1635, 0.0
    %v1944 = vmax.f32 %v1676, 0.0
    %v1945 = vmax.f32 %v1678, 0.0
    %v1946 = vmax.f32 %v1719, 0.0
    %v1947 = vmax.f32 %v1721, 0.0
    %v1948 = vmax.f32 %v1762, 0.0
    %v1949 = vmax.f32 %v1764, 0.0
    %v1950 = vmax.f32 %v1805, 0.0
    %v1951 = vmax.f32 %v1807, 0.0
    %v1952 = vmax.f32 %v1848, 0.0
    %v1953 = vmax.f32 %v1850, 0.0
    %v1954 = vmax.f32 %v1891, 0.0
    %v1955 = vmax.f32 %v1893, 0.0
    %v1956 = vmax.f32 %v1934, 0.0
    %v1957 = vmax.f32 %v1936, 0.0
    %v1958 = vmax.f32 %v1637, 0.0
    %v1959 = vmax.f32 %v1639, 0.0
    %v1960 = vmax.f32 %v1680, 0.0
    %v1961 = vmax.f32 %v1682, 0.0
    %v1962 = vmax.f32 %v1723, 0.0
    %v1963 = vmax.f32 %v1725, 0.0
    %v1964 = vmax.f32 %v1766, 0.0
    %v1965 = vmax.f32 %v1768, 0.0
    %v1966 = vmax.f32 %v1809, 0.0
    %v1967 = vmax.f32 %v1811, 0.0
    %v1968 = vmax.f32 %v1852, 0.0
    %v1969 = vmax.f32 %v1854, 0.0
    %v1970 = vmax.f32 %v1895, 0.0
    %v1971 = vmax.f32 %v1897, 0.0
    %v1972 = vmax.f32 %v1938, 0.0
    %v1973 = vmax.f32 %v1940, 0.0
    %v1974 = vpack.c.bf16 %v1958, %v1942
    %v1975 = vpack.c.bf16 %v1959, %v1943
    %v1976 = vpack.c.bf16 %v1960, %v1944
    %v1977 = vpack.c.bf16 %v1961, %v1945
    %v1978 = vpack.c.bf16 %v1962, %v1946
    %v1979 = vpack.c.bf16 %v1963, %v1947
    %v1980 = vpack.c.bf16 %v1964, %v1948
    %v1981 = vpack.c.bf16 %v1965, %v1949
    %v1982 = vpack.c.bf16 %v1966, %v1950
    %v1983 = vpack.c.bf16 %v1967, %v1951
    %v1984 = vpack.c.bf16 %v1968, %v1952
    %v1985 = vpack.c.bf16 %v1969, %v1953
    %v1986 = vpack.c.bf16 %v1970, %v1954
    %v1987 = vpack.c.bf16 %v1971, %v1955
    %v1988 = vpack.c.bf16 %v1972, %v1956
    %v1989 = vpack.c.bf16 %v1973, %v1957
    %v1990 = vld [vmem:[%s22] sm:$0xf]
    %v1991 = vld [vmem:[%s22 + $0x4] sm:$0xf]
    %v1992 = vld [vmem:[%s22 + $0x8] sm:$0xf]
    %v1993 = vld [vmem:[%s22 + $0xc] sm:$0xf]
    %v1994 = vld [vmem:[%s22 + $0x10] sm:$0xf]
    %v1995 = vld [vmem:[%s22 + $0x14] sm:$0xf]
    %v1996 = vld [vmem:[%s22 + $0x18] sm:$0xf]
    %v1997 = vld [vmem:[%s22 + $0x1c] sm:$0xf]
    %v1998 = vld [vmem:[%s22 + $0x20] sm:$0xf]
    %v1999 = vld [vmem:[%s22 + $0x24] sm:$0xf]
    %v2000 = vld [vmem:[%s22 + $0x28] sm:$0xf]
    %v2001 = vld [vmem:[%s22 + $0x2c] sm:$0xf]
    %v2002 = vld [vmem:[%s22 + $0x30] sm:$0xf]
    %v2003 = vld [vmem:[%s22 + $0x34] sm:$0xf]
    %v2004 = vld [vmem:[%s22 + $0x38] sm:$0xf]
    %v2005 = vld [vmem:[%s22 + $0x3c] sm:$0xf]
    %v2006 = vld [vmem:[%s22 + $0x40] sm:$0xf]
    %v2007 = vld [vmem:[%s22 + $0x44] sm:$0xf]
    %v2008 = vld [vmem:[%s22 + $0x48] sm:$0xf]
    %v2009 = vld [vmem:[%s22 + $0x4c] sm:$0xf]
    %v2010 = vld [vmem:[%s22 + $0x50] sm:$0xf]
    %v2011 = vld [vmem:[%s22 + $0x54] sm:$0xf]
    %v2012 = vld [vmem:[%s22 + $0x58] sm:$0xf]
    %v2013 = vld [vmem:[%s22 + $0x5c] sm:$0xf]
    %v2014 = vld [vmem:[%s22 + $0x60] sm:$0xf]
    %v2015 = vld [vmem:[%s22 + $0x64] sm:$0xf]
    %v2016 = vld [vmem:[%s22 + $0x68] sm:$0xf]
    %v2017 = vld [vmem:[%s22 + $0x6c] sm:$0xf]
    %v2018 = vld [vmem:[%s22 + $0x70] sm:$0xf]
    %v2019 = vld [vmem:[%s22 + $0x74] sm:$0xf]
    %v2020 = vld [vmem:[%s22 + $0x78] sm:$0xf]
    %v2021 = vld [vmem:[%s22 + $0x7c] sm:$0xf]
    %v2022 = vld [vmem:[%s22 + $0x80] sm:$0xf]
    %v2023 = vld [vmem:[%s22 + $0x84] sm:$0xf]
    %v2024 = vld [vmem:[%s22 + $0x88] sm:$0xf]
    %v2025 = vld [vmem:[%s22 + $0x8c] sm:$0xf]
    %v2026 = vld [vmem:[%s22 + $0x90] sm:$0xf]
    %v2027 = vld [vmem:[%s22 + $0x94] sm:$0xf]
    %v2028 = vld [vmem:[%s22 + $0x98] sm:$0xf]
    %v2029 = vld [vmem:[%s22 + $0x9c] sm:$0xf]
    %v2030 = vld [vmem:[%s22 + $0xa0] sm:$0xf]
    %v2031 = vld [vmem:[%s22 + $0xa4] sm:$0xf]
    %v2032 = vld [vmem:[%s22 + $0xa8] sm:$0xf]
    %v2033 = vld [vmem:[%s22 + $0xac] sm:$0xf]
    %v2034 = vld [vmem:[%s22 + $0xb0] sm:$0xf]
    %v2035 = vld [vmem:[%s22 + $0xb4] sm:$0xf]
    %v2036 = vld [vmem:[%s22 + $0xb8] sm:$0xf]
    %v2037 = vld [vmem:[%s22 + $0xbc] sm:$0xf]
    %v2038 = vld [vmem:[%s22 + $0xc0] sm:$0xf]
    %v2039 = vld [vmem:[%s22 + $0xc4] sm:$0xf]
    %v2040 = vld [vmem:[%s22 + $0xc8] sm:$0xf]
    %v2041 = vld [vmem:[%s22 + $0xcc] sm:$0xf]
    %v2042 = vld [vmem:[%s22 + $0xd0] sm:$0xf]
    %v2043 = vld [vmem:[%s22 + $0xd4] sm:$0xf]
    %v2044 = vld [vmem:[%s22 + $0xd8] sm:$0xf]
    %v2045 = vld [vmem:[%s22 + $0xdc] sm:$0xf]
    %v2046 = vld [vmem:[%s22 + $0xe0] sm:$0xf]
    %v2047 = vld [vmem:[%s22 + $0xe4] sm:$0xf]
    %v2048 = vld [vmem:[%s22 + $0xe8] sm:$0xf]
    %v2049 = vld [vmem:[%s22 + $0xec] sm:$0xf]
    %v2050 = vld [vmem:[%s22 + $0xf0] sm:$0xf]
    %v2051 = vld [vmem:[%s22 + $0xf4] sm:$0xf]
    %v2052 = vld [vmem:[%s22 + $0xf8] sm:$0xf]
    %v2053 = vld [vmem:[%s22 + $0xfc] sm:$0xf]
    %v2054 = vld [vmem:[%s22 + $0x100] sm:$0xf]
    %v2055 = vld [vmem:[%s22 + $0x104] sm:$0xf]
    %v2056 = vld [vmem:[%s22 + $0x108] sm:$0xf]
    %v2057 = vld [vmem:[%s22 + $0x10c] sm:$0xf]
    %v2058 = vld [vmem:[%s22 + $0x110] sm:$0xf]
    %v2059 = vld [vmem:[%s22 + $0x114] sm:$0xf]
    %v2060 = vld [vmem:[%s22 + $0x118] sm:$0xf]
    %v2061 = vld [vmem:[%s22 + $0x11c] sm:$0xf]
    %v2062 = vld [vmem:[%s22 + $0x120] sm:$0xf]
    %v2063 = vld [vmem:[%s22 + $0x124] sm:$0xf]
    %v2064 = vld [vmem:[%s22 + $0x128] sm:$0xf]
    %v2065 = vld [vmem:[%s22 + $0x12c] sm:$0xf]
    %v2066 = vld [vmem:[%s22 + $0x130] sm:$0xf]
    %v2067 = vld [vmem:[%s22 + $0x134] sm:$0xf]
    %v2068 = vld [vmem:[%s22 + $0x138] sm:$0xf]
    %v2069 = vld [vmem:[%s22 + $0x13c] sm:$0xf]
    %v2070 = vld [vmem:[%s22 + $0x140] sm:$0xf]
    %v2071 = vld [vmem:[%s22 + $0x144] sm:$0xf]
    %v2072 = vld [vmem:[%s22 + $0x148] sm:$0xf]
    %v2073 = vld [vmem:[%s22 + $0x14c] sm:$0xf]
    %v2074 = vld [vmem:[%s22 + $0x150] sm:$0xf]
    %v2075 = vld [vmem:[%s22 + $0x154] sm:$0xf]
    %v2076 = vld [vmem:[%s22 + $0x158] sm:$0xf]
    %v2077 = vld [vmem:[%s22 + $0x15c] sm:$0xf]
    %v2078 = vld [vmem:[%s22 + $0x160] sm:$0xf]
    %v2079 = vld [vmem:[%s22 + $0x164] sm:$0xf]
    %v2080 = vld [vmem:[%s22 + $0x168] sm:$0xf]
    %v2081 = vld [vmem:[%s22 + $0x16c] sm:$0xf]
    %v2082 = vld [vmem:[%s22 + $0x170] sm:$0xf]
    %v2083 = vld [vmem:[%s22 + $0x174] sm:$0xf]
    %v2084 = vld [vmem:[%s22 + $0x178] sm:$0xf]
    %v2085 = vld [vmem:[%s22 + $0x17c] sm:$0xf]
    %v2086 = vld [vmem:[%s22 + $0x180] sm:$0xf]
    %v2087 = vld [vmem:[%s22 + $0x184] sm:$0xf]
    %v2088 = vld [vmem:[%s22 + $0x188] sm:$0xf]
    %v2089 = vld [vmem:[%s22 + $0x18c] sm:$0xf]
    %v2090 = vld [vmem:[%s22 + $0x190] sm:$0xf]
    %v2091 = vld [vmem:[%s22 + $0x194] sm:$0xf]
    %v2092 = vld [vmem:[%s22 + $0x198] sm:$0xf]
    %v2093 = vld [vmem:[%s22 + $0x19c] sm:$0xf]
    %v2094 = vld [vmem:[%s22 + $0x1a0] sm:$0xf]
    %v2095 = vld [vmem:[%s22 + $0x1a4] sm:$0xf]
    %v2096 = vld [vmem:[%s22 + $0x1a8] sm:$0xf]
    %v2097 = vld [vmem:[%s22 + $0x1ac] sm:$0xf]
    %v2098 = vld [vmem:[%s22 + $0x1b0] sm:$0xf]
    %v2099 = vld [vmem:[%s22 + $0x1b4] sm:$0xf]
    %v2100 = vld [vmem:[%s22 + $0x1b8] sm:$0xf]
    %v2101 = vld [vmem:[%s22 + $0x1bc] sm:$0xf]
    %v2102 = vld [vmem:[%s22 + $0x1c0] sm:$0xf]
    %v2103 = vld [vmem:[%s22 + $0x1c4] sm:$0xf]
    %v2104 = vld [vmem:[%s22 + $0x1c8] sm:$0xf]
    %v2105 = vld [vmem:[%s22 + $0x1cc] sm:$0xf]
    %v2106 = vld [vmem:[%s22 + $0x1d0] sm:$0xf]
    %v2107 = vld [vmem:[%s22 + $0x1d4] sm:$0xf]
    %v2108 = vld [vmem:[%s22 + $0x1d8] sm:$0xf]
    %v2109 = vld [vmem:[%s22 + $0x1dc] sm:$0xf]
    %v2110 = vld [vmem:[%s22 + $0x1e0] sm:$0xf]
    %v2111 = vld [vmem:[%s22 + $0x1e4] sm:$0xf]
    %v2112 = vld [vmem:[%s22 + $0x1e8] sm:$0xf]
    %v2113 = vld [vmem:[%s22 + $0x1ec] sm:$0xf]
    %v2114 = vld [vmem:[%s22 + $0x1f0] sm:$0xf]
    %v2115 = vld [vmem:[%s22 + $0x1f4] sm:$0xf]
    %v2116 = vld [vmem:[%s22 + $0x1f8] sm:$0xf]
    %v2117 = vld [vmem:[%s22 + $0x1fc] sm:$0xf]
    %v2118 = vld [vmem:[%s22 + $0x200] sm:$0xf]
    %v2119 = vld [vmem:[%s22 + $0x204] sm:$0xf]
    %v2120 = vld [vmem:[%s22 + $0x208] sm:$0xf]
    %v2121 = vld [vmem:[%s22 + $0x20c] sm:$0xf]
    %v2122 = vld [vmem:[%s22 + $0x210] sm:$0xf]
    %v2123 = vld [vmem:[%s22 + $0x214] sm:$0xf]
    %v2124 = vld [vmem:[%s22 + $0x218] sm:$0xf]
    %v2125 = vld [vmem:[%s22 + $0x21c] sm:$0xf]
    %v2126 = vld [vmem:[%s22 + $0x220] sm:$0xf]
    %v2127 = vld [vmem:[%s22 + $0x224] sm:$0xf]
    %v2128 = vld [vmem:[%s22 + $0x228] sm:$0xf]
    %v2129 = vld [vmem:[%s22 + $0x22c] sm:$0xf]
    %v2130 = vld [vmem:[%s22 + $0x230] sm:$0xf]
    %v2131 = vld [vmem:[%s22 + $0x234] sm:$0xf]
    %v2132 = vld [vmem:[%s22 + $0x238] sm:$0xf]
    %v2133 = vld [vmem:[%s22 + $0x23c] sm:$0xf]
    %v2134 = vld [vmem:[%s22 + $0x240] sm:$0xf]
    %v2135 = vld [vmem:[%s22 + $0x244] sm:$0xf]
    %v2136 = vld [vmem:[%s22 + $0x248] sm:$0xf]
    %v2137 = vld [vmem:[%s22 + $0x24c] sm:$0xf]
    %v2138 = vld [vmem:[%s22 + $0x250] sm:$0xf]
    %v2139 = vld [vmem:[%s22 + $0x254] sm:$0xf]
    %v2140 = vld [vmem:[%s22 + $0x258] sm:$0xf]
    %v2141 = vld [vmem:[%s22 + $0x25c] sm:$0xf]
    %v2142 = vld [vmem:[%s22 + $0x260] sm:$0xf]
    %v2143 = vld [vmem:[%s22 + $0x264] sm:$0xf]
    %v2144 = vld [vmem:[%s22 + $0x268] sm:$0xf]
    %v2145 = vld [vmem:[%s22 + $0x26c] sm:$0xf]
    %v2146 = vld [vmem:[%s22 + $0x270] sm:$0xf]
    %v2147 = vld [vmem:[%s22 + $0x274] sm:$0xf]
    %v2148 = vld [vmem:[%s22 + $0x278] sm:$0xf]
    %v2149 = vld [vmem:[%s22 + $0x27c] sm:$0xf]
    %v2150 = vld [vmem:[%s22 + $0x280] sm:$0xf]
    %v2151 = vld [vmem:[%s22 + $0x284] sm:$0xf]
    %v2152 = vld [vmem:[%s22 + $0x288] sm:$0xf]
    %v2153 = vld [vmem:[%s22 + $0x28c] sm:$0xf]
    %v2154 = vld [vmem:[%s22 + $0x290] sm:$0xf]
    %v2155 = vld [vmem:[%s22 + $0x294] sm:$0xf]
    %v2156 = vld [vmem:[%s22 + $0x298] sm:$0xf]
    %v2157 = vld [vmem:[%s22 + $0x29c] sm:$0xf]
    %v2158 = vld [vmem:[%s22 + $0x2a0] sm:$0xf]
    %v2159 = vld [vmem:[%s22 + $0x2a4] sm:$0xf]
    %v2160 = vld [vmem:[%s22 + $0x2a8] sm:$0xf]
    %v2161 = vld [vmem:[%s22 + $0x2ac] sm:$0xf]
    %v2162 = vld [vmem:[%s22 + $0x2b0] sm:$0xf]
    %v2163 = vld [vmem:[%s22 + $0x2b4] sm:$0xf]
    %v2164 = vld [vmem:[%s22 + $0x2b8] sm:$0xf]
    %v2165 = vld [vmem:[%s22 + $0x2bc] sm:$0xf]
    %v2166 = vld [vmem:[%s22 + $0x2c0] sm:$0xf]
    %v2167 = vld [vmem:[%s22 + $0x2c4] sm:$0xf]
    %v2168 = vld [vmem:[%s22 + $0x2c8] sm:$0xf]
    %v2169 = vld [vmem:[%s22 + $0x2cc] sm:$0xf]
    %v2170 = vld [vmem:[%s22 + $0x2d0] sm:$0xf]
    %v2171 = vld [vmem:[%s22 + $0x2d4] sm:$0xf]
    %v2172 = vld [vmem:[%s22 + $0x2d8] sm:$0xf]
    %v2173 = vld [vmem:[%s22 + $0x2dc] sm:$0xf]
    %v2174 = vld [vmem:[%s22 + $0x2e0] sm:$0xf]
    %v2175 = vld [vmem:[%s22 + $0x2e4] sm:$0xf]
    %v2176 = vld [vmem:[%s22 + $0x2e8] sm:$0xf]
    %v2177 = vld [vmem:[%s22 + $0x2ec] sm:$0xf]
    %v2178 = vld [vmem:[%s22 + $0x2f0] sm:$0xf]
    %v2179 = vld [vmem:[%s22 + $0x2f4] sm:$0xf]
    %v2180 = vld [vmem:[%s22 + $0x2f8] sm:$0xf]
    %v2181 = vld [vmem:[%s22 + $0x2fc] sm:$0xf]
    %v2182 = vld [vmem:[%s22 + $0x300] sm:$0xf]
    %v2183 = vld [vmem:[%s22 + $0x304] sm:$0xf]
    %v2184 = vld [vmem:[%s22 + $0x308] sm:$0xf]
    %v2185 = vld [vmem:[%s22 + $0x30c] sm:$0xf]
    %v2186 = vld [vmem:[%s22 + $0x310] sm:$0xf]
    %v2187 = vld [vmem:[%s22 + $0x314] sm:$0xf]
    %v2188 = vld [vmem:[%s22 + $0x318] sm:$0xf]
    %v2189 = vld [vmem:[%s22 + $0x31c] sm:$0xf]
    %v2190 = vld [vmem:[%s22 + $0x320] sm:$0xf]
    %v2191 = vld [vmem:[%s22 + $0x324] sm:$0xf]
    %v2192 = vld [vmem:[%s22 + $0x328] sm:$0xf]
    %v2193 = vld [vmem:[%s22 + $0x32c] sm:$0xf]
    %v2194 = vld [vmem:[%s22 + $0x330] sm:$0xf]
    %v2195 = vld [vmem:[%s22 + $0x334] sm:$0xf]
    %v2196 = vld [vmem:[%s22 + $0x338] sm:$0xf]
    %v2197 = vld [vmem:[%s22 + $0x33c] sm:$0xf]
    %v2198 = vld [vmem:[%s22 + $0x340] sm:$0xf]
    %v2199 = vld [vmem:[%s22 + $0x344] sm:$0xf]
    %v2200 = vld [vmem:[%s22 + $0x348] sm:$0xf]
    %v2201 = vld [vmem:[%s22 + $0x34c] sm:$0xf]
    %v2202 = vld [vmem:[%s22 + $0x350] sm:$0xf]
    %v2203 = vld [vmem:[%s22 + $0x354] sm:$0xf]
    %v2204 = vld [vmem:[%s22 + $0x358] sm:$0xf]
    %v2205 = vld [vmem:[%s22 + $0x35c] sm:$0xf]
    %v2206 = vld [vmem:[%s22 + $0x360] sm:$0xf]
    %v2207 = vld [vmem:[%s22 + $0x364] sm:$0xf]
    %v2208 = vld [vmem:[%s22 + $0x368] sm:$0xf]
    %v2209 = vld [vmem:[%s22 + $0x36c] sm:$0xf]
    %v2210 = vld [vmem:[%s22 + $0x370] sm:$0xf]
    %v2211 = vld [vmem:[%s22 + $0x374] sm:$0xf]
    %v2212 = vld [vmem:[%s22 + $0x378] sm:$0xf]
    %v2213 = vld [vmem:[%s22 + $0x37c] sm:$0xf]
    %v2214 = vld [vmem:[%s22 + $0x380] sm:$0xf]
    %v2215 = vld [vmem:[%s22 + $0x384] sm:$0xf]
    %v2216 = vld [vmem:[%s22 + $0x388] sm:$0xf]
    %v2217 = vld [vmem:[%s22 + $0x38c] sm:$0xf]
    %v2218 = vld [vmem:[%s22 + $0x390] sm:$0xf]
    %v2219 = vld [vmem:[%s22 + $0x394] sm:$0xf]
    %v2220 = vld [vmem:[%s22 + $0x398] sm:$0xf]
    %v2221 = vld [vmem:[%s22 + $0x39c] sm:$0xf]
    %v2222 = vld [vmem:[%s22 + $0x3a0] sm:$0xf]
    %v2223 = vld [vmem:[%s22 + $0x3a4] sm:$0xf]
    %v2224 = vld [vmem:[%s22 + $0x3a8] sm:$0xf]
    %v2225 = vld [vmem:[%s22 + $0x3ac] sm:$0xf]
    %v2226 = vld [vmem:[%s22 + $0x3b0] sm:$0xf]
    %v2227 = vld [vmem:[%s22 + $0x3b4] sm:$0xf]
    %v2228 = vld [vmem:[%s22 + $0x3b8] sm:$0xf]
    %v2229 = vld [vmem:[%s22 + $0x3bc] sm:$0xf]
    %v2230 = vld [vmem:[%s22 + $0x3c0] sm:$0xf]
    %v2231 = vld [vmem:[%s22 + $0x3c4] sm:$0xf]
    %v2232 = vld [vmem:[%s22 + $0x3c8] sm:$0xf]
    %v2233 = vld [vmem:[%s22 + $0x3cc] sm:$0xf]
    %v2234 = vld [vmem:[%s22 + $0x3d0] sm:$0xf]
    %v2235 = vld [vmem:[%s22 + $0x3d4] sm:$0xf]
    %v2236 = vld [vmem:[%s22 + $0x3d8] sm:$0xf]
    %v2237 = vld [vmem:[%s22 + $0x3dc] sm:$0xf]
    %v2238 = vld [vmem:[%s22 + $0x3e0] sm:$0xf]
    %v2239 = vld [vmem:[%s22 + $0x3e4] sm:$0xf]
    %v2240 = vld [vmem:[%s22 + $0x3e8] sm:$0xf]
    %v2241 = vld [vmem:[%s22 + $0x3ec] sm:$0xf]
    %v2242 = vld [vmem:[%s22 + $0x3f0] sm:$0xf]
    %v2243 = vld [vmem:[%s22 + $0x3f4] sm:$0xf]
    %v2244 = vld [vmem:[%s22 + $0x3f8] sm:$0xf]
    %v2245 = vld [vmem:[%s22 + $0x3fc] sm:$0xf]
    %v2502 = vunpack.c.l.b16 %v1990
    %v2503 = vunpack.c.l.b16 %v1991
    %v2504 = vunpack.c.l.b16 %v1992
    %v2505 = vunpack.c.l.b16 %v1993
    %v2506 = vunpack.c.l.b16 %v1994
    %v2507 = vunpack.c.l.b16 %v1995
    %v2508 = vunpack.c.l.b16 %v1996
    %v2509 = vunpack.c.l.b16 %v1997
    %v2510 = vunpack.c.l.b16 %v1998
    %v2511 = vunpack.c.l.b16 %v1999
    %v2512 = vunpack.c.l.b16 %v2000
    %v2513 = vunpack.c.l.b16 %v2001
    %v2514 = vunpack.c.l.b16 %v2002
    %v2515 = vunpack.c.l.b16 %v2003
    %v2516 = vunpack.c.l.b16 %v2004
    %v2517 = vunpack.c.l.b16 %v2005
    %v2518 = vunpack.c.l.b16 %v2006
    %v2519 = vunpack.c.l.b16 %v2007
    %v2520 = vunpack.c.l.b16 %v2008
    %v2521 = vunpack.c.l.b16 %v2009
    %v2522 = vunpack.c.l.b16 %v2010
    %v2523 = vunpack.c.l.b16 %v2011
    %v2524 = vunpack.c.l.b16 %v2012
    %v2525 = vunpack.c.l.b16 %v2013
    %v2526 = vunpack.c.l.b16 %v2014
    %v2527 = vunpack.c.l.b16 %v2015
    %v2528 = vunpack.c.l.b16 %v2016
    %v2529 = vunpack.c.l.b16 %v2017
    %v2530 = vunpack.c.l.b16 %v2018
    %v2531 = vunpack.c.l.b16 %v2019
    %v2532 = vunpack.c.l.b16 %v2020
    %v2533 = vunpack.c.l.b16 %v2021
    %v2534 = vunpack.c.l.b16 %v2022
    %v2535 = vunpack.c.l.b16 %v2023
    %v2536 = vunpack.c.l.b16 %v2024
    %v2537 = vunpack.c.l.b16 %v2025
    %v2538 = vunpack.c.l.b16 %v2026
    %v2539 = vunpack.c.l.b16 %v2027
    %v2540 = vunpack.c.l.b16 %v2028
    %v2541 = vunpack.c.l.b16 %v2029
    %v2542 = vunpack.c.l.b16 %v2030
    %v2543 = vunpack.c.l.b16 %v2031
    %v2544 = vunpack.c.l.b16 %v2032
    %v2545 = vunpack.c.l.b16 %v2033
    %v2546 = vunpack.c.l.b16 %v2034
    %v2547 = vunpack.c.l.b16 %v2035
    %v2548 = vunpack.c.l.b16 %v2036
    %v2549 = vunpack.c.l.b16 %v2037
    %v2550 = vunpack.c.l.b16 %v2038
    %v2551 = vunpack.c.l.b16 %v2039
    %v2552 = vunpack.c.l.b16 %v2040
    %v2553 = vunpack.c.l.b16 %v2041
    %v2554 = vunpack.c.l.b16 %v2042
    %v2555 = vunpack.c.l.b16 %v2043
    %v2556 = vunpack.c.l.b16 %v2044
    %v2557 = vunpack.c.l.b16 %v2045
    %v2558 = vunpack.c.l.b16 %v2046
    %v2559 = vunpack.c.l.b16 %v2047
    %v2560 = vunpack.c.l.b16 %v2048
    %v2561 = vunpack.c.l.b16 %v2049
    %v2562 = vunpack.c.l.b16 %v2050
    %v2563 = vunpack.c.l.b16 %v2051
    %v2564 = vunpack.c.l.b16 %v2052
    %v2565 = vunpack.c.l.b16 %v2053
    %v2566 = vunpack.c.l.b16 %v2054
    %v2567 = vunpack.c.l.b16 %v2055
    %v2568 = vunpack.c.l.b16 %v2056
    %v2569 = vunpack.c.l.b16 %v2057
    %v2570 = vunpack.c.l.b16 %v2058
    %v2571 = vunpack.c.l.b16 %v2059
    %v2572 = vunpack.c.l.b16 %v2060
    %v2573 = vunpack.c.l.b16 %v2061
    %v2574 = vunpack.c.l.b16 %v2062
    %v2575 = vunpack.c.l.b16 %v2063
    %v2576 = vunpack.c.l.b16 %v2064
    %v2577 = vunpack.c.l.b16 %v2065
    %v2578 = vunpack.c.l.b16 %v2066
    %v2579 = vunpack.c.l.b16 %v2067
    %v2580 = vunpack.c.l.b16 %v2068
    %v2581 = vunpack.c.l.b16 %v2069
    %v2582 = vunpack.c.l.b16 %v2070
    %v2583 = vunpack.c.l.b16 %v2071
    %v2584 = vunpack.c.l.b16 %v2072
    %v2585 = vunpack.c.l.b16 %v2073
    %v2586 = vunpack.c.l.b16 %v2074
    %v2587 = vunpack.c.l.b16 %v2075
    %v2588 = vunpack.c.l.b16 %v2076
    %v2589 = vunpack.c.l.b16 %v2077
    %v2590 = vunpack.c.l.b16 %v2078
    %v2591 = vunpack.c.l.b16 %v2079
    %v2592 = vunpack.c.l.b16 %v2080
    %v2593 = vunpack.c.l.b16 %v2081
    %v2594 = vunpack.c.l.b16 %v2082
    %v2595 = vunpack.c.l.b16 %v2083
    %v2596 = vunpack.c.l.b16 %v2084
    %v2597 = vunpack.c.l.b16 %v2085
    %v2598 = vunpack.c.l.b16 %v2086
    %v2599 = vunpack.c.l.b16 %v2087
    %v2600 = vunpack.c.l.b16 %v2088
    %v2601 = vunpack.c.l.b16 %v2089
    %v2602 = vunpack.c.l.b16 %v2090
    %v2603 = vunpack.c.l.b16 %v2091
    %v2604 = vunpack.c.l.b16 %v2092
    %v2605 = vunpack.c.l.b16 %v2093
    %v2606 = vunpack.c.l.b16 %v2094
    %v2607 = vunpack.c.l.b16 %v2095
    %v2608 = vunpack.c.l.b16 %v2096
    %v2609 = vunpack.c.l.b16 %v2097
    %v2610 = vunpack.c.l.b16 %v2098
    %v2611 = vunpack.c.l.b16 %v2099
    %v2612 = vunpack.c.l.b16 %v2100
    %v2613 = vunpack.c.l.b16 %v2101
    %v2614 = vunpack.c.l.b16 %v2102
    %v2615 = vunpack.c.l.b16 %v2103
    %v2616 = vunpack.c.l.b16 %v2104
    %v2617 = vunpack.c.l.b16 %v2105
    %v2618 = vunpack.c.l.b16 %v2106
    %v2619 = vunpack.c.l.b16 %v2107
    %v2620 = vunpack.c.l.b16 %v2108
    %v2621 = vunpack.c.l.b16 %v2109
    %v2622 = vunpack.c.l.b16 %v2110
    %v2623 = vunpack.c.l.b16 %v2111
    %v2624 = vunpack.c.l.b16 %v2112
    %v2625 = vunpack.c.l.b16 %v2113
    %v2626 = vunpack.c.l.b16 %v2114
    %v2627 = vunpack.c.l.b16 %v2115
    %v2628 = vunpack.c.l.b16 %v2116
    %v2629 = vunpack.c.l.b16 %v2117
    %v2630 = vunpack.c.l.b16 %v2118
    %v2631 = vunpack.c.l.b16 %v2119
    %v2632 = vunpack.c.l.b16 %v2120
    %v2633 = vunpack.c.l.b16 %v2121
    %v2634 = vunpack.c.l.b16 %v2122
    %v2635 = vunpack.c.l.b16 %v2123
    %v2636 = vunpack.c.l.b16 %v2124
    %v2637 = vunpack.c.l.b16 %v2125
    %v2638 = vunpack.c.l.b16 %v2126
    %v2639 = vunpack.c.l.b16 %v2127
    %v2640 = vunpack.c.l.b16 %v2128
    %v2641 = vunpack.c.l.b16 %v2129
    %v2642 = vunpack.c.l.b16 %v2130
    %v2643 = vunpack.c.l.b16 %v2131
    %v2644 = vunpack.c.l.b16 %v2132
    %v2645 = vunpack.c.l.b16 %v2133
    %v2646 = vunpack.c.l.b16 %v2134
    %v2647 = vunpack.c.l.b16 %v2135
    %v2648 = vunpack.c.l.b16 %v2136
    %v2649 = vunpack.c.l.b16 %v2137
    %v2650 = vunpack.c.l.b16 %v2138
    %v2651 = vunpack.c.l.b16 %v2139
    %v2652 = vunpack.c.l.b16 %v2140
    %v2653 = vunpack.c.l.b16 %v2141
    %v2654 = vunpack.c.l.b16 %v2142
    %v2655 = vunpack.c.l.b16 %v2143
    %v2656 = vunpack.c.l.b16 %v2144
    %v2657 = vunpack.c.l.b16 %v2145
    %v2658 = vunpack.c.l.b16 %v2146
    %v2659 = vunpack.c.l.b16 %v2147
    %v2660 = vunpack.c.l.b16 %v2148
    %v2661 = vunpack.c.l.b16 %v2149
    %v2662 = vunpack.c.l.b16 %v2150
    %v2663 = vunpack.c.l.b16 %v2151
    %v2664 = vunpack.c.l.b16 %v2152
    %v2665 = vunpack.c.l.b16 %v2153
    %v2666 = vunpack.c.l.b16 %v2154
    %v2667 = vunpack.c.l.b16 %v2155
    %v2668 = vunpack.c.l.b16 %v2156
    %v2669 = vunpack.c.l.b16 %v2157
    %v2670 = vunpack.c.l.b16 %v2158
    %v2671 = vunpack.c.l.b16 %v2159
    %v2672 = vunpack.c.l.b16 %v2160
    %v2673 = vunpack.c.l.b16 %v2161
    %v2674 = vunpack.c.l.b16 %v2162
    %v2675 = vunpack.c.l.b16 %v2163
    %v2676 = vunpack.c.l.b16 %v2164
    %v2677 = vunpack.c.l.b16 %v2165
    %v2678 = vunpack.c.l.b16 %v2166
    %v2679 = vunpack.c.l.b16 %v2167
    %v2680 = vunpack.c.l.b16 %v2168
    %v2681 = vunpack.c.l.b16 %v2169
    %v2682 = vunpack.c.l.b16 %v2170
    %v2683 = vunpack.c.l.b16 %v2171
    %v2684 = vunpack.c.l.b16 %v2172
    %v2685 = vunpack.c.l.b16 %v2173
    %v2686 = vunpack.c.l.b16 %v2174
    %v2687 = vunpack.c.l.b16 %v2175
    %v2688 = vunpack.c.l.b16 %v2176
    %v2689 = vunpack.c.l.b16 %v2177
    %v2690 = vunpack.c.l.b16 %v2178
    %v2691 = vunpack.c.l.b16 %v2179
    %v2692 = vunpack.c.l.b16 %v2180
    %v2693 = vunpack.c.l.b16 %v2181
    %v2694 = vunpack.c.l.b16 %v2182
    %v2695 = vunpack.c.l.b16 %v2183
    %v2696 = vunpack.c.l.b16 %v2184
    %v2697 = vunpack.c.l.b16 %v2185
    %v2698 = vunpack.c.l.b16 %v2186
    %v2699 = vunpack.c.l.b16 %v2187
    %v2700 = vunpack.c.l.b16 %v2188
    %v2701 = vunpack.c.l.b16 %v2189
    %v2702 = vunpack.c.l.b16 %v2190
    %v2703 = vunpack.c.l.b16 %v2191
    %v2704 = vunpack.c.l.b16 %v2192
    %v2705 = vunpack.c.l.b16 %v2193
    %v2706 = vunpack.c.l.b16 %v2194
    %v2707 = vunpack.c.l.b16 %v2195
    %v2708 = vunpack.c.l.b16 %v2196
    %v2709 = vunpack.c.l.b16 %v2197
    %v2710 = vunpack.c.l.b16 %v2198
    %v2711 = vunpack.c.l.b16 %v2199
    %v2712 = vunpack.c.l.b16 %v2200
    %v2713 = vunpack.c.l.b16 %v2201
    %v2714 = vunpack.c.l.b16 %v2202
    %v2715 = vunpack.c.l.b16 %v2203
    %v2716 = vunpack.c.l.b16 %v2204
    %v2717 = vunpack.c.l.b16 %v2205
    %v2718 = vunpack.c.l.b16 %v2206
    %v2719 = vunpack.c.l.b16 %v2207
    %v2720 = vunpack.c.l.b16 %v2208
    %v2721 = vunpack.c.l.b16 %v2209
    %v2722 = vunpack.c.l.b16 %v2210
    %v2723 = vunpack.c.l.b16 %v2211
    %v2724 = vunpack.c.l.b16 %v2212
    %v2725 = vunpack.c.l.b16 %v2213
    %v2726 = vunpack.c.l.b16 %v2214
    %v2727 = vunpack.c.l.b16 %v2215
    %v2728 = vunpack.c.l.b16 %v2216
    %v2729 = vunpack.c.l.b16 %v2217
    %v2730 = vunpack.c.l.b16 %v2218
    %v2731 = vunpack.c.l.b16 %v2219
    %v2732 = vunpack.c.l.b16 %v2220
    %v2733 = vunpack.c.l.b16 %v2221
    %v2734 = vunpack.c.l.b16 %v2222
    %v2735 = vunpack.c.l.b16 %v2223
    %v2736 = vunpack.c.l.b16 %v2224
    %v2737 = vunpack.c.l.b16 %v2225
    %v2738 = vunpack.c.l.b16 %v2226
    %v2739 = vunpack.c.l.b16 %v2227
    %v2740 = vunpack.c.l.b16 %v2228
    %v2741 = vunpack.c.l.b16 %v2229
    %v2742 = vunpack.c.l.b16 %v2230
    %v2743 = vunpack.c.l.b16 %v2231
    %v2744 = vunpack.c.l.b16 %v2232
    %v2745 = vunpack.c.l.b16 %v2233
    %v2746 = vunpack.c.l.b16 %v2234
    %v2747 = vunpack.c.l.b16 %v2235
    %v2748 = vunpack.c.l.b16 %v2236
    %v2749 = vunpack.c.l.b16 %v2237
    %v2750 = vunpack.c.l.b16 %v2238
    %v2751 = vunpack.c.l.b16 %v2239
    %v2752 = vunpack.c.l.b16 %v2240
    %v2753 = vunpack.c.l.b16 %v2241
    %v2754 = vunpack.c.l.b16 %v2242
    %v2755 = vunpack.c.l.b16 %v2243
    %v2756 = vunpack.c.l.b16 %v2244
    %v2757 = vunpack.c.l.b16 %v2245
    %v2758 = vpack.c.b16 %v2503, %v2502
    %v2759 = vpack.c.b16 %v2505, %v2504
    %v2760 = vpack.c.b16 %v2507, %v2506
    %v2761 = vpack.c.b16 %v2509, %v2508
    %v2762 = vpack.c.b16 %v2511, %v2510
    %v2763 = vpack.c.b16 %v2513, %v2512
    %v2764 = vpack.c.b16 %v2515, %v2514
    %v2765 = vpack.c.b16 %v2517, %v2516
    %v2766 = vpack.c.b16 %v2519, %v2518
    %v2767 = vpack.c.b16 %v2521, %v2520
    %v2768 = vpack.c.b16 %v2523, %v2522
    %v2769 = vpack.c.b16 %v2525, %v2524
    %v2770 = vpack.c.b16 %v2527, %v2526
    %v2771 = vpack.c.b16 %v2529, %v2528
    %v2772 = vpack.c.b16 %v2531, %v2530
    %v2773 = vpack.c.b16 %v2533, %v2532
    %v2774 = vpack.c.b16 %v2535, %v2534
    %v2775 = vpack.c.b16 %v2537, %v2536
    %v2776 = vpack.c.b16 %v2539, %v2538
    %v2777 = vpack.c.b16 %v2541, %v2540
    %v2778 = vpack.c.b16 %v2543, %v2542
    %v2779 = vpack.c.b16 %v2545, %v2544
    %v2780 = vpack.c.b16 %v2547, %v2546
    %v2781 = vpack.c.b16 %v2549, %v2548
    %v2782 = vpack.c.b16 %v2551, %v2550
    %v2783 = vpack.c.b16 %v2553, %v2552
    %v2784 = vpack.c.b16 %v2555, %v2554
    %v2785 = vpack.c.b16 %v2557, %v2556
    %v2786 = vpack.c.b16 %v2559, %v2558
    %v2787 = vpack.c.b16 %v2561, %v2560
    %v2788 = vpack.c.b16 %v2563, %v2562
    %v2789 = vpack.c.b16 %v2565, %v2564
    %v2790 = vpack.c.b16 %v2567, %v2566
    %v2791 = vpack.c.b16 %v2569, %v2568
    %v2792 = vpack.c.b16 %v2571, %v2570
    %v2793 = vpack.c.b16 %v2573, %v2572
    %v2794 = vpack.c.b16 %v2575, %v2574
    %v2795 = vpack.c.b16 %v2577, %v2576
    %v2796 = vpack.c.b16 %v2579, %v2578
    %v2797 = vpack.c.b16 %v2581, %v2580
    %v2798 = vpack.c.b16 %v2583, %v2582
    %v2799 = vpack.c.b16 %v2585, %v2584
    %v2800 = vpack.c.b16 %v2587, %v2586
    %v2801 = vpack.c.b16 %v2589, %v2588
    %v2802 = vpack.c.b16 %v2591, %v2590
    %v2803 = vpack.c.b16 %v2593, %v2592
    %v2804 = vpack.c.b16 %v2595, %v2594
    %v2805 = vpack.c.b16 %v2597, %v2596
    %v2806 = vpack.c.b16 %v2599, %v2598
    %v2807 = vpack.c.b16 %v2601, %v2600
    %v2808 = vpack.c.b16 %v2603, %v2602
    %v2809 = vpack.c.b16 %v2605, %v2604
    %v2810 = vpack.c.b16 %v2607, %v2606
    %v2811 = vpack.c.b16 %v2609, %v2608
    %v2812 = vpack.c.b16 %v2611, %v2610
    %v2813 = vpack.c.b16 %v2613, %v2612
    %v2814 = vpack.c.b16 %v2615, %v2614
    %v2815 = vpack.c.b16 %v2617, %v2616
    %v2816 = vpack.c.b16 %v2619, %v2618
    %v2817 = vpack.c.b16 %v2621, %v2620
    %v2818 = vpack.c.b16 %v2623, %v2622
    %v2819 = vpack.c.b16 %v2625, %v2624
    %v2820 = vpack.c.b16 %v2627, %v2626
    %v2821 = vpack.c.b16 %v2629, %v2628
    %v2822 = vpack.c.b16 %v2631, %v2630
    %v2823 = vpack.c.b16 %v2633, %v2632
    %v2824 = vpack.c.b16 %v2635, %v2634
    %v2825 = vpack.c.b16 %v2637, %v2636
    %v2826 = vpack.c.b16 %v2639, %v2638
    %v2827 = vpack.c.b16 %v2641, %v2640
    %v2828 = vpack.c.b16 %v2643, %v2642
    %v2829 = vpack.c.b16 %v2645, %v2644
    %v2830 = vpack.c.b16 %v2647, %v2646
    %v2831 = vpack.c.b16 %v2649, %v2648
    %v2832 = vpack.c.b16 %v2651, %v2650
    %v2833 = vpack.c.b16 %v2653, %v2652
    %v2834 = vpack.c.b16 %v2655, %v2654
    %v2835 = vpack.c.b16 %v2657, %v2656
    %v2836 = vpack.c.b16 %v2659, %v2658
    %v2837 = vpack.c.b16 %v2661, %v2660
    %v2838 = vpack.c.b16 %v2663, %v2662
    %v2839 = vpack.c.b16 %v2665, %v2664
    %v2840 = vpack.c.b16 %v2667, %v2666
    %v2841 = vpack.c.b16 %v2669, %v2668
    %v2842 = vpack.c.b16 %v2671, %v2670
    %v2843 = vpack.c.b16 %v2673, %v2672
    %v2844 = vpack.c.b16 %v2675, %v2674
    %v2845 = vpack.c.b16 %v2677, %v2676
    %v2846 = vpack.c.b16 %v2679, %v2678
    %v2847 = vpack.c.b16 %v2681, %v2680
    %v2848 = vpack.c.b16 %v2683, %v2682
    %v2849 = vpack.c.b16 %v2685, %v2684
    %v2850 = vpack.c.b16 %v2687, %v2686
    %v2851 = vpack.c.b16 %v2689, %v2688
    %v2852 = vpack.c.b16 %v2691, %v2690
    %v2853 = vpack.c.b16 %v2693, %v2692
    %v2854 = vpack.c.b16 %v2695, %v2694
    %v2855 = vpack.c.b16 %v2697, %v2696
    %v2856 = vpack.c.b16 %v2699, %v2698
    %v2857 = vpack.c.b16 %v2701, %v2700
    %v2858 = vpack.c.b16 %v2703, %v2702
    %v2859 = vpack.c.b16 %v2705, %v2704
    %v2860 = vpack.c.b16 %v2707, %v2706
    %v2861 = vpack.c.b16 %v2709, %v2708
    %v2862 = vpack.c.b16 %v2711, %v2710
    %v2863 = vpack.c.b16 %v2713, %v2712
    %v2864 = vpack.c.b16 %v2715, %v2714
    %v2865 = vpack.c.b16 %v2717, %v2716
    %v2866 = vpack.c.b16 %v2719, %v2718
    %v2867 = vpack.c.b16 %v2721, %v2720
    %v2868 = vpack.c.b16 %v2723, %v2722
    %v2869 = vpack.c.b16 %v2725, %v2724
    %v2870 = vpack.c.b16 %v2727, %v2726
    %v2871 = vpack.c.b16 %v2729, %v2728
    %v2872 = vpack.c.b16 %v2731, %v2730
    %v2873 = vpack.c.b16 %v2733, %v2732
    %v2874 = vpack.c.b16 %v2735, %v2734
    %v2875 = vpack.c.b16 %v2737, %v2736
    %v2876 = vpack.c.b16 %v2739, %v2738
    %v2877 = vpack.c.b16 %v2741, %v2740
    %v2878 = vpack.c.b16 %v2743, %v2742
    %v2879 = vpack.c.b16 %v2745, %v2744
    %v2880 = vpack.c.b16 %v2747, %v2746
    %v2881 = vpack.c.b16 %v2749, %v2748
    %v2882 = vpack.c.b16 %v2751, %v2750
    %v2883 = vpack.c.b16 %v2753, %v2752
    %v2884 = vpack.c.b16 %v2755, %v2754
    %v2885 = vpack.c.b16 %v2757, %v2756
    %3014 = vmatprep.subr.bf16.mxu0 0
    %3015 = vmatpush1.bf16.msra.mxu0 %v2758
    %3016 = vmatprep.subr.bf16.mxu0 0
    %3017 = vmatpush1.bf16.msra.mxu0 %v2759
    %3018 = vmatprep.subr.bf16.mxu0 0
    %3019 = vmatpush1.bf16.msra.mxu0 %v2760
    %3020 = vmatprep.subr.bf16.mxu0 0
    %3021 = vmatpush1.bf16.msra.mxu0 %v2761
    %3022 = vmatprep.subr.bf16.mxu0 0
    %3023 = vmatpush1.bf16.msra.mxu0 %v2762
    %3024 = vmatprep.subr.bf16.mxu0 0
    %3025 = vmatpush1.bf16.msra.mxu0 %v2763
    %3026 = vmatprep.subr.bf16.mxu0 0
    %3027 = vmatpush1.bf16.msra.mxu0 %v2764
    %3028 = vmatprep.subr.bf16.mxu0 0
    %3029 = vmatpush1.bf16.msra.mxu0 %v2765
    %3030 = vmatprep.subr.bf16.mxu0 0
    %3031 = vmatpush1.bf16.msra.mxu0 %v2766
    %3032 = vmatprep.subr.bf16.mxu0 0
    %3033 = vmatpush1.bf16.msra.mxu0 %v2767
    %3034 = vmatprep.subr.bf16.mxu0 0
    %3035 = vmatpush1.bf16.msra.mxu0 %v2768
    %3036 = vmatprep.subr.bf16.mxu0 0
    %3037 = vmatpush1.bf16.msra.mxu0 %v2769
    %3038 = vmatprep.subr.bf16.mxu0 0
    %3039 = vmatpush1.bf16.msra.mxu0 %v2770
    %3040 = vmatprep.subr.bf16.mxu0 0
    %3041 = vmatpush1.bf16.msra.mxu0 %v2771
    %3042 = vmatprep.subr.bf16.mxu0 0
    %3043 = vmatpush1.bf16.msra.mxu0 %v2772
    %3044 = vmatprep.subr.bf16.mxu0 0
    %3045 = vmatpush1.bf16.msra.mxu0 %v2773
    %3046 = vmatprep.mubr.bf16.mxu0 %v1975
    %3047 = vmatmul.mubr.bf16.gmra.mrb[0].mxu0 %v1974
    %v3048 = vpop.f32.mrb[0].mxu0
    %v3049 = vadd.f32 0.0, %v3048
    %v3050 = vpop.f32.mrb[0].mxu0
    %v3051 = vpop.f32.mrb[0].mxu0
    %v3052 = vadd.f32 0.0, %v3051
    %v3053 = vpop.f32.mrb[0].mxu0
    %3054 = vdwg.mxu0
    %3055 = vmatprep.subr.bf16.mxu0 0
    %3056 = vmatpush1.bf16.msra.mxu0 %v2774
    %3057 = vmatprep.subr.bf16.mxu0 0
    %3058 = vmatpush1.bf16.msra.mxu0 %v2775
    %3059 = vmatprep.subr.bf16.mxu0 0
    %3060 = vmatpush1.bf16.msra.mxu0 %v2776
    %3061 = vmatprep.subr.bf16.mxu0 0
    %3062 = vmatpush1.bf16.msra.mxu0 %v2777
    %3063 = vmatprep.subr.bf16.mxu0 0
    %3064 = vmatpush1.bf16.msra.mxu0 %v2778
    %3065 = vmatprep.subr.bf16.mxu0 0
    %3066 = vmatpush1.bf16.msra.mxu0 %v2779
    %3067 = vmatprep.subr.bf16.mxu0 0
    %3068 = vmatpush1.bf16.msra.mxu0 %v2780
    %3069 = vmatprep.subr.bf16.mxu0 0
    %3070 = vmatpush1.bf16.msra.mxu0 %v2781
    %3071 = vmatprep.subr.bf16.mxu0 0
    %3072 = vmatpush1.bf16.msra.mxu0 %v2782
    %3073 = vmatprep.subr.bf16.mxu0 0
    %3074 = vmatpush1.bf16.msra.mxu0 %v2783
    %3075 = vmatprep.subr.bf16.mxu0 0
    %3076 = vmatpush1.bf16.msra.mxu0 %v2784
    %3077 = vmatprep.subr.bf16.mxu0 0
    %3078 = vmatpush1.bf16.msra.mxu0 %v2785
    %3079 = vmatprep.subr.bf16.mxu0 0
    %3080 = vmatpush1.bf16.msra.mxu0 %v2786
    %3081 = vmatprep.subr.bf16.mxu0 0
    %3082 = vmatpush1.bf16.msra.mxu0 %v2787
    %3083 = vmatprep.subr.bf16.mxu0 0
    %3084 = vmatpush1.bf16.msra.mxu0 %v2788
    %3085 = vmatprep.subr.bf16.mxu0 0
    %3086 = vmatpush1.bf16.msra.mxu0 %v2789
    %3087 = vmatprep.mubr.bf16.mxu0 %v1977
    %3088 = vmatmul.mubr.bf16.gmra.mrb[0].mxu0 %v1976
    %v3089 = vpop.f32.mrb[0].mxu0
    %v3090 = vadd.f32 %v3049, %v3089
    %v3091 = vpop.f32.mrb[0].mxu0
    %v3092 = vpop.f32.mrb[0].mxu0
    %v3093 = vadd.f32 %v3052, %v3092
    %v3094 = vpop.f32.mrb[0].mxu0
    %3095 = vdwg.mxu0
    %3096 = vmatprep.subr.bf16.mxu0 0
    %3097 = vmatpush1.bf16.msra.mxu0 %v2790
    %3098 = vmatprep.subr.bf16.mxu0 0
    %3099 = vmatpush1.bf16.msra.mxu0 %v2791
    %3100 = vmatprep.subr.bf16.mxu0 0
    %3101 = vmatpush1.bf16.msra.mxu0 %v2792
    %3102 = vmatprep.subr.bf16.mxu0 0
    %3103 = vmatpush1.bf16.msra.mxu0 %v2793
    %3104 = vmatprep.subr.bf16.mxu0 0
    %3105 = vmatpush1.bf16.msra.mxu0 %v2794
    %3106 = vmatprep.subr.bf16.mxu0 0
    %3107 = vmatpush1.bf16.msra.mxu0 %v2795
    %3108 = vmatprep.subr.bf16.mxu0 0
    %3109 = vmatpush1.bf16.msra.mxu0 %v2796
    %3110 = vmatprep.subr.bf16.mxu0 0
    %3111 = vmatpush1.bf16.msra.mxu0 %v2797
    %3112 = vmatprep.subr.bf16.mxu0 0
    %3113 = vmatpush1.bf16.msra.mxu0 %v2798
    %3114 = vmatprep.subr.bf16.mxu0 0
    %3115 = vmatpush1.bf16.msra.mxu0 %v2799
    %3116 = vmatprep.subr.bf16.mxu0 0
    %3117 = vmatpush1.bf16.msra.mxu0 %v2800
    %3118 = vmatprep.subr.bf16.mxu0 0
    %3119 = vmatpush1.bf16.msra.mxu0 %v2801
    %3120 = vmatprep.subr.bf16.mxu0 0
    %3121 = vmatpush1.bf16.msra.mxu0 %v2802
    %3122 = vmatprep.subr.bf16.mxu0 0
    %3123 = vmatpush1.bf16.msra.mxu0 %v2803
    %3124 = vmatprep.subr.bf16.mxu0 0
    %3125 = vmatpush1.bf16.msra.mxu0 %v2804
    %3126 = vmatprep.subr.bf16.mxu0 0
    %3127 = vmatpush1.bf16.msra.mxu0 %v2805
    %3128 = vmatprep.mubr.bf16.mxu0 %v1979
    %3129 = vmatmul.mubr.bf16.gmra.mrb[0].mxu0 %v1978
    %v3130 = vpop.f32.mrb[0].mxu0
    %v3131 = vadd.f32 %v3090, %v3130
    %v3132 = vpop.f32.mrb[0].mxu0
    %v3133 = vpop.f32.mrb[0].mxu0
    %v3134 = vadd.f32 %v3093, %v3133
    %v3135 = vpop.f32.mrb[0].mxu0
    %3136 = vdwg.mxu0
    %3137 = vmatprep.subr.bf16.mxu0 0
    %3138 = vmatpush1.bf16.msra.mxu0 %v2806
    %3139 = vmatprep.subr.bf16.mxu0 0
    %3140 = vmatpush1.bf16.msra.mxu0 %v2807
    %3141 = vmatprep.subr.bf16.mxu0 0
    %3142 = vmatpush1.bf16.msra.mxu0 %v2808
    %3143 = vmatprep.subr.bf16.mxu0 0
    %3144 = vmatpush1.bf16.msra.mxu0 %v2809
    %3145 = vmatprep.subr.bf16.mxu0 0
    %3146 = vmatpush1.bf16.msra.mxu0 %v2810
    %3147 = vmatprep.subr.bf16.mxu0 0
    %3148 = vmatpush1.bf16.msra.mxu0 %v2811
    %3149 = vmatprep.subr.bf16.mxu0 0
    %3150 = vmatpush1.bf16.msra.mxu0 %v2812
    %3151 = vmatprep.subr.bf16.mxu0 0
    %3152 = vmatpush1.bf16.msra.mxu0 %v2813
    %3153 = vmatprep.subr.bf16.mxu0 0
    %3154 = vmatpush1.bf16.msra.mxu0 %v2814
    %3155 = vmatprep.subr.bf16.mxu0 0
    %3156 = vmatpush1.bf16.msra.mxu0 %v2815
    %3157 = vmatprep.subr.bf16.mxu0 0
    %3158 = vmatpush1.bf16.msra.mxu0 %v2816
    %3159 = vmatprep.subr.bf16.mxu0 0
    %3160 = vmatpush1.bf16.msra.mxu0 %v2817
    %3161 = vmatprep.subr.bf16.mxu0 0
    %3162 = vmatpush1.bf16.msra.mxu0 %v2818
    %3163 = vmatprep.subr.bf16.mxu0 0
    %3164 = vmatpush1.bf16.msra.mxu0 %v2819
    %3165 = vmatprep.subr.bf16.mxu0 0
    %3166 = vmatpush1.bf16.msra.mxu0 %v2820
    %3167 = vmatprep.subr.bf16.mxu0 0
    %3168 = vmatpush1.bf16.msra.mxu0 %v2821
    %3169 = vmatprep.mubr.bf16.mxu0 %v1981
    %3170 = vmatmul.mubr.bf16.gmra.mrb[0].mxu0 %v1980
    %v3171 = vpop.f32.mrb[0].mxu0
    %v3172 = vadd.f32 %v3131, %v3171
    %v3173 = vpop.f32.mrb[0].mxu0
    %v3174 = vpop.f32.mrb[0].mxu0
    %v3175 = vadd.f32 %v3134, %v3174
    %v3176 = vpop.f32.mrb[0].mxu0
    %3177 = vdwg.mxu0
    %3178 = vmatprep.subr.bf16.mxu0 0
    %3179 = vmatpush1.bf16.msra.mxu0 %v2822
    %3180 = vmatprep.subr.bf16.mxu0 0
    %3181 = vmatpush1.bf16.msra.mxu0 %v2823
    %3182 = vmatprep.subr.bf16.mxu0 0
    %3183 = vmatpush1.bf16.msra.mxu0 %v2824
    %3184 = vmatprep.subr.bf16.mxu0 0
    %3185 = vmatpush1.bf16.msra.mxu0 %v2825
    %3186 = vmatprep.subr.bf16.mxu0 0
    %3187 = vmatpush1.bf16.msra.mxu0 %v2826
    %3188 = vmatprep.subr.bf16.mxu0 0
    %3189 = vmatpush1.bf16.msra.mxu0 %v2827
    %3190 = vmatprep.subr.bf16.mxu0 0
    %3191 = vmatpush1.bf16.msra.mxu0 %v2828
    %3192 = vmatprep.subr.bf16.mxu0 0
    %3193 = vmatpush1.bf16.msra.mxu0 %v2829
    %3194 = vmatprep.subr.bf16.mxu0 0
    %3195 = vmatpush1.bf16.msra.mxu0 %v2830
    %3196 = vmatprep.subr.bf16.mxu0 0
    %3197 = vmatpush1.bf16.msra.mxu0 %v2831
    %3198 = vmatprep.subr.bf16.mxu0 0
    %3199 = vmatpush1.bf16.msra.mxu0 %v2832
    %3200 = vmatprep.subr.bf16.mxu0 0
    %3201 = vmatpush1.bf16.msra.mxu0 %v2833
    %3202 = vmatprep.subr.bf16.mxu0 0
    %3203 = vmatpush1.bf16.msra.mxu0 %v2834
    %3204 = vmatprep.subr.bf16.mxu0 0
    %3205 = vmatpush1.bf16.msra.mxu0 %v2835
    %3206 = vmatprep.subr.bf16.mxu0 0
    %3207 = vmatpush1.bf16.msra.mxu0 %v2836
    %3208 = vmatprep.subr.bf16.mxu0 0
    %3209 = vmatpush1.bf16.msra.mxu0 %v2837
    %3210 = vmatprep.mubr.bf16.mxu0 %v1983
    %3211 = vmatmul.mubr.bf16.gmra.mrb[0].mxu0 %v1982
    %v3212 = vpop.f32.mrb[0].mxu0
    %v3213 = vadd.f32 %v3172, %v3212
    %v3214 = vpop.f32.mrb[0].mxu0
    %v3215 = vpop.f32.mrb[0].mxu0
    %v3216 = vadd.f32 %v3175, %v3215
    %v3217 = vpop.f32.mrb[0].mxu0
    %3218 = vdwg.mxu0
    %3219 = vmatprep.subr.bf16.mxu0 0
    %3220 = vmatpush1.bf16.msra.mxu0 %v2838
    %3221 = vmatprep.subr.bf16.mxu0 0
    %3222 = vmatpush1.bf16.msra.mxu0 %v2839
    %3223 = vmatprep.subr.bf16.mxu0 0
    %3224 = vmatpush1.bf16.msra.mxu0 %v2840
    %3225 = vmatprep.subr.bf16.mxu0 0
    %3226 = vmatpush1.bf16.msra.mxu0 %v2841
    %3227 = vmatprep.subr.bf16.mxu0 0
    %3228 = vmatpush1.bf16.msra.mxu0 %v2842
    %3229 = vmatprep.subr.bf16.mxu0 0
    %3230 = vmatpush1.bf16.msra.mxu0 %v2843
    %3231 = vmatprep.subr.bf16.mxu0 0
    %3232 = vmatpush1.bf16.msra.mxu0 %v2844
    %3233 = vmatprep.subr.bf16.mxu0 0
    %3234 = vmatpush1.bf16.msra.mxu0 %v2845
    %3235 = vmatprep.subr.bf16.mxu0 0
    %3236 = vmatpush1.bf16.msra.mxu0 %v2846
    %3237 = vmatprep.subr.bf16.mxu0 0
    %3238 = vmatpush1.bf16.msra.mxu0 %v2847
    %3239 = vmatprep.subr.bf16.mxu0 0
    %3240 = vmatpush1.bf16.msra.mxu0 %v2848
    %3241 = vmatprep.subr.bf16.mxu0 0
    %3242 = vmatpush1.bf16.msra.mxu0 %v2849
    %3243 = vmatprep.subr.bf16.mxu0 0
    %3244 = vmatpush1.bf16.msra.mxu0 %v2850
    %3245 = vmatprep.subr.bf16.mxu0 0
    %3246 = vmatpush1.bf16.msra.mxu0 %v2851
    %3247 = vmatprep.subr.bf16.mxu0 0
    %3248 = vmatpush1.bf16.msra.mxu0 %v2852
    %3249 = vmatprep.subr.bf16.mxu0 0
    %3250 = vmatpush1.bf16.msra.mxu0 %v2853
    %3251 = vmatprep.mubr.bf16.mxu0 %v1985
    %3252 = vmatmul.mubr.bf16.gmra.mrb[0].mxu0 %v1984
    %v3253 = vpop.f32.mrb[0].mxu0
    %v3254 = vadd.f32 %v3213, %v3253
    %v3255 = vpop.f32.mrb[0].mxu0
    %v3256 = vpop.f32.mrb[0].mxu0
    %v3257 = vadd.f32 %v3216, %v3256
    %v3258 = vpop.f32.mrb[0].mxu0
    %3259 = vdwg.mxu0
    %3260 = vmatprep.subr.bf16.mxu0 0
    %3261 = vmatpush1.bf16.msra.mxu0 %v2854
    %3262 = vmatprep.subr.bf16.mxu0 0
    %3263 = vmatpush1.bf16.msra.mxu0 %v2855
    %3264 = vmatprep.subr.bf16.mxu0 0
    %3265 = vmatpush1.bf16.msra.mxu0 %v2856
    %3266 = vmatprep.subr.bf16.mxu0 0
    %3267 = vmatpush1.bf16.msra.mxu0 %v2857
    %3268 = vmatprep.subr.bf16.mxu0 0
    %3269 = vmatpush1.bf16.msra.mxu0 %v2858
    %3270 = vmatprep.subr.bf16.mxu0 0
    %3271 = vmatpush1.bf16.msra.mxu0 %v2859
    %3272 = vmatprep.subr.bf16.mxu0 0
    %3273 = vmatpush1.bf16.msra.mxu0 %v2860
    %3274 = vmatprep.subr.bf16.mxu0 0
    %3275 = vmatpush1.bf16.msra.mxu0 %v2861
    %3276 = vmatprep.subr.bf16.mxu0 0
    %3277 = vmatpush1.bf16.msra.mxu0 %v2862
    %3278 = vmatprep.subr.bf16.mxu0 0
    %3279 = vmatpush1.bf16.msra.mxu0 %v2863
    %3280 = vmatprep.subr.bf16.mxu0 0
    %3281 = vmatpush1.bf16.msra.mxu0 %v2864
    %3282 = vmatprep.subr.bf16.mxu0 0
    %3283 = vmatpush1.bf16.msra.mxu0 %v2865
    %3284 = vmatprep.subr.bf16.mxu0 0
    %3285 = vmatpush1.bf16.msra.mxu0 %v2866
    %3286 = vmatprep.subr.bf16.mxu0 0
    %3287 = vmatpush1.bf16.msra.mxu0 %v2867
    %3288 = vmatprep.subr.bf16.mxu0 0
    %3289 = vmatpush1.bf16.msra.mxu0 %v2868
    %3290 = vmatprep.subr.bf16.mxu0 0
    %3291 = vmatpush1.bf16.msra.mxu0 %v2869
    %3292 = vmatprep.mubr.bf16.mxu0 %v1987
    %3293 = vmatmul.mubr.bf16.gmra.mrb[0].mxu0 %v1986
    %v3294 = vpop.f32.mrb[0].mxu0
    %v3295 = vadd.f32 %v3254, %v3294
    %v3296 = vpop.f32.mrb[0].mxu0
    %v3297 = vpop.f32.mrb[0].mxu0
    %v3298 = vadd.f32 %v3257, %v3297
    %v3299 = vpop.f32.mrb[0].mxu0
    %3300 = vdwg.mxu0
    %3301 = vmatprep.subr.bf16.mxu0 0
    %3302 = vmatpush1.bf16.msra.mxu0 %v2870
    %3303 = vmatprep.subr.bf16.mxu0 0
    %3304 = vmatpush1.bf16.msra.mxu0 %v2871
    %3305 = vmatprep.subr.bf16.mxu0 0
    %3306 = vmatpush1.bf16.msra.mxu0 %v2872
    %3307 = vmatprep.subr.bf16.mxu0 0
    %3308 = vmatpush1.bf16.msra.mxu0 %v2873
    %3309 = vmatprep.subr.bf16.mxu0 0
    %3310 = vmatpush1.bf16.msra.mxu0 %v2874
    %3311 = vmatprep.subr.bf16.mxu0 0
    %3312 = vmatpush1.bf16.msra.mxu0 %v2875
    %3313 = vmatprep.subr.bf16.mxu0 0
    %3314 = vmatpush1.bf16.msra.mxu0 %v2876
    %3315 = vmatprep.subr.bf16.mxu0 0
    %3316 = vmatpush1.bf16.msra.mxu0 %v2877
    %3317 = vmatprep.subr.bf16.mxu0 0
    %3318 = vmatpush1.bf16.msra.mxu0 %v2878
    %3319 = vmatprep.subr.bf16.mxu0 0
    %3320 = vmatpush1.bf16.msra.mxu0 %v2879
    %3321 = vmatprep.subr.bf16.mxu0 0
    %3322 = vmatpush1.bf16.msra.mxu0 %v2880
    %3323 = vmatprep.subr.bf16.mxu0 0
    %3324 = vmatpush1.bf16.msra.mxu0 %v2881
    %3325 = vmatprep.subr.bf16.mxu0 0
    %3326 = vmatpush1.bf16.msra.mxu0 %v2882
    %3327 = vmatprep.subr.bf16.mxu0 0
    %3328 = vmatpush1.bf16.msra.mxu0 %v2883
    %3329 = vmatprep.subr.bf16.mxu0 0
    %3330 = vmatpush1.bf16.msra.mxu0 %v2884
    %3331 = vmatprep.subr.bf16.mxu0 0
    %3332 = vmatpush1.bf16.msra.mxu0 %v2885
    %3333 = vmatprep.mubr.bf16.mxu0 %v1989
    %3334 = vmatmul.mubr.bf16.gmra.mrb[0].mxu0 %v1988
    %v3335 = vpop.f32.mrb[0].mxu0
    %v3336 = vadd.f32 %v3295, %v3335
    %v3337 = vpop.f32.mrb[0].mxu0
    %v3338 = vpop.f32.mrb[0].mxu0
    %v3339 = vadd.f32 %v3298, %v3338
    %v3340 = vpop.f32.mrb[0].mxu0
    %3341 = vdwg.mxu0
    %v3342 = vadd.f32 %v1258, %v3336
    %v3343 = vadd.f32 %v1259, %v3339
    %v3344 = vld [vmem:[%s23] sm:$0x1]
    %v3346 = vlaneseq
    %v3347 = vshrl.u32 %v3346, 7
    %v3348 = vsub.s32 0, %v3347
    %v3349 = vrot.slane %v3344, %v3348
    %v3351 = vadd.f32 %v3342, %v3349
    %v3352 = vadd.f32 %v3343, %v3349
    %v3353 = vsel %vm111, %v3351, 0.0
    %3354 = vadd.xlane.f32.xlu0 %v3353
    %v3355 = vpop.xlane.xlu0 %3354
    %v3356 = vsel %vm111, %v3352, 0.0
    %3357 = vadd.xlane.f32.xlu0 %v3356
    %v3358 = vpop.xlane.xlu0 %3357
    %v3359 = vmul.f32 %v3355, %v184
    %v3360 = vmul.f32 %v3358, %v184
    %v3361 = vsub.f32 %v3351, %v3359
    %v3362 = vsub.f32 %v3352, %v3360
    %v3363 = vmul.f32 %v3361, %v3361
    %v3364 = vmul.f32 %v3362, %v3362
    %v3365 = vsel %vm111, %v3363, 0.0
    %3366 = vadd.xlane.f32.xlu0 %v3365
    %v3367 = vpop.xlane.xlu0 %3366
    %v3368 = vsel %vm111, %v3364, 0.0
    %3369 = vadd.xlane.f32.xlu0 %v3368
    %v3370 = vpop.xlane.xlu0 %3369
    %v3371 = vmul.f32 %v3367, %v197
    %v3372 = vmul.f32 %v3370, %v197
    %v3373 = vmul.f32 %v205, %v3361
    %v3374 = vmul.f32 %v205, %v3362
    %v3375 = vrsqrt.pop %v3371
    %v3376 = vmul.f32 %v3371, %v3375
    %vm3377 = vcmp.eq.f32.partialorder %v3371, inf
    %v3378 = vsel %vm3377, %v3371, %v3376
    %vm3379 = vcmp.eq.f32.partialorder %v3371, 0.0
    %v3380 = vand.u32 %v3371, 2147483648
    %v3381 = vsel %vm3379, %v3380, %v3378
    %v3382 = vrsqrt.pop %v3372
    %v3383 = vmul.f32 %v3372, %v3382
    %vm3384 = vcmp.eq.f32.partialorder %v3372, inf
    %v3385 = vsel %vm3384, %v3372, %v3383
    %vm3386 = vcmp.eq.f32.partialorder %v3372, 0.0
    %v3387 = vand.u32 %v3372, 2147483648
    %v3388 = vsel %vm3386, %v3387, %v3385
    %v3389 = vadd.f32 %v3381, 1e-07
    %v3390 = vadd.f32 %v3388, 1e-07
    %v3391 = vrcp.pop %v3389
    %v3392 = vmul.f32 %v3373, %v3391
    %v3393 = vrcp.pop %v3390
    %v3394 = vmul.f32 %v3374, %v3393
    %v3395 = vadd.f32 %v3392, %v234
    %v3396 = vadd.f32 %v3394, %v234
    %v3397 = vpack.c.bf16 %v3396, %v3395
    %v3399 = vsel %vm111, %v3397, 0
    %3401 = vmatprep.subr.bf16.mxu0 0
    %3402 = vmatpush1.bf16.msra.mxu0 %v258
    %3403 = vmatprep.subr.bf16.mxu0 0
    %3404 = vmatpush1.bf16.msra.mxu0 %v259
    %3405 = vmatprep.subr.bf16.mxu0 0
    %3406 = vmatpush1.bf16.msra.mxu0 0
    %3407 = vmatprep.subr.bf16.mxu0 0
    %3408 = vmatpush1.bf16.msra.mxu0 0
    %3409 = vmatprep.subr.bf16.mxu0 0
    %3410 = vmatpush1.bf16.msra.mxu0 0
    %3411 = vmatprep.subr.bf16.mxu0 0
    %3412 = vmatpush1.bf16.msra.mxu0 0
    %3413 = vmatprep.subr.bf16.mxu0 0
    %3414 = vmatpush1.bf16.msra.mxu0 0
    %3415 = vmatprep.subr.bf16.mxu0 0
    %3416 = vmatpush1.bf16.msra.mxu0 0
    %3417 = vmatprep.subr.bf16.mxu0 0
    %3418 = vmatpush1.bf16.msra.mxu0 0
    %3419 = vmatprep.subr.bf16.mxu0 0
    %3420 = vmatpush1.bf16.msra.mxu0 0
    %3421 = vmatprep.subr.bf16.mxu0 0
    %3422 = vmatpush1.bf16.msra.mxu0 0
    %3423 = vmatprep.subr.bf16.mxu0 0
    %3424 = vmatpush1.bf16.msra.mxu0 0
    %3425 = vmatprep.subr.bf16.mxu0 0
    %3426 = vmatpush1.bf16.msra.mxu0 0
    %3427 = vmatprep.subr.bf16.mxu0 0
    %3428 = vmatpush1.bf16.msra.mxu0 0
    %3429 = vmatprep.subr.bf16.mxu0 0
    %3430 = vmatpush1.bf16.msra.mxu0 0
    %3431 = vmatprep.subr.bf16.mxu0 0
    %3432 = vmatpush1.bf16.msra.mxu0 0
    %3433 = vmatprep.mubr.bf16.mxu0 0
    %3434 = vmatmul.mubr.bf16.gmra.mrb[0].mxu0 %v3399
    %v3435 = vpop.f32.mrb[0].mxu0
    %v3436 = vadd.f32 %v248, %v3435
    %v3437 = vpop.f32.mrb[0].mxu0
    %v3438 = vpop.f32.mrb[0].mxu0
    %v3439 = vadd.f32 %v248, %v3438
    %v3440 = vpop.f32.mrb[0].mxu0
    %3441 = vdwg.mxu0
    %3444 = vrot.lane.b32.xlu0 %v3436, 120
    %v3445 = vpop.permute.xlu0 %3444
    %3446 = vrot.lane.b32.xlu0 %v3439, 120
    %v3447 = vpop.permute.xlu0 %3446
    %3450 = vrot.lane.b32.xlu0 %v3436, 112
    %v3451 = vpop.permute.xlu0 %3450
    %3452 = vrot.lane.b32.xlu0 %v3439, 112
    %v3453 = vpop.permute.xlu0 %3452
    %3456 = vrot.lane.b32.xlu0 %v3436, 104
    %v3457 = vpop.permute.xlu0 %3456
    %3458 = vrot.lane.b32.xlu0 %v3439, 104
    %v3459 = vpop.permute.xlu0 %3458
    %v3462 = vpack.c.bf16 %v3439, %v3436
    %v3463 = vpack.c.bf16 %v3447, %v3445
    %v3464 = vpack.c.bf16 %v3453, %v3451
    %v3465 = vpack.c.bf16 %v3459, %v3457
    %3470 = vrot.lane.b32.xlu0 %v3462, 96
    %v3471 = vpop.permute.xlu0 %3470
    %3472 = vrot.lane.b32.xlu0 %v3463, 96
    %v3473 = vpop.permute.xlu0 %3472
    %3474 = vrot.lane.b32.xlu0 %v3464, 96
    %v3475 = vpop.permute.xlu0 %3474
    %3476 = vrot.lane.b32.xlu0 %v3465, 96
    %v3477 = vpop.permute.xlu0 %3476
    %v3479 = vsel %vm350, %v3462, 0
    %v3482 = vsel %vm350, %v3463, 0
    %v3485 = vsel %vm350, %v3464, 0
    %v3488 = vsel %vm350, %v3465, 0
    %v3491 = vsel %vm350, %v3471, 0
    %v3494 = vsel %vm350, %v3473, 0
    %v3497 = vsel %vm350, %v3475, 0
    %v3500 = vsel %vm350, %v3477, 0
    %3502 = vmatprep.subr.bf16.mxu0 0
    %3503 = vmatpush1.bf16.xpose.msra.mxu0 %v3491
    %3504 = vmatprep.subr.bf16.mxu0 0
    %3505 = vmatpush1.bf16.xpose.msra.mxu0 %v3494
    %3506 = vmatprep.subr.bf16.mxu0 0
    %3507 = vmatpush1.bf16.xpose.msra.mxu0 %v3497
    %3508 = vmatprep.subr.bf16.mxu0 0
    %3509 = vmatpush1.bf16.xpose.msra.mxu0 %v3500
    %3510 = vmatprep.subr.bf16.mxu0 0
    %3511 = vmatpush1.bf16.xpose.msra.mxu0 0
    %3512 = vmatprep.subr.bf16.mxu0 0
    %3513 = vmatpush1.bf16.xpose.msra.mxu0 0
    %3514 = vmatprep.subr.bf16.mxu0 0
    %3515 = vmatpush1.bf16.xpose.msra.mxu0 0
    %3516 = vmatprep.subr.bf16.mxu0 0
    %3517 = vmatpush1.bf16.xpose.msra.mxu0 0
    %3518 = vmatprep.subr.bf16.mxu0 0
    %3519 = vmatpush1.bf16.xpose.msra.mxu0 0
    %3520 = vmatprep.subr.bf16.mxu0 0
    %3521 = vmatpush1.bf16.xpose.msra.mxu0 0
    %3522 = vmatprep.subr.bf16.mxu0 0
    %3523 = vmatpush1.bf16.xpose.msra.mxu0 0
    %3524 = vmatprep.subr.bf16.mxu0 0
    %3525 = vmatpush1.bf16.xpose.msra.mxu0 0
    %3526 = vmatprep.subr.bf16.mxu0 0
    %3527 = vmatpush1.bf16.xpose.msra.mxu0 0
    %3528 = vmatprep.subr.bf16.mxu0 0
    %3529 = vmatpush1.bf16.xpose.msra.mxu0 0
    %3530 = vmatprep.subr.bf16.mxu0 0
    %3531 = vmatpush1.bf16.xpose.msra.mxu0 0
    %3532 = vmatprep.subr.bf16.mxu0 0
    %3533 = vmatpush1.bf16.xpose.msra.mxu0 0
    %3534 = vmatprep.mubr.bf16.mxu0 0
    %3535 = vmatmul.mubr.bf16.gmra.mrb[0].mxu0 %v3479
    %v3536 = vpop.f32.mrb[0].mxu0
    %v3537 = vadd.f32 %v330, %v3536
    %v3538 = vpop.f32.mrb[0].mxu0
    %v3539 = vpop.f32.mrb[0].mxu0
    %v3540 = vadd.f32 %v331, %v3539
    %v3541 = vpop.f32.mrb[0].mxu0
    %3542 = vmatprep.mubr.bf16.mxu0 0
    %3543 = vmatmul.mubr.bf16.gmra.mrb[0].mxu0 %v3482
    %v3544 = vpop.f32.mrb[0].mxu0
    %v3545 = vadd.f32 %v332, %v3544
    %v3546 = vpop.f32.mrb[0].mxu0
    %v3547 = vpop.f32.mrb[0].mxu0
    %v3548 = vadd.f32 %v333, %v3547
    %v3549 = vpop.f32.mrb[0].mxu0
    %3550 = vmatprep.mubr.bf16.mxu0 0
    %3551 = vmatmul.mubr.bf16.gmra.mrb[0].mxu0 %v3485
    %v3552 = vpop.f32.mrb[0].mxu0
    %v3553 = vadd.f32 %v334, %v3552
    %v3554 = vpop.f32.mrb[0].mxu0
    %v3555 = vpop.f32.mrb[0].mxu0
    %v3556 = vadd.f32 %v335, %v3555
    %v3557 = vpop.f32.mrb[0].mxu0
    %3558 = vmatprep.mubr.bf16.mxu0 0
    %3559 = vmatmul.mubr.bf16.gmra.mrb[0].mxu0 %v3488
    %v3560 = vpop.f32.mrb[0].mxu0
    %v3561 = vadd.f32 %v336, %v3560
    %v3562 = vpop.f32.mrb[0].mxu0
    %v3563 = vpop.f32.mrb[0].mxu0
    %v3564 = vadd.f32 %v337, %v3563
    %v3565 = vpop.f32.mrb[0].mxu0
    %3566 = vdwg.mxu0
    %v3567 = vsel %vm440, %v3537, -inf
    %3568 = vmax.xlane.f32.xlu0 %v3567
    %v3569 = vpop.xlane.xlu0 %3568
    %v3570 = vsel %vm440, %v3540, -inf
    %3571 = vmax.xlane.f32.xlu0 %v3570
    %v3572 = vpop.xlane.xlu0 %3571
    %v3573 = vsel %vm440, %v3545, -inf
    %3574 = vmax.xlane.f32.xlu0 %v3573
    %v3575 = vpop.xlane.xlu0 %3574
    %v3576 = vsel %vm440, %v3548, -inf
    %3577 = vmax.xlane.f32.xlu0 %v3576
    %v3578 = vpop.xlane.xlu0 %3577
    %v3579 = vsel %vm440, %v3553, -inf
    %3580 = vmax.xlane.f32.xlu0 %v3579
    %v3581 = vpop.xlane.xlu0 %3580
    %v3582 = vsel %vm440, %v3556, -inf
    %3583 = vmax.xlane.f32.xlu0 %v3582
    %v3584 = vpop.xlane.xlu0 %3583
    %v3585 = vsel %vm440, %v3561, -inf
    %3586 = vmax.xlane.f32.xlu0 %v3585
    %v3587 = vpop.xlane.xlu0 %3586
    %v3588 = vsel %vm440, %v3564, -inf
    %3589 = vmax.xlane.f32.xlu0 %v3588
    %v3590 = vpop.xlane.xlu0 %3589
    %v3591 = vsub.f32 %v3537, %v3569
    %v3592 = vsub.f32 %v3540, %v3572
    %v3593 = vsub.f32 %v3545, %v3575
    %v3594 = vsub.f32 %v3548, %v3578
    %v3595 = vsub.f32 %v3553, %v3581
    %v3596 = vsub.f32 %v3556, %v3584
    %v3597 = vsub.f32 %v3561, %v3587
    %v3598 = vsub.f32 %v3564, %v3590
    %v3599 = vmul.f32 %v3591, 1.442695
    %v3600 = vpow.pop %v3599
    %v3601 = vmul.f32 %v3592, 1.442695
    %v3602 = vpow.pop %v3601
    %v3603 = vmul.f32 %v3593, 1.442695
    %v3604 = vpow.pop %v3603
    %v3605 = vmul.f32 %v3594, 1.442695
    %v3606 = vpow.pop %v3605
    %v3607 = vmul.f32 %v3595, 1.442695
    %v3608 = vpow.pop %v3607
    %v3609 = vmul.f32 %v3596, 1.442695
    %v3610 = vpow.pop %v3609
    %v3611 = vmul.f32 %v3597, 1.442695
    %v3612 = vpow.pop %v3611
    %v3613 = vmul.f32 %v3598, 1.442695
    %v3614 = vpow.pop %v3613
    %v3615 = vsel %vm440, %v3600, 0.0
    %3616 = vadd.xlane.f32.xlu0 %v3615
    %v3617 = vpop.xlane.xlu0 %3616
    %v3618 = vsel %vm440, %v3602, 0.0
    %3619 = vadd.xlane.f32.xlu0 %v3618
    %v3620 = vpop.xlane.xlu0 %3619
    %v3621 = vsel %vm440, %v3604, 0.0
    %3622 = vadd.xlane.f32.xlu0 %v3621
    %v3623 = vpop.xlane.xlu0 %3622
    %v3624 = vsel %vm440, %v3606, 0.0
    %3625 = vadd.xlane.f32.xlu0 %v3624
    %v3626 = vpop.xlane.xlu0 %3625
    %v3627 = vsel %vm440, %v3608, 0.0
    %3628 = vadd.xlane.f32.xlu0 %v3627
    %v3629 = vpop.xlane.xlu0 %3628
    %v3630 = vsel %vm440, %v3610, 0.0
    %3631 = vadd.xlane.f32.xlu0 %v3630
    %v3632 = vpop.xlane.xlu0 %3631
    %v3633 = vsel %vm440, %v3612, 0.0
    %3634 = vadd.xlane.f32.xlu0 %v3633
    %v3635 = vpop.xlane.xlu0 %3634
    %v3636 = vsel %vm440, %v3614, 0.0
    %3637 = vadd.xlane.f32.xlu0 %v3636
    %v3638 = vpop.xlane.xlu0 %3637
    %v3639 = vrcp.pop %v3617
    %v3640 = vrcp.pop %v3620
    %v3641 = vrcp.pop %v3623
    %v3642 = vrcp.pop %v3626
    %v3643 = vrcp.pop %v3629
    %v3644 = vrcp.pop %v3632
    %v3645 = vrcp.pop %v3635
    %v3646 = vrcp.pop %v3638
    %v3647 = vmul.f32 %v3600, %v3639
    %v3648 = vmul.f32 %v3602, %v3640
    %v3649 = vmul.f32 %v3604, %v3641
    %v3650 = vmul.f32 %v3606, %v3642
    %v3651 = vmul.f32 %v3608, %v3643
    %v3652 = vmul.f32 %v3610, %v3644
    %v3653 = vmul.f32 %v3612, %v3645
    %v3654 = vmul.f32 %v3614, %v3646
    %v3655 = vpack.c.bf16 %v3648, %v3647
    %v3656 = vpack.c.bf16 %v3650, %v3649
    %v3657 = vpack.c.bf16 %v3652, %v3651
    %v3658 = vpack.c.bf16 %v3654, %v3653
    %3659 = vrot.lane.b32.xlu0 %v3462, 64
    %v3660 = vpop.permute.xlu0 %3659
    %3661 = vrot.lane.b32.xlu0 %v3463, 64
    %v3662 = vpop.permute.xlu0 %3661
    %3663 = vrot.lane.b32.xlu0 %v3464, 64
    %v3664 = vpop.permute.xlu0 %3663
    %3665 = vrot.lane.b32.xlu0 %v3465, 64
    %v3666 = vpop.permute.xlu0 %3665
    %v3672 = vsel %vm440, %v3655, 0
    %v3675 = vsel %vm440, %v3656, 0
    %v3678 = vsel %vm440, %v3657, 0
    %v3681 = vsel %vm440, %v3658, 0
    %3683 = vmatprep.subr.bf16.mxu0 0
    %3684 = vmatpush1.bf16.msra.mxu0 %v3660
    %3685 = vmatprep.subr.bf16.mxu0 0
    %3686 = vmatpush1.bf16.msra.mxu0 %v3662
    %3687 = vmatprep.subr.bf16.mxu0 0
    %3688 = vmatpush1.bf16.msra.mxu0 %v3664
    %3689 = vmatprep.subr.bf16.mxu0 0
    %3690 = vmatpush1.bf16.msra.mxu0 %v3666
    %3691 = vmatprep.subr.bf16.mxu0 0
    %3692 = vmatpush1.bf16.msra.mxu0 0
    %3693 = vmatprep.subr.bf16.mxu0 0
    %3694 = vmatpush1.bf16.msra.mxu0 0
    %3695 = vmatprep.subr.bf16.mxu0 0
    %3696 = vmatpush1.bf16.msra.mxu0 0
    %3697 = vmatprep.subr.bf16.mxu0 0
    %3698 = vmatpush1.bf16.msra.mxu0 0
    %3699 = vmatprep.subr.bf16.mxu0 0
    %3700 = vmatpush1.bf16.msra.mxu0 0
    %3701 = vmatprep.subr.bf16.mxu0 0
    %3702 = vmatpush1.bf16.msra.mxu0 0
    %3703 = vmatprep.subr.bf16.mxu0 0
    %3704 = vmatpush1.bf16.msra.mxu0 0
    %3705 = vmatprep.subr.bf16.mxu0 0
    %3706 = vmatpush1.bf16.msra.mxu0 0
    %3707 = vmatprep.subr.bf16.mxu0 0
    %3708 = vmatpush1.bf16.msra.mxu0 0
    %3709 = vmatprep.subr.bf16.mxu0 0
    %3710 = vmatpush1.bf16.msra.mxu0 0
    %3711 = vmatprep.subr.bf16.mxu0 0
    %3712 = vmatpush1.bf16.msra.mxu0 0
    %3713 = vmatprep.subr.bf16.mxu0 0
    %3714 = vmatpush1.bf16.msra.mxu0 0
    %3715 = vmatprep.mubr.bf16.mxu0 0
    %3716 = vmatmul.mubr.bf16.gmra.mrb[0].mxu0 %v3672
    %v3717 = vpop.f32.mrb[0].mxu0
    %v3718 = vadd.f32 0.0, %v3717
    %v3719 = vpop.f32.mrb[0].mxu0
    %v3720 = vpop.f32.mrb[0].mxu0
    %v3721 = vadd.f32 0.0, %v3720
    %v3722 = vpop.f32.mrb[0].mxu0
    %3723 = vmatprep.mubr.bf16.mxu0 0
    %3724 = vmatmul.mubr.bf16.gmra.mrb[0].mxu0 %v3675
    %v3725 = vpop.f32.mrb[0].mxu0
    %v3726 = vadd.f32 0.0, %v3725
    %v3727 = vpop.f32.mrb[0].mxu0
    %v3728 = vpop.f32.mrb[0].mxu0
    %v3729 = vadd.f32 0.0, %v3728
    %v3730 = vpop.f32.mrb[0].mxu0
    %3731 = vmatprep.mubr.bf16.mxu0 0
    %3732 = vmatmul.mubr.bf16.gmra.mrb[0].mxu0 %v3678
    %v3733 = vpop.f32.mrb[0].mxu0
    %v3734 = vadd.f32 0.0, %v3733
    %v3735 = vpop.f32.mrb[0].mxu0
    %v3736 = vpop.f32.mrb[0].mxu0
    %v3737 = vadd.f32 0.0, %v3736
    %v3738 = vpop.f32.mrb[0].mxu0
    %3739 = vmatprep.mubr.bf16.mxu0 0
    %3740 = vmatmul.mubr.bf16.gmra.mrb[0].mxu0 %v3681
    %v3741 = vpop.f32.mrb[0].mxu0
    %v3742 = vadd.f32 0.0, %v3741
    %v3743 = vpop.f32.mrb[0].mxu0
    %v3744 = vpop.f32.mrb[0].mxu0
    %v3745 = vadd.f32 0.0, %v3744
    %v3746 = vpop.f32.mrb[0].mxu0
    %3747 = vdwg.mxu0
    %3750 = vrot.lane.b32.xlu0 %v3726, 8
    %v3751 = vpop.permute.xlu0 %3750
    %3752 = vrot.lane.b32.xlu0 %v3729, 8
    %v3753 = vpop.permute.xlu0 %3752
    %3758 = vrot.lane.b32.xlu0 %v3734, 16
    %v3759 = vpop.permute.xlu0 %3758
    %3760 = vrot.lane.b32.xlu0 %v3737, 16
    %v3761 = vpop.permute.xlu0 %3760
    %3766 = vrot.lane.b32.xlu0 %v3742, 24
    %v3767 = vpop.permute.xlu0 %3766
    %3768 = vrot.lane.b32.xlu0 %v3745, 24
    %v3769 = vpop.permute.xlu0 %3768
    %v3772 = vsel %vm350, %v3718, %v3751
    %v3773 = vsel %vm350, %v3721, %v3753
    %v3774 = vsel %vm648, %v3772, %v3759
    %v3775 = vsel %vm648, %v3773, %v3761
    %v3776 = vsel %vm651, %v3774, %v3767
    %v3777 = vsel %vm651, %v3775, %v3769
    %v3778 = vpack.c.bf16 %v3777, %v3776
    %v3780 = vsel %vm111, %v3778, 0
    %3782 = vmatprep.subr.bf16.mxu0 0
    %3783 = vmatpush1.bf16.msra.mxu0 %v674
    %3784 = vmatprep.subr.bf16.mxu0 0
    %3785 = vmatpush1.bf16.msra.mxu0 %v675
    %3786 = vmatprep.subr.bf16.mxu0 0
    %3787 = vmatpush1.bf16.msra.mxu0 0
    %3788 = vmatprep.subr.bf16.mxu0 0
    %3789 = vmatpush1.bf16.msra.mxu0 0
    %3790 = vmatprep.subr.bf16.mxu0 0
    %3791 = vmatpush1.bf16.msra.mxu0 0
    %3792 = vmatprep.subr.bf16.mxu0 0
    %3793 = vmatpush1.bf16.msra.mxu0 0
    %3794 = vmatprep.subr.bf16.mxu0 0
    %3795 = vmatpush1.bf16.msra.mxu0 0
    %3796 = vmatprep.subr.bf16.mxu0 0
    %3797 = vmatpush1.bf16.msra.mxu0 0
    %3798 = vmatprep.subr.bf16.mxu0 0
    %3799 = vmatpush1.bf16.msra.mxu0 0
    %3800 = vmatprep.subr.bf16.mxu0 0
    %3801 = vmatpush1.bf16.msra.mxu0 0
    %3802 = vmatprep.subr.bf16.mxu0 0
    %3803 = vmatpush1.bf16.msra.mxu0 0
    %3804 = vmatprep.subr.bf16.mxu0 0
    %3805 = vmatpush1.bf16.msra.mxu0 0
    %3806 = vmatprep.subr.bf16.mxu0 0
    %3807 = vmatpush1.bf16.msra.mxu0 0
    %3808 = vmatprep.subr.bf16.mxu0 0
    %3809 = vmatpush1.bf16.msra.mxu0 0
    %3810 = vmatprep.subr.bf16.mxu0 0
    %3811 = vmatpush1.bf16.msra.mxu0 0
    %3812 = vmatprep.subr.bf16.mxu0 0
    %3813 = vmatpush1.bf16.msra.mxu0 0
    %3814 = vmatprep.mubr.bf16.mxu0 0
    %3815 = vmatmul.mubr.bf16.gmra.mrb[0].mxu0 %v3780
    %v3816 = vpop.f32.mrb[0].mxu0
    %v3817 = vadd.f32 %v664, %v3816
    %v3818 = vpop.f32.mrb[0].mxu0
    %v3819 = vpop.f32.mrb[0].mxu0
    %v3820 = vadd.f32 %v664, %v3819
    %v3821 = vpop.f32.mrb[0].mxu0
    %3822 = vdwg.mxu0
    %v3823 = vadd.f32 %v3351, %v3817
    %v3824 = vadd.f32 %v3352, %v3820
    %v3825 = vsel %vm111, %v3823, 0.0
    %3826 = vadd.xlane.f32.xlu0 %v3825
    %v3827 = vpop.xlane.xlu0 %3826
    %v3828 = vsel %vm111, %v3824, 0.0
    %3829 = vadd.xlane.f32.xlu0 %v3828
    %v3830 = vpop.xlane.xlu0 %3829
    %v3831 = vmul.f32 %v3827, %v184
    %v3832 = vmul.f32 %v3830, %v184
    %v3833 = vsub.f32 %v3823, %v3831
    %v3834 = vsub.f32 %v3824, %v3832
    %v3835 = vmul.f32 %v3833, %v3833
    %v3836 = vmul.f32 %v3834, %v3834
    %v3837 = vsel %vm111, %v3835, 0.0
    %3838 = vadd.xlane.f32.xlu0 %v3837
    %v3839 = vpop.xlane.xlu0 %3838
    %v3840 = vsel %vm111, %v3836, 0.0
    %3841 = vadd.xlane.f32.xlu0 %v3840
    %v3842 = vpop.xlane.xlu0 %3841
    %v3843 = vmul.f32 %v3839, %v197
    %v3844 = vmul.f32 %v3842, %v197
    %v3845 = vmul.f32 %v749, %v3833
    %v3846 = vmul.f32 %v749, %v3834
    %v3847 = vrsqrt.pop %v3843
    %v3848 = vmul.f32 %v3843, %v3847
    %vm3849 = vcmp.eq.f32.partialorder %v3843, inf
    %v3850 = vsel %vm3849, %v3843, %v3848
    %vm3851 = vcmp.eq.f32.partialorder %v3843, 0.0
    %v3852 = vand.u32 %v3843, 2147483648
    %v3853 = vsel %vm3851, %v3852, %v3850
    %v3854 = vrsqrt.pop %v3844
    %v3855 = vmul.f32 %v3844, %v3854
    %vm3856 = vcmp.eq.f32.partialorder %v3844, inf
    %v3857 = vsel %vm3856, %v3844, %v3855
    %vm3858 = vcmp.eq.f32.partialorder %v3844, 0.0
    %v3859 = vand.u32 %v3844, 2147483648
    %v3860 = vsel %vm3858, %v3859, %v3857
    %v3861 = vadd.f32 %v3853, 1e-07
    %v3862 = vadd.f32 %v3860, 1e-07
    %v3863 = vrcp.pop %v3861
    %v3864 = vmul.f32 %v3845, %v3863
    %v3865 = vrcp.pop %v3862
    %v3866 = vmul.f32 %v3846, %v3865
    %v3867 = vadd.f32 %v3864, %v778
    %v3868 = vadd.f32 %v3866, %v778
    %v3869 = vpack.c.bf16 %v3868, %v3867
    %v3871 = vsel %vm111, %v3869, 0
    %3873 = vmatprep.subr.bf16.mxu0 0
    %3874 = vmatpush1.bf16.msra.mxu0 %v802
    %3875 = vmatprep.subr.bf16.mxu0 0
    %3876 = vmatpush1.bf16.msra.mxu0 %v803
    %3877 = vmatprep.subr.bf16.mxu0 0
    %3878 = vmatpush1.bf16.msra.mxu0 0
    %3879 = vmatprep.subr.bf16.mxu0 0
    %3880 = vmatpush1.bf16.msra.mxu0 0
    %3881 = vmatprep.subr.bf16.mxu0 0
    %3882 = vmatpush1.bf16.msra.mxu0 0
    %3883 = vmatprep.subr.bf16.mxu0 0
    %3884 = vmatpush1.bf16.msra.mxu0 0
    %3885 = vmatprep.subr.bf16.mxu0 0
    %3886 = vmatpush1.bf16.msra.mxu0 0
    %3887 = vmatprep.subr.bf16.mxu0 0
    %3888 = vmatpush1.bf16.msra.mxu0 0
    %3889 = vmatprep.subr.bf16.mxu0 0
    %3890 = vmatpush1.bf16.msra.mxu0 0
    %3891 = vmatprep.subr.bf16.mxu0 0
    %3892 = vmatpush1.bf16.msra.mxu0 0
    %3893 = vmatprep.subr.bf16.mxu0 0
    %3894 = vmatpush1.bf16.msra.mxu0 0
    %3895 = vmatprep.subr.bf16.mxu0 0
    %3896 = vmatpush1.bf16.msra.mxu0 0
    %3897 = vmatprep.subr.bf16.mxu0 0
    %3898 = vmatpush1.bf16.msra.mxu0 0
    %3899 = vmatprep.subr.bf16.mxu0 0
    %3900 = vmatpush1.bf16.msra.mxu0 0
    %3901 = vmatprep.subr.bf16.mxu0 0
    %3902 = vmatpush1.bf16.msra.mxu0 0
    %3903 = vmatprep.subr.bf16.mxu0 0
    %3904 = vmatpush1.bf16.msra.mxu0 0
    %3905 = vmatprep.mubr.bf16.mxu0 0
    %3906 = vmatmul.mubr.bf16.gmra.mrb[0].mxu0 %v3871
    %v3907 = vpop.f32.mrb[0].mxu0
    %v3908 = vadd.f32 %v792, %v3907
    %v3909 = vpop.f32.mrb[0].mxu0
    %v3910 = vpop.f32.mrb[0].mxu0
    %v3911 = vadd.f32 %v792, %v3910
    %v3912 = vpop.f32.mrb[0].mxu0
    %3913 = vdwg.mxu0
    %3916 = vrot.lane.b32.xlu0 %v3908, 120
    %v3917 = vpop.permute.xlu0 %3916
    %3918 = vrot.lane.b32.xlu0 %v3911, 120
    %v3919 = vpop.permute.xlu0 %3918
    %3922 = vrot.lane.b32.xlu0 %v3908, 112
    %v3923 = vpop.permute.xlu0 %3922
    %3924 = vrot.lane.b32.xlu0 %v3911, 112
    %v3925 = vpop.permute.xlu0 %3924
    %3928 = vrot.lane.b32.xlu0 %v3908, 104
    %v3929 = vpop.permute.xlu0 %3928
    %3930 = vrot.lane.b32.xlu0 %v3911, 104
    %v3931 = vpop.permute.xlu0 %3930
    %v3934 = vpack.c.bf16 %v3911, %v3908
    %v3935 = vpack.c.bf16 %v3919, %v3917
    %v3936 = vpack.c.bf16 %v3925, %v3923
    %v3937 = vpack.c.bf16 %v3931, %v3929
    %v3939 = vsel %vm350, %v3934, 0
    %v3942 = vsel %vm350, %v3935, 0
    %v3945 = vsel %vm350, %v3936, 0
    %v3948 = vsel %vm350, %v3937, 0
    %3950 = vmatprep.subr.bf16.mxu0 0
    %3951 = vmatpush1.bf16.xpose.msra.mxu0 %v899
    %3952 = vmatprep.subr.bf16.mxu0 0
    %3953 = vmatpush1.bf16.xpose.msra.mxu0 %v902
    %3954 = vmatprep.subr.bf16.mxu0 0
    %3955 = vmatpush1.bf16.xpose.msra.mxu0 %v905
    %3956 = vmatprep.subr.bf16.mxu0 0
    %3957 = vmatpush1.bf16.xpose.msra.mxu0 %v908
    %3958 = vmatprep.subr.bf16.mxu0 0
    %3959 = vmatpush1.bf16.xpose.msra.mxu0 0
    %3960 = vmatprep.subr.bf16.mxu0 0
    %3961 = vmatpush1.bf16.xpose.msra.mxu0 0
    %3962 = vmatprep.subr.bf16.mxu0 0
    %3963 = vmatpush1.bf16.xpose.msra.mxu0 0
    %3964 = vmatprep.subr.bf16.mxu0 0
    %3965 = vmatpush1.bf16.xpose.msra.mxu0 0
    %3966 = vmatprep.subr.bf16.mxu0 0
    %3967 = vmatpush1.bf16.xpose.msra.mxu0 0
    %3968 = vmatprep.subr.bf16.mxu0 0
    %3969 = vmatpush1.bf16.xpose.msra.mxu0 0
    %3970 = vmatprep.subr.bf16.mxu0 0
    %3971 = vmatpush1.bf16.xpose.msra.mxu0 0
    %3972 = vmatprep.subr.bf16.mxu0 0
    %3973 = vmatpush1.bf16.xpose.msra.mxu0 0
    %3974 = vmatprep.subr.bf16.mxu0 0
    %3975 = vmatpush1.bf16.xpose.msra.mxu0 0
    %3976 = vmatprep.subr.bf16.mxu0 0
    %3977 = vmatpush1.bf16.xpose.msra.mxu0 0
    %3978 = vmatprep.subr.bf16.mxu0 0
    %3979 = vmatpush1.bf16.xpose.msra.mxu0 0
    %3980 = vmatprep.subr.bf16.mxu0 0
    %3981 = vmatpush1.bf16.xpose.msra.mxu0 0
    %3982 = vmatprep.mubr.bf16.mxu0 0
    %3983 = vmatmul.mubr.bf16.gmra.mrb[0].mxu0 %v3939
    %v3984 = vpop.f32.mrb[0].mxu0
    %v3985 = vadd.f32 %v878, %v3984
    %v3986 = vpop.f32.mrb[0].mxu0
    %v3987 = vpop.f32.mrb[0].mxu0
    %v3988 = vadd.f32 %v879, %v3987
    %v3989 = vpop.f32.mrb[0].mxu0
    %3990 = vmatprep.mubr.bf16.mxu0 0
    %3991 = vmatmul.mubr.bf16.gmra.mrb[0].mxu0 %v3942
    %v3992 = vpop.f32.mrb[0].mxu0
    %v3993 = vadd.f32 %v880, %v3992
    %v3994 = vpop.f32.mrb[0].mxu0
    %v3995 = vpop.f32.mrb[0].mxu0
    %v3996 = vadd.f32 %v881, %v3995
    %v3997 = vpop.f32.mrb[0].mxu0
    %3998 = vmatprep.mubr.bf16.mxu0 0
    %3999 = vmatmul.mubr.bf16.gmra.mrb[0].mxu0 %v3945
    %v4000 = vpop.f32.mrb[0].mxu0
    %v4001 = vadd.f32 %v882, %v4000
    %v4002 = vpop.f32.mrb[0].mxu0
    %v4003 = vpop.f32.mrb[0].mxu0
    %v4004 = vadd.f32 %v883, %v4003
    %v4005 = vpop.f32.mrb[0].mxu0
    %4006 = vmatprep.mubr.bf16.mxu0 0
    %4007 = vmatmul.mubr.bf16.gmra.mrb[0].mxu0 %v3948
    %v4008 = vpop.f32.mrb[0].mxu0
    %v4009 = vadd.f32 %v884, %v4008
    %v4010 = vpop.f32.mrb[0].mxu0
    %v4011 = vpop.f32.mrb[0].mxu0
    %v4012 = vadd.f32 %v885, %v4011
    %v4013 = vpop.f32.mrb[0].mxu0
    %4014 = vdwg.mxu0
    %v4015 = vsel %vm440, %v3985, -inf
    %4016 = vmax.xlane.f32.xlu0 %v4015
    %v4017 = vpop.xlane.xlu0 %4016
    %v4018 = vsel %vm440, %v3988, -inf
    %4019 = vmax.xlane.f32.xlu0 %v4018
    %v4020 = vpop.xlane.xlu0 %4019
    %v4021 = vsel %vm440, %v3993, -inf
    %4022 = vmax.xlane.f32.xlu0 %v4021
    %v4023 = vpop.xlane.xlu0 %4022
    %v4024 = vsel %vm440, %v3996, -inf
    %4025 = vmax.xlane.f32.xlu0 %v4024
    %v4026 = vpop.xlane.xlu0 %4025
    %v4027 = vsel %vm440, %v4001, -inf
    %4028 = vmax.xlane.f32.xlu0 %v4027
    %v4029 = vpop.xlane.xlu0 %4028
    %v4030 = vsel %vm440, %v4004, -inf
    %4031 = vmax.xlane.f32.xlu0 %v4030
    %v4032 = vpop.xlane.xlu0 %4031
    %v4033 = vsel %vm440, %v4009, -inf
    %4034 = vmax.xlane.f32.xlu0 %v4033
    %v4035 = vpop.xlane.xlu0 %4034
    %v4036 = vsel %vm440, %v4012, -inf
    %4037 = vmax.xlane.f32.xlu0 %v4036
    %v4038 = vpop.xlane.xlu0 %4037
    %v4039 = vsub.f32 %v3985, %v4017
    %v4040 = vsub.f32 %v3988, %v4020
    %v4041 = vsub.f32 %v3993, %v4023
    %v4042 = vsub.f32 %v3996, %v4026
    %v4043 = vsub.f32 %v4001, %v4029
    %v4044 = vsub.f32 %v4004, %v4032
    %v4045 = vsub.f32 %v4009, %v4035
    %v4046 = vsub.f32 %v4012, %v4038
    %v4047 = vmul.f32 %v4039, 1.442695
    %v4048 = vpow.pop %v4047
    %v4049 = vmul.f32 %v4040, 1.442695
    %v4050 = vpow.pop %v4049
    %v4051 = vmul.f32 %v4041, 1.442695
    %v4052 = vpow.pop %v4051
    %v4053 = vmul.f32 %v4042, 1.442695
    %v4054 = vpow.pop %v4053
    %v4055 = vmul.f32 %v4043, 1.442695
    %v4056 = vpow.pop %v4055
    %v4057 = vmul.f32 %v4044, 1.442695
    %v4058 = vpow.pop %v4057
    %v4059 = vmul.f32 %v4045, 1.442695
    %v4060 = vpow.pop %v4059
    %v4061 = vmul.f32 %v4046, 1.442695
    %v4062 = vpow.pop %v4061
    %v4063 = vsel %vm440, %v4048, 0.0
    %4064 = vadd.xlane.f32.xlu0 %v4063
    %v4065 = vpop.xlane.xlu0 %4064
    %v4066 = vsel %vm440, %v4050, 0.0
    %4067 = vadd.xlane.f32.xlu0 %v4066
    %v4068 = vpop.xlane.xlu0 %4067
    %v4069 = vsel %vm440, %v4052, 0.0
    %4070 = vadd.xlane.f32.xlu0 %v4069
    %v4071 = vpop.xlane.xlu0 %4070
    %v4072 = vsel %vm440, %v4054, 0.0
    %4073 = vadd.xlane.f32.xlu0 %v4072
    %v4074 = vpop.xlane.xlu0 %4073
    %v4075 = vsel %vm440, %v4056, 0.0
    %4076 = vadd.xlane.f32.xlu0 %v4075
    %v4077 = vpop.xlane.xlu0 %4076
    %v4078 = vsel %vm440, %v4058, 0.0
    %4079 = vadd.xlane.f32.xlu0 %v4078
    %v4080 = vpop.xlane.xlu0 %4079
    %v4081 = vsel %vm440, %v4060, 0.0
    %4082 = vadd.xlane.f32.xlu0 %v4081
    %v4083 = vpop.xlane.xlu0 %4082
    %v4084 = vsel %vm440, %v4062, 0.0
    %4085 = vadd.xlane.f32.xlu0 %v4084
    %v4086 = vpop.xlane.xlu0 %4085
    %v4087 = vrcp.pop %v4065
    %v4088 = vrcp.pop %v4068
    %v4089 = vrcp.pop %v4071
    %v4090 = vrcp.pop %v4074
    %v4091 = vrcp.pop %v4077
    %v4092 = vrcp.pop %v4080
    %v4093 = vrcp.pop %v4083
    %v4094 = vrcp.pop %v4086
    %v4095 = vmul.f32 %v4048, %v4087
    %v4096 = vmul.f32 %v4050, %v4088
    %v4097 = vmul.f32 %v4052, %v4089
    %v4098 = vmul.f32 %v4054, %v4090
    %v4099 = vmul.f32 %v4056, %v4091
    %v4100 = vmul.f32 %v4058, %v4092
    %v4101 = vmul.f32 %v4060, %v4093
    %v4102 = vmul.f32 %v4062, %v4094
    %v4103 = vpack.c.bf16 %v4096, %v4095
    %v4104 = vpack.c.bf16 %v4098, %v4097
    %v4105 = vpack.c.bf16 %v4100, %v4099
    %v4106 = vpack.c.bf16 %v4102, %v4101
    %v4108 = vsel %vm440, %v4103, 0
    %v4111 = vsel %vm440, %v4104, 0
    %v4114 = vsel %vm440, %v4105, 0
    %v4117 = vsel %vm440, %v4106, 0
    %4119 = vmatprep.subr.bf16.mxu0 0
    %4120 = vmatpush1.bf16.msra.mxu0 %v1072
    %4121 = vmatprep.subr.bf16.mxu0 0
    %4122 = vmatpush1.bf16.msra.mxu0 %v1074
    %4123 = vmatprep.subr.bf16.mxu0 0
    %4124 = vmatpush1.bf16.msra.mxu0 %v1076
    %4125 = vmatprep.subr.bf16.mxu0 0
    %4126 = vmatpush1.bf16.msra.mxu0 %v1078
    %4127 = vmatprep.subr.bf16.mxu0 0
    %4128 = vmatpush1.bf16.msra.mxu0 0
    %4129 = vmatprep.subr.bf16.mxu0 0
    %4130 = vmatpush1.bf16.msra.mxu0 0
    %4131 = vmatprep.subr.bf16.mxu0 0
    %4132 = vmatpush1.bf16.msra.mxu0 0
    %4133 = vmatprep.subr.bf16.mxu0 0
    %4134 = vmatpush1.bf16.msra.mxu0 0
    %4135 = vmatprep.subr.bf16.mxu0 0
    %4136 = vmatpush1.bf16.msra.mxu0 0
    %4137 = vmatprep.subr.bf16.mxu0 0
    %4138 = vmatpush1.bf16.msra.mxu0 0
    %4139 = vmatprep.subr.bf16.mxu0 0
    %4140 = vmatpush1.bf16.msra.mxu0 0
    %4141 = vmatprep.subr.bf16.mxu0 0
    %4142 = vmatpush1.bf16.msra.mxu0 0
    %4143 = vmatprep.subr.bf16.mxu0 0
    %4144 = vmatpush1.bf16.msra.mxu0 0
    %4145 = vmatprep.subr.bf16.mxu0 0
    %4146 = vmatpush1.bf16.msra.mxu0 0
    %4147 = vmatprep.subr.bf16.mxu0 0
    %4148 = vmatpush1.bf16.msra.mxu0 0
    %4149 = vmatprep.subr.bf16.mxu0 0
    %4150 = vmatpush1.bf16.msra.mxu0 0
    %4151 = vmatprep.mubr.bf16.mxu0 0
    %4152 = vmatmul.mubr.bf16.gmra.mrb[0].mxu0 %v4108
    %v4153 = vpop.f32.mrb[0].mxu0
    %v4154 = vadd.f32 0.0, %v4153
    %v4155 = vpop.f32.mrb[0].mxu0
    %v4156 = vpop.f32.mrb[0].mxu0
    %v4157 = vadd.f32 0.0, %v4156
    %v4158 = vpop.f32.mrb[0].mxu0
    %4159 = vmatprep.mubr.bf16.mxu0 0
    %4160 = vmatmul.mubr.bf16.gmra.mrb[0].mxu0 %v4111
    %v4161 = vpop.f32.mrb[0].mxu0
    %v4162 = vadd.f32 0.0, %v4161
    %v4163 = vpop.f32.mrb[0].mxu0
    %v4164 = vpop.f32.mrb[0].mxu0
    %v4165 = vadd.f32 0.0, %v4164
    %v4166 = vpop.f32.mrb[0].mxu0
    %4167 = vmatprep.mubr.bf16.mxu0 0
    %4168 = vmatmul.mubr.bf16.gmra.mrb[0].mxu0 %v4114
    %v4169 = vpop.f32.mrb[0].mxu0
    %v4170 = vadd.f32 0.0, %v4169
    %v4171 = vpop.f32.mrb[0].mxu0
    %v4172 = vpop.f32.mrb[0].mxu0
    %v4173 = vadd.f32 0.0, %v4172
    %v4174 = vpop.f32.mrb[0].mxu0
    %4175 = vmatprep.mubr.bf16.mxu0 0
    %4176 = vmatmul.mubr.bf16.gmra.mrb[0].mxu0 %v4117
    %v4177 = vpop.f32.mrb[0].mxu0
    %v4178 = vadd.f32 0.0, %v4177
    %v4179 = vpop.f32.mrb[0].mxu0
    %v4180 = vpop.f32.mrb[0].mxu0
    %v4181 = vadd.f32 0.0, %v4180
    %v4182 = vpop.f32.mrb[0].mxu0
    %4183 = vdwg.mxu0
    %4186 = vrot.lane.b32.xlu0 %v4162, 8
    %v4187 = vpop.permute.xlu0 %4186
    %4188 = vrot.lane.b32.xlu0 %v4165, 8
    %v4189 = vpop.permute.xlu0 %4188
    %4194 = vrot.lane.b32.xlu0 %v4170, 16
    %v4195 = vpop.permute.xlu0 %4194
    %4196 = vrot.lane.b32.xlu0 %v4173, 16
    %v4197 = vpop.permute.xlu0 %4196
    %4202 = vrot.lane.b32.xlu0 %v4178, 24
    %v4203 = vpop.permute.xlu0 %4202
    %4204 = vrot.lane.b32.xlu0 %v4181, 24
    %v4205 = vpop.permute.xlu0 %4204
    %v4208 = vsel %vm350, %v4154, %v4187
    %v4209 = vsel %vm350, %v4157, %v4189
    %v4210 = vsel %vm648, %v4208, %v4195
    %v4211 = vsel %vm648, %v4209, %v4197
    %v4212 = vsel %vm651, %v4210, %v4203
    %v4213 = vsel %vm651, %v4211, %v4205
    %v4214 = vpack.c.bf16 %v4213, %v4212
    %v4216 = vsel %vm111, %v4214, 0
    %4218 = vmatprep.subr.bf16.mxu0 0
    %4219 = vmatpush1.bf16.msra.mxu0 %v1210
    %4220 = vmatprep.subr.bf16.mxu0 0
    %4221 = vmatpush1.bf16.msra.mxu0 %v1211
    %4222 = vmatprep.subr.bf16.mxu0 0
    %4223 = vmatpush1.bf16.msra.mxu0 0
    %4224 = vmatprep.subr.bf16.mxu0 0
    %4225 = vmatpush1.bf16.msra.mxu0 0
    %4226 = vmatprep.subr.bf16.mxu0 0
    %4227 = vmatpush1.bf16.msra.mxu0 0
    %4228 = vmatprep.subr.bf16.mxu0 0
    %4229 = vmatpush1.bf16.msra.mxu0 0
    %4230 = vmatprep.subr.bf16.mxu0 0
    %4231 = vmatpush1.bf16.msra.mxu0 0
    %4232 = vmatprep.subr.bf16.mxu0 0
    %4233 = vmatpush1.bf16.msra.mxu0 0
    %4234 = vmatprep.subr.bf16.mxu0 0
    %4235 = vmatpush1.bf16.msra.mxu0 0
    %4236 = vmatprep.subr.bf16.mxu0 0
    %4237 = vmatpush1.bf16.msra.mxu0 0
    %4238 = vmatprep.subr.bf16.mxu0 0
    %4239 = vmatpush1.bf16.msra.mxu0 0
    %4240 = vmatprep.subr.bf16.mxu0 0
    %4241 = vmatpush1.bf16.msra.mxu0 0
    %4242 = vmatprep.subr.bf16.mxu0 0
    %4243 = vmatpush1.bf16.msra.mxu0 0
    %4244 = vmatprep.subr.bf16.mxu0 0
    %4245 = vmatpush1.bf16.msra.mxu0 0
    %4246 = vmatprep.subr.bf16.mxu0 0
    %4247 = vmatpush1.bf16.msra.mxu0 0
    %4248 = vmatprep.subr.bf16.mxu0 0
    %4249 = vmatpush1.bf16.msra.mxu0 0
    %4250 = vmatprep.mubr.bf16.mxu0 0
    %4251 = vmatmul.mubr.bf16.gmra.mrb[0].mxu0 %v4216
    %v4252 = vpop.f32.mrb[0].mxu0
    %v4253 = vadd.f32 %v1200, %v4252
    %v4254 = vpop.f32.mrb[0].mxu0
    %v4255 = vpop.f32.mrb[0].mxu0
    %v4256 = vadd.f32 %v1200, %v4255
    %v4257 = vpop.f32.mrb[0].mxu0
    %4258 = vdwg.mxu0
    %v4259 = vadd.f32 %v3823, %v4253
    %v4260 = vadd.f32 %v3824, %v4256
    %v4261 = vsel %vm111, %v4259, 0.0
    %4262 = vadd.xlane.f32.xlu0 %v4261
    %v4263 = vpop.xlane.xlu0 %4262
    %v4264 = vsel %vm111, %v4260, 0.0
    %4265 = vadd.xlane.f32.xlu0 %v4264
    %v4266 = vpop.xlane.xlu0 %4265
    %v4267 = vmul.f32 %v4263, %v184
    %v4268 = vmul.f32 %v4266, %v184
    %v4269 = vsub.f32 %v4259, %v4267
    %v4270 = vsub.f32 %v4260, %v4268
    %v4271 = vmul.f32 %v4269, %v4269
    %v4272 = vmul.f32 %v4270, %v4270
    %v4273 = vsel %vm111, %v4271, 0.0
    %4274 = vadd.xlane.f32.xlu0 %v4273
    %v4275 = vpop.xlane.xlu0 %4274
    %v4276 = vsel %vm111, %v4272, 0.0
    %4277 = vadd.xlane.f32.xlu0 %v4276
    %v4278 = vpop.xlane.xlu0 %4277
    %v4279 = vmul.f32 %v4275, %v197
    %v4280 = vmul.f32 %v4278, %v197
    %v4281 = vmul.f32 %v1285, %v4269
    %v4282 = vmul.f32 %v1285, %v4270
    %v4283 = vrsqrt.pop %v4279
    %v4284 = vmul.f32 %v4279, %v4283
    %vm4285 = vcmp.eq.f32.partialorder %v4279, inf
    %v4286 = vsel %vm4285, %v4279, %v4284
    %vm4287 = vcmp.eq.f32.partialorder %v4279, 0.0
    %v4288 = vand.u32 %v4279, 2147483648
    %v4289 = vsel %vm4287, %v4288, %v4286
    %v4290 = vrsqrt.pop %v4280
    %v4291 = vmul.f32 %v4280, %v4290
    %vm4292 = vcmp.eq.f32.partialorder %v4280, inf
    %v4293 = vsel %vm4292, %v4280, %v4291
    %vm4294 = vcmp.eq.f32.partialorder %v4280, 0.0
    %v4295 = vand.u32 %v4280, 2147483648
    %v4296 = vsel %vm4294, %v4295, %v4293
    %v4297 = vadd.f32 %v4289, 1e-07
    %v4298 = vadd.f32 %v4296, 1e-07
    %v4299 = vrcp.pop %v4297
    %v4300 = vmul.f32 %v4281, %v4299
    %v4301 = vrcp.pop %v4298
    %v4302 = vmul.f32 %v4282, %v4301
    %v4303 = vadd.f32 %v4300, %v1314
    %v4304 = vadd.f32 %v4302, %v1314
    %v4305 = vpack.c.bf16 %v4304, %v4303
    %v4307 = vsel %vm111, %v4305, 0
    %4309 = vmatprep.subr.bf16.mxu0 %v1532
    %4310 = vmatpush1.bf16.msra.mxu0 %v1531
    %4311 = vmatprep.subr.bf16.mxu0 %v1548
    %4312 = vmatpush1.bf16.msra.mxu0 %v1547
    %4313 = vmatprep.subr.bf16.mxu0 0
    %4314 = vmatpush1.bf16.msra.mxu0 0
    %4315 = vmatprep.subr.bf16.mxu0 0
    %4316 = vmatpush1.bf16.msra.mxu0 0
    %4317 = vmatprep.subr.bf16.mxu0 0
    %4318 = vmatpush1.bf16.msra.mxu0 0
    %4319 = vmatprep.subr.bf16.mxu0 0
    %4320 = vmatpush1.bf16.msra.mxu0 0
    %4321 = vmatprep.subr.bf16.mxu0 0
    %4322 = vmatpush1.bf16.msra.mxu0 0
    %4323 = vmatprep.subr.bf16.mxu0 0
    %4324 = vmatpush1.bf16.msra.mxu0 0
    %4325 = vmatprep.subr.bf16.mxu0 0
    %4326 = vmatpush1.bf16.msra.mxu0 0
    %4327 = vmatprep.subr.bf16.mxu0 0
    %4328 = vmatpush1.bf16.msra.mxu0 0
    %4329 = vmatprep.subr.bf16.mxu0 0
    %4330 = vmatpush1.bf16.msra.mxu0 0
    %4331 = vmatprep.subr.bf16.mxu0 0
    %4332 = vmatpush1.bf16.msra.mxu0 0
    %4333 = vmatprep.subr.bf16.mxu0 0
    %4334 = vmatpush1.bf16.msra.mxu0 0
    %4335 = vmatprep.subr.bf16.mxu0 0
    %4336 = vmatpush1.bf16.msra.mxu0 0
    %4337 = vmatprep.subr.bf16.mxu0 0
    %4338 = vmatpush1.bf16.msra.mxu0 0
    %4339 = vmatprep.subr.bf16.mxu0 0
    %4340 = vmatpush1.bf16.msra.mxu0 0
    %4341 = vmatprep.mubr.bf16.mxu0 0
    %4342 = vmatmul.mubr.bf16.gmra.mrb[0].mxu0 %v4307
    %v4343 = vpop.f32.mrb[0].mxu0
    %v4344 = vadd.f32 %v1358, %v4343
    %v4345 = vpop.f32.mrb[0].mxu0
    %v4346 = vadd.f32 %v1362, %v4345
    %v4347 = vpop.f32.mrb[0].mxu0
    %v4348 = vadd.f32 %v1358, %v4347
    %v4349 = vpop.f32.mrb[0].mxu0
    %v4350 = vadd.f32 %v1362, %v4349
    %4351 = vdwg.mxu0
    %4352 = vmatprep.subr.bf16.mxu0 %v1534
    %4353 = vmatpush1.bf16.msra.mxu0 %v1533
    %4354 = vmatprep.subr.bf16.mxu0 %v1550
    %4355 = vmatpush1.bf16.msra.mxu0 %v1549
    %4356 = vmatprep.subr.bf16.mxu0 0
    %4357 = vmatpush1.bf16.msra.mxu0 0
    %4358 = vmatprep.subr.bf16.mxu0 0
    %4359 = vmatpush1.bf16.msra.mxu0 0
    %4360 = vmatprep.subr.bf16.mxu0 0
    %4361 = vmatpush1.bf16.msra.mxu0 0
    %4362 = vmatprep.subr.bf16.mxu0 0
    %4363 = vmatpush1.bf16.msra.mxu0 0
    %4364 = vmatprep.subr.bf16.mxu0 0
    %4365 = vmatpush1.bf16.msra.mxu0 0
    %4366 = vmatprep.subr.bf16.mxu0 0
    %4367 = vmatpush1.bf16.msra.mxu0 0
    %4368 = vmatprep.subr.bf16.mxu0 0
    %4369 = vmatpush1.bf16.msra.mxu0 0
    %4370 = vmatprep.subr.bf16.mxu0 0
    %4371 = vmatpush1.bf16.msra.mxu0 0
    %4372 = vmatprep.subr.bf16.mxu0 0
    %4373 = vmatpush1.bf16.msra.mxu0 0
    %4374 = vmatprep.subr.bf16.mxu0 0
    %4375 = vmatpush1.bf16.msra.mxu0 0
    %4376 = vmatprep.subr.bf16.mxu0 0
    %4377 = vmatpush1.bf16.msra.mxu0 0
    %4378 = vmatprep.subr.bf16.mxu0 0
    %4379 = vmatpush1.bf16.msra.mxu0 0
    %4380 = vmatprep.subr.bf16.mxu0 0
    %4381 = vmatpush1.bf16.msra.mxu0 0
    %4382 = vmatprep.subr.bf16.mxu0 0
    %4383 = vmatpush1.bf16.msra.mxu0 0
    %4384 = vmatprep.mubr.bf16.mxu0 0
    %4385 = vmatmul.mubr.bf16.gmra.mrb[0].mxu0 %v4307
    %v4386 = vpop.f32.mrb[0].mxu0
    %v4387 = vadd.f32 %v1366, %v4386
    %v4388 = vpop.f32.mrb[0].mxu0
    %v4389 = vadd.f32 %v1370, %v4388
    %v4390 = vpop.f32.mrb[0].mxu0
    %v4391 = vadd.f32 %v1366, %v4390
    %v4392 = vpop.f32.mrb[0].mxu0
    %v4393 = vadd.f32 %v1370, %v4392
    %4394 = vdwg.mxu0
    %4395 = vmatprep.subr.bf16.mxu0 %v1536
    %4396 = vmatpush1.bf16.msra.mxu0 %v1535
    %4397 = vmatprep.subr.bf16.mxu0 %v1552
    %4398 = vmatpush1.bf16.msra.mxu0 %v1551
    %4399 = vmatprep.subr.bf16.mxu0 0
    %4400 = vmatpush1.bf16.msra.mxu0 0
    %4401 = vmatprep.subr.bf16.mxu0 0
    %4402 = vmatpush1.bf16.msra.mxu0 0
    %4403 = vmatprep.subr.bf16.mxu0 0
    %4404 = vmatpush1.bf16.msra.mxu0 0
    %4405 = vmatprep.subr.bf16.mxu0 0
    %4406 = vmatpush1.bf16.msra.mxu0 0
    %4407 = vmatprep.subr.bf16.mxu0 0
    %4408 = vmatpush1.bf16.msra.mxu0 0
    %4409 = vmatprep.subr.bf16.mxu0 0
    %4410 = vmatpush1.bf16.msra.mxu0 0
    %4411 = vmatprep.subr.bf16.mxu0 0
    %4412 = vmatpush1.bf16.msra.mxu0 0
    %4413 = vmatprep.subr.bf16.mxu0 0
    %4414 = vmatpush1.bf16.msra.mxu0 0
    %4415 = vmatprep.subr.bf16.mxu0 0
    %4416 = vmatpush1.bf16.msra.mxu0 0
    %4417 = vmatprep.subr.bf16.mxu0 0
    %4418 = vmatpush1.bf16.msra.mxu0 0
    %4419 = vmatprep.subr.bf16.mxu0 0
    %4420 = vmatpush1.bf16.msra.mxu0 0
    %4421 = vmatprep.subr.bf16.mxu0 0
    %4422 = vmatpush1.bf16.msra.mxu0 0
    %4423 = vmatprep.subr.bf16.mxu0 0
    %4424 = vmatpush1.bf16.msra.mxu0 0
    %4425 = vmatprep.subr.bf16.mxu0 0
    %4426 = vmatpush1.bf16.msra.mxu0 0
    %4427 = vmatprep.mubr.bf16.mxu0 0
    %4428 = vmatmul.mubr.bf16.gmra.mrb[0].mxu0 %v4307
    %v4429 = vpop.f32.mrb[0].mxu0
    %v4430 = vadd.f32 %v1374, %v4429
    %v4431 = vpop.f32.mrb[0].mxu0
    %v4432 = vadd.f32 %v1378, %v4431
    %v4433 = vpop.f32.mrb[0].mxu0
    %v4434 = vadd.f32 %v1374, %v4433
    %v4435 = vpop.f32.mrb[0].mxu0
    %v4436 = vadd.f32 %v1378, %v4435
    %4437 = vdwg.mxu0
    %4438 = vmatprep.subr.bf16.mxu0 %v1538
    %4439 = vmatpush1.bf16.msra.mxu0 %v1537
    %4440 = vmatprep.subr.bf16.mxu0 %v1554
    %4441 = vmatpush1.bf16.msra.mxu0 %v1553
    %4442 = vmatprep.subr.bf16.mxu0 0
    %4443 = vmatpush1.bf16.msra.mxu0 0
    %4444 = vmatprep.subr.bf16.mxu0 0
    %4445 = vmatpush1.bf16.msra.mxu0 0
    %4446 = vmatprep.subr.bf16.mxu0 0
    %4447 = vmatpush1.bf16.msra.mxu0 0
    %4448 = vmatprep.subr.bf16.mxu0 0
    %4449 = vmatpush1.bf16.msra.mxu0 0
    %4450 = vmatprep.subr.bf16.mxu0 0
    %4451 = vmatpush1.bf16.msra.mxu0 0
    %4452 = vmatprep.subr.bf16.mxu0 0
    %4453 = vmatpush1.bf16.msra.mxu0 0
    %4454 = vmatprep.subr.bf16.mxu0 0
    %4455 = vmatpush1.bf16.msra.mxu0 0
    %4456 = vmatprep.subr.bf16.mxu0 0
    %4457 = vmatpush1.bf16.msra.mxu0 0
    %4458 = vmatprep.subr.bf16.mxu0 0
    %4459 = vmatpush1.bf16.msra.mxu0 0
    %4460 = vmatprep.subr.bf16.mxu0 0
    %4461 = vmatpush1.bf16.msra.mxu0 0
    %4462 = vmatprep.subr.bf16.mxu0 0
    %4463 = vmatpush1.bf16.msra.mxu0 0
    %4464 = vmatprep.subr.bf16.mxu0 0
    %4465 = vmatpush1.bf16.msra.mxu0 0
    %4466 = vmatprep.subr.bf16.mxu0 0
    %4467 = vmatpush1.bf16.msra.mxu0 0
    %4468 = vmatprep.subr.bf16.mxu0 0
    %4469 = vmatpush1.bf16.msra.mxu0 0
    %4470 = vmatprep.mubr.bf16.mxu0 0
    %4471 = vmatmul.mubr.bf16.gmra.mrb[0].mxu0 %v4307
    %v4472 = vpop.f32.mrb[0].mxu0
    %v4473 = vadd.f32 %v1382, %v4472
    %v4474 = vpop.f32.mrb[0].mxu0
    %v4475 = vadd.f32 %v1386, %v4474
    %v4476 = vpop.f32.mrb[0].mxu0
    %v4477 = vadd.f32 %v1382, %v4476
    %v4478 = vpop.f32.mrb[0].mxu0
    %v4479 = vadd.f32 %v1386, %v4478
    %4480 = vdwg.mxu0
    %4481 = vmatprep.subr.bf16.mxu0 %v1540
    %4482 = vmatpush1.bf16.msra.mxu0 %v1539
    %4483 = vmatprep.subr.bf16.mxu0 %v1556
    %4484 = vmatpush1.bf16.msra.mxu0 %v1555
    %4485 = vmatprep.subr.bf16.mxu0 0
    %4486 = vmatpush1.bf16.msra.mxu0 0
    %4487 = vmatprep.subr.bf16.mxu0 0
    %4488 = vmatpush1.bf16.msra.mxu0 0
    %4489 = vmatprep.subr.bf16.mxu0 0
    %4490 = vmatpush1.bf16.msra.mxu0 0
    %4491 = vmatprep.subr.bf16.mxu0 0
    %4492 = vmatpush1.bf16.msra.mxu0 0
    %4493 = vmatprep.subr.bf16.mxu0 0
    %4494 = vmatpush1.bf16.msra.mxu0 0
    %4495 = vmatprep.subr.bf16.mxu0 0
    %4496 = vmatpush1.bf16.msra.mxu0 0
    %4497 = vmatprep.subr.bf16.mxu0 0
    %4498 = vmatpush1.bf16.msra.mxu0 0
    %4499 = vmatprep.subr.bf16.mxu0 0
    %4500 = vmatpush1.bf16.msra.mxu0 0
    %4501 = vmatprep.subr.bf16.mxu0 0
    %4502 = vmatpush1.bf16.msra.mxu0 0
    %4503 = vmatprep.subr.bf16.mxu0 0
    %4504 = vmatpush1.bf16.msra.mxu0 0
    %4505 = vmatprep.subr.bf16.mxu0 0
    %4506 = vmatpush1.bf16.msra.mxu0 0
    %4507 = vmatprep.subr.bf16.mxu0 0
    %4508 = vmatpush1.bf16.msra.mxu0 0
    %4509 = vmatprep.subr.bf16.mxu0 0
    %4510 = vmatpush1.bf16.msra.mxu0 0
    %4511 = vmatprep.subr.bf16.mxu0 0
    %4512 = vmatpush1.bf16.msra.mxu0 0
    %4513 = vmatprep.mubr.bf16.mxu0 0
    %4514 = vmatmul.mubr.bf16.gmra.mrb[0].mxu0 %v4307
    %v4515 = vpop.f32.mrb[0].mxu0
    %v4516 = vadd.f32 %v1390, %v4515
    %v4517 = vpop.f32.mrb[0].mxu0
    %v4518 = vadd.f32 %v1394, %v4517
    %v4519 = vpop.f32.mrb[0].mxu0
    %v4520 = vadd.f32 %v1390, %v4519
    %v4521 = vpop.f32.mrb[0].mxu0
    %v4522 = vadd.f32 %v1394, %v4521
    %4523 = vdwg.mxu0
    %4524 = vmatprep.subr.bf16.mxu0 %v1542
    %4525 = vmatpush1.bf16.msra.mxu0 %v1541
    %4526 = vmatprep.subr.bf16.mxu0 %v1558
    %4527 = vmatpush1.bf16.msra.mxu0 %v1557
    %4528 = vmatprep.subr.bf16.mxu0 0
    %4529 = vmatpush1.bf16.msra.mxu0 0
    %4530 = vmatprep.subr.bf16.mxu0 0
    %4531 = vmatpush1.bf16.msra.mxu0 0
    %4532 = vmatprep.subr.bf16.mxu0 0
    %4533 = vmatpush1.bf16.msra.mxu0 0
    %4534 = vmatprep.subr.bf16.mxu0 0
    %4535 = vmatpush1.bf16.msra.mxu0 0
    %4536 = vmatprep.subr.bf16.mxu0 0
    %4537 = vmatpush1.bf16.msra.mxu0 0
    %4538 = vmatprep.subr.bf16.mxu0 0
    %4539 = vmatpush1.bf16.msra.mxu0 0
    %4540 = vmatprep.subr.bf16.mxu0 0
    %4541 = vmatpush1.bf16.msra.mxu0 0
    %4542 = vmatprep.subr.bf16.mxu0 0
    %4543 = vmatpush1.bf16.msra.mxu0 0
    %4544 = vmatprep.subr.bf16.mxu0 0
    %4545 = vmatpush1.bf16.msra.mxu0 0
    %4546 = vmatprep.subr.bf16.mxu0 0
    %4547 = vmatpush1.bf16.msra.mxu0 0
    %4548 = vmatprep.subr.bf16.mxu0 0
    %4549 = vmatpush1.bf16.msra.mxu0 0
    %4550 = vmatprep.subr.bf16.mxu0 0
    %4551 = vmatpush1.bf16.msra.mxu0 0
    %4552 = vmatprep.subr.bf16.mxu0 0
    %4553 = vmatpush1.bf16.msra.mxu0 0
    %4554 = vmatprep.subr.bf16.mxu0 0
    %4555 = vmatpush1.bf16.msra.mxu0 0
    %4556 = vmatprep.mubr.bf16.mxu0 0
    %4557 = vmatmul.mubr.bf16.gmra.mrb[0].mxu0 %v4307
    %v4558 = vpop.f32.mrb[0].mxu0
    %v4559 = vadd.f32 %v1398, %v4558
    %v4560 = vpop.f32.mrb[0].mxu0
    %v4561 = vadd.f32 %v1402, %v4560
    %v4562 = vpop.f32.mrb[0].mxu0
    %v4563 = vadd.f32 %v1398, %v4562
    %v4564 = vpop.f32.mrb[0].mxu0
    %v4565 = vadd.f32 %v1402, %v4564
    %4566 = vdwg.mxu0
    %4567 = vmatprep.subr.bf16.mxu0 %v1544
    %4568 = vmatpush1.bf16.msra.mxu0 %v1543
    %4569 = vmatprep.subr.bf16.mxu0 %v1560
    %4570 = vmatpush1.bf16.msra.mxu0 %v1559
    %4571 = vmatprep.subr.bf16.mxu0 0
    %4572 = vmatpush1.bf16.msra.mxu0 0
    %4573 = vmatprep.subr.bf16.mxu0 0
    %4574 = vmatpush1.bf16.msra.mxu0 0
    %4575 = vmatprep.subr.bf16.mxu0 0
    %4576 = vmatpush1.bf16.msra.mxu0 0
    %4577 = vmatprep.subr.bf16.mxu0 0
    %4578 = vmatpush1.bf16.msra.mxu0 0
    %4579 = vmatprep.subr.bf16.mxu0 0
    %4580 = vmatpush1.bf16.msra.mxu0 0
    %4581 = vmatprep.subr.bf16.mxu0 0
    %4582 = vmatpush1.bf16.msra.mxu0 0
    %4583 = vmatprep.subr.bf16.mxu0 0
    %4584 = vmatpush1.bf16.msra.mxu0 0
    %4585 = vmatprep.subr.bf16.mxu0 0
    %4586 = vmatpush1.bf16.msra.mxu0 0
    %4587 = vmatprep.subr.bf16.mxu0 0
    %4588 = vmatpush1.bf16.msra.mxu0 0
    %4589 = vmatprep.subr.bf16.mxu0 0
    %4590 = vmatpush1.bf16.msra.mxu0 0
    %4591 = vmatprep.subr.bf16.mxu0 0
    %4592 = vmatpush1.bf16.msra.mxu0 0
    %4593 = vmatprep.subr.bf16.mxu0 0
    %4594 = vmatpush1.bf16.msra.mxu0 0
    %4595 = vmatprep.subr.bf16.mxu0 0
    %4596 = vmatpush1.bf16.msra.mxu0 0
    %4597 = vmatprep.subr.bf16.mxu0 0
    %4598 = vmatpush1.bf16.msra.mxu0 0
    %4599 = vmatprep.mubr.bf16.mxu0 0
    %4600 = vmatmul.mubr.bf16.gmra.mrb[0].mxu0 %v4307
    %v4601 = vpop.f32.mrb[0].mxu0
    %v4602 = vadd.f32 %v1406, %v4601
    %v4603 = vpop.f32.mrb[0].mxu0
    %v4604 = vadd.f32 %v1410, %v4603
    %v4605 = vpop.f32.mrb[0].mxu0
    %v4606 = vadd.f32 %v1406, %v4605
    %v4607 = vpop.f32.mrb[0].mxu0
    %v4608 = vadd.f32 %v1410, %v4607
    %4609 = vdwg.mxu0
    %4610 = vmatprep.subr.bf16.mxu0 %v1546
    %4611 = vmatpush1.bf16.msra.mxu0 %v1545
    %4612 = vmatprep.subr.bf16.mxu0 %v1562
    %4613 = vmatpush1.bf16.msra.mxu0 %v1561
    %4614 = vmatprep.subr.bf16.mxu0 0
    %4615 = vmatpush1.bf16.msra.mxu0 0
    %4616 = vmatprep.subr.bf16.mxu0 0
    %4617 = vmatpush1.bf16.msra.mxu0 0
    %4618 = vmatprep.subr.bf16.mxu0 0
    %4619 = vmatpush1.bf16.msra.mxu0 0
    %4620 = vmatprep.subr.bf16.mxu0 0
    %4621 = vmatpush1.bf16.msra.mxu0 0
    %4622 = vmatprep.subr.bf16.mxu0 0
    %4623 = vmatpush1.bf16.msra.mxu0 0
    %4624 = vmatprep.subr.bf16.mxu0 0
    %4625 = vmatpush1.bf16.msra.mxu0 0
    %4626 = vmatprep.subr.bf16.mxu0 0
    %4627 = vmatpush1.bf16.msra.mxu0 0
    %4628 = vmatprep.subr.bf16.mxu0 0
    %4629 = vmatpush1.bf16.msra.mxu0 0
    %4630 = vmatprep.subr.bf16.mxu0 0
    %4631 = vmatpush1.bf16.msra.mxu0 0
    %4632 = vmatprep.subr.bf16.mxu0 0
    %4633 = vmatpush1.bf16.msra.mxu0 0
    %4634 = vmatprep.subr.bf16.mxu0 0
    %4635 = vmatpush1.bf16.msra.mxu0 0
    %4636 = vmatprep.subr.bf16.mxu0 0
    %4637 = vmatpush1.bf16.msra.mxu0 0
    %4638 = vmatprep.subr.bf16.mxu0 0
    %4639 = vmatpush1.bf16.msra.mxu0 0
    %4640 = vmatprep.subr.bf16.mxu0 0
    %4641 = vmatpush1.bf16.msra.mxu0 0
    %4642 = vmatprep.mubr.bf16.mxu0 0
    %4643 = vmatmul.mubr.bf16.gmra.mrb[0].mxu0 %v4307
    %v4644 = vpop.f32.mrb[0].mxu0
    %v4645 = vadd.f32 %v1414, %v4644
    %v4646 = vpop.f32.mrb[0].mxu0
    %v4647 = vadd.f32 %v1418, %v4646
    %v4648 = vpop.f32.mrb[0].mxu0
    %v4649 = vadd.f32 %v1414, %v4648
    %v4650 = vpop.f32.mrb[0].mxu0
    %v4651 = vadd.f32 %v1418, %v4650
    %4652 = vdwg.mxu0
    %v4653 = vmax.f32 %v4344, 0.0
    %v4654 = vmax.f32 %v4346, 0.0
    %v4655 = vmax.f32 %v4387, 0.0
    %v4656 = vmax.f32 %v4389, 0.0
    %v4657 = vmax.f32 %v4430, 0.0
    %v4658 = vmax.f32 %v4432, 0.0
    %v4659 = vmax.f32 %v4473, 0.0
    %v4660 = vmax.f32 %v4475, 0.0
    %v4661 = vmax.f32 %v4516, 0.0
    %v4662 = vmax.f32 %v4518, 0.0
    %v4663 = vmax.f32 %v4559, 0.0
    %v4664 = vmax.f32 %v4561, 0.0
    %v4665 = vmax.f32 %v4602, 0.0
    %v4666 = vmax.f32 %v4604, 0.0
    %v4667 = vmax.f32 %v4645, 0.0
    %v4668 = vmax.f32 %v4647, 0.0
    %v4669 = vmax.f32 %v4348, 0.0
    %v4670 = vmax.f32 %v4350, 0.0
    %v4671 = vmax.f32 %v4391, 0.0
    %v4672 = vmax.f32 %v4393, 0.0
    %v4673 = vmax.f32 %v4434, 0.0
    %v4674 = vmax.f32 %v4436, 0.0
    %v4675 = vmax.f32 %v4477, 0.0
    %v4676 = vmax.f32 %v4479, 0.0
    %v4677 = vmax.f32 %v4520, 0.0
    %v4678 = vmax.f32 %v4522, 0.0
    %v4679 = vmax.f32 %v4563, 0.0
    %v4680 = vmax.f32 %v4565, 0.0
    %v4681 = vmax.f32 %v4606, 0.0
    %v4682 = vmax.f32 %v4608, 0.0
    %v4683 = vmax.f32 %v4649, 0.0
    %v4684 = vmax.f32 %v4651, 0.0
    %v4685 = vpack.c.bf16 %v4669, %v4653
    %v4686 = vpack.c.bf16 %v4670, %v4654
    %v4687 = vpack.c.bf16 %v4671, %v4655
    %v4688 = vpack.c.bf16 %v4672, %v4656
    %v4689 = vpack.c.bf16 %v4673, %v4657
    %v4690 = vpack.c.bf16 %v4674, %v4658
    %v4691 = vpack.c.bf16 %v4675, %v4659
    %v4692 = vpack.c.bf16 %v4676, %v4660
    %v4693 = vpack.c.bf16 %v4677, %v4661
    %v4694 = vpack.c.bf16 %v4678, %v4662
    %v4695 = vpack.c.bf16 %v4679, %v4663
    %v4696 = vpack.c.bf16 %v4680, %v4664
    %v4697 = vpack.c.bf16 %v4681, %v4665
    %v4698 = vpack.c.bf16 %v4682, %v4666
    %v4699 = vpack.c.bf16 %v4683, %v4667
    %v4700 = vpack.c.bf16 %v4684, %v4668
    %4701 = vmatprep.subr.bf16.mxu0 0
    %4702 = vmatpush1.bf16.msra.mxu0 %v2758
    %4703 = vmatprep.subr.bf16.mxu0 0
    %4704 = vmatpush1.bf16.msra.mxu0 %v2759
    %4705 = vmatprep.subr.bf16.mxu0 0
    %4706 = vmatpush1.bf16.msra.mxu0 %v2760
    %4707 = vmatprep.subr.bf16.mxu0 0
    %4708 = vmatpush1.bf16.msra.mxu0 %v2761
    %4709 = vmatprep.subr.bf16.mxu0 0
    %4710 = vmatpush1.bf16.msra.mxu0 %v2762
    %4711 = vmatprep.subr.bf16.mxu0 0
    %4712 = vmatpush1.bf16.msra.mxu0 %v2763
    %4713 = vmatprep.subr.bf16.mxu0 0
    %4714 = vmatpush1.bf16.msra.mxu0 %v2764
    %4715 = vmatprep.subr.bf16.mxu0 0
    %4716 = vmatpush1.bf16.msra.mxu0 %v2765
    %4717 = vmatprep.subr.bf16.mxu0 0
    %4718 = vmatpush1.bf16.msra.mxu0 %v2766
    %4719 = vmatprep.subr.bf16.mxu0 0
    %4720 = vmatpush1.bf16.msra.mxu0 %v2767
    %4721 = vmatprep.subr.bf16.mxu0 0
    %4722 = vmatpush1.bf16.msra.mxu0 %v2768
    %4723 = vmatprep.subr.bf16.mxu0 0
    %4724 = vmatpush1.bf16.msra.mxu0 %v2769
    %4725 = vmatprep.subr.bf16.mxu0 0
    %4726 = vmatpush1.bf16.msra.mxu0 %v2770
    %4727 = vmatprep.subr.bf16.mxu0 0
    %4728 = vmatpush1.bf16.msra.mxu0 %v2771
    %4729 = vmatprep.subr.bf16.mxu0 0
    %4730 = vmatpush1.bf16.msra.mxu0 %v2772
    %4731 = vmatprep.subr.bf16.mxu0 0
    %4732 = vmatpush1.bf16.msra.mxu0 %v2773
    %4733 = vmatprep.mubr.bf16.mxu0 %v4686
    %4734 = vmatmul.mubr.bf16.gmra.mrb[0].mxu0 %v4685
    %v4735 = vpop.f32.mrb[0].mxu0
    %v4736 = vadd.f32 0.0, %v4735
    %v4737 = vpop.f32.mrb[0].mxu0
    %v4738 = vpop.f32.mrb[0].mxu0
    %v4739 = vadd.f32 0.0, %v4738
    %v4740 = vpop.f32.mrb[0].mxu0
    %4741 = vdwg.mxu0
    %4742 = vmatprep.subr.bf16.mxu0 0
    %4743 = vmatpush1.bf16.msra.mxu0 %v2774
    %4744 = vmatprep.subr.bf16.mxu0 0
    %4745 = vmatpush1.bf16.msra.mxu0 %v2775
    %4746 = vmatprep.subr.bf16.mxu0 0
    %4747 = vmatpush1.bf16.msra.mxu0 %v2776
    %4748 = vmatprep.subr.bf16.mxu0 0
    %4749 = vmatpush1.bf16.msra.mxu0 %v2777
    %4750 = vmatprep.subr.bf16.mxu0 0
    %4751 = vmatpush1.bf16.msra.mxu0 %v2778
    %4752 = vmatprep.subr.bf16.mxu0 0
    %4753 = vmatpush1.bf16.msra.mxu0 %v2779
    %4754 = vmatprep.subr.bf16.mxu0 0
    %4755 = vmatpush1.bf16.msra.mxu0 %v2780
    %4756 = vmatprep.subr.bf16.mxu0 0
    %4757 = vmatpush1.bf16.msra.mxu0 %v2781
    %4758 = vmatprep.subr.bf16.mxu0 0
    %4759 = vmatpush1.bf16.msra.mxu0 %v2782
    %4760 = vmatprep.subr.bf16.mxu0 0
    %4761 = vmatpush1.bf16.msra.mxu0 %v2783
    %4762 = vmatprep.subr.bf16.mxu0 0
    %4763 = vmatpush1.bf16.msra.mxu0 %v2784
    %4764 = vmatprep.subr.bf16.mxu0 0
    %4765 = vmatpush1.bf16.msra.mxu0 %v2785
    %4766 = vmatprep.subr.bf16.mxu0 0
    %4767 = vmatpush1.bf16.msra.mxu0 %v2786
    %4768 = vmatprep.subr.bf16.mxu0 0
    %4769 = vmatpush1.bf16.msra.mxu0 %v2787
    %4770 = vmatprep.subr.bf16.mxu0 0
    %4771 = vmatpush1.bf16.msra.mxu0 %v2788
    %4772 = vmatprep.subr.bf16.mxu0 0
    %4773 = vmatpush1.bf16.msra.mxu0 %v2789
    %4774 = vmatprep.mubr.bf16.mxu0 %v4688
    %4775 = vmatmul.mubr.bf16.gmra.mrb[0].mxu0 %v4687
    %v4776 = vpop.f32.mrb[0].mxu0
    %v4777 = vadd.f32 %v4736, %v4776
    %v4778 = vpop.f32.mrb[0].mxu0
    %v4779 = vpop.f32.mrb[0].mxu0
    %v4780 = vadd.f32 %v4739, %v4779
    %v4781 = vpop.f32.mrb[0].mxu0
    %4782 = vdwg.mxu0
    %4783 = vmatprep.subr.bf16.mxu0 0
    %4784 = vmatpush1.bf16.msra.mxu0 %v2790
    %4785 = vmatprep.subr.bf16.mxu0 0
    %4786 = vmatpush1.bf16.msra.mxu0 %v2791
    %4787 = vmatprep.subr.bf16.mxu0 0
    %4788 = vmatpush1.bf16.msra.mxu0 %v2792
    %4789 = vmatprep.subr.bf16.mxu0 0
    %4790 = vmatpush1.bf16.msra.mxu0 %v2793
    %4791 = vmatprep.subr.bf16.mxu0 0
    %4792 = vmatpush1.bf16.msra.mxu0 %v2794
    %4793 = vmatprep.subr.bf16.mxu0 0
    %4794 = vmatpush1.bf16.msra.mxu0 %v2795
    %4795 = vmatprep.subr.bf16.mxu0 0
    %4796 = vmatpush1.bf16.msra.mxu0 %v2796
    %4797 = vmatprep.subr.bf16.mxu0 0
    %4798 = vmatpush1.bf16.msra.mxu0 %v2797
    %4799 = vmatprep.subr.bf16.mxu0 0
    %4800 = vmatpush1.bf16.msra.mxu0 %v2798
    %4801 = vmatprep.subr.bf16.mxu0 0
    %4802 = vmatpush1.bf16.msra.mxu0 %v2799
    %4803 = vmatprep.subr.bf16.mxu0 0
    %4804 = vmatpush1.bf16.msra.mxu0 %v2800
    %4805 = vmatprep.subr.bf16.mxu0 0
    %4806 = vmatpush1.bf16.msra.mxu0 %v2801
    %4807 = vmatprep.subr.bf16.mxu0 0
    %4808 = vmatpush1.bf16.msra.mxu0 %v2802
    %4809 = vmatprep.subr.bf16.mxu0 0
    %4810 = vmatpush1.bf16.msra.mxu0 %v2803
    %4811 = vmatprep.subr.bf16.mxu0 0
    %4812 = vmatpush1.bf16.msra.mxu0 %v2804
    %4813 = vmatprep.subr.bf16.mxu0 0
    %4814 = vmatpush1.bf16.msra.mxu0 %v2805
    %4815 = vmatprep.mubr.bf16.mxu0 %v4690
    %4816 = vmatmul.mubr.bf16.gmra.mrb[0].mxu0 %v4689
    %v4817 = vpop.f32.mrb[0].mxu0
    %v4818 = vadd.f32 %v4777, %v4817
    %v4819 = vpop.f32.mrb[0].mxu0
    %v4820 = vpop.f32.mrb[0].mxu0
    %v4821 = vadd.f32 %v4780, %v4820
    %v4822 = vpop.f32.mrb[0].mxu0
    %4823 = vdwg.mxu0
    %4824 = vmatprep.subr.bf16.mxu0 0
    %4825 = vmatpush1.bf16.msra.mxu0 %v2806
    %4826 = vmatprep.subr.bf16.mxu0 0
    %4827 = vmatpush1.bf16.msra.mxu0 %v2807
    %4828 = vmatprep.subr.bf16.mxu0 0
    %4829 = vmatpush1.bf16.msra.mxu0 %v2808
    %4830 = vmatprep.subr.bf16.mxu0 0
    %4831 = vmatpush1.bf16.msra.mxu0 %v2809
    %4832 = vmatprep.subr.bf16.mxu0 0
    %4833 = vmatpush1.bf16.msra.mxu0 %v2810
    %4834 = vmatprep.subr.bf16.mxu0 0
    %4835 = vmatpush1.bf16.msra.mxu0 %v2811
    %4836 = vmatprep.subr.bf16.mxu0 0
    %4837 = vmatpush1.bf16.msra.mxu0 %v2812
    %4838 = vmatprep.subr.bf16.mxu0 0
    %4839 = vmatpush1.bf16.msra.mxu0 %v2813
    %4840 = vmatprep.subr.bf16.mxu0 0
    %4841 = vmatpush1.bf16.msra.mxu0 %v2814
    %4842 = vmatprep.subr.bf16.mxu0 0
    %4843 = vmatpush1.bf16.msra.mxu0 %v2815
    %4844 = vmatprep.subr.bf16.mxu0 0
    %4845 = vmatpush1.bf16.msra.mxu0 %v2816
    %4846 = vmatprep.subr.bf16.mxu0 0
    %4847 = vmatpush1.bf16.msra.mxu0 %v2817
    %4848 = vmatprep.subr.bf16.mxu0 0
    %4849 = vmatpush1.bf16.msra.mxu0 %v2818
    %4850 = vmatprep.subr.bf16.mxu0 0
    %4851 = vmatpush1.bf16.msra.mxu0 %v2819
    %4852 = vmatprep.subr.bf16.mxu0 0
    %4853 = vmatpush1.bf16.msra.mxu0 %v2820
    %4854 = vmatprep.subr.bf16.mxu0 0
    %4855 = vmatpush1.bf16.msra.mxu0 %v2821
    %4856 = vmatprep.mubr.bf16.mxu0 %v4692
    %4857 = vmatmul.mubr.bf16.gmra.mrb[0].mxu0 %v4691
    %v4858 = vpop.f32.mrb[0].mxu0
    %v4859 = vadd.f32 %v4818, %v4858
    %v4860 = vpop.f32.mrb[0].mxu0
    %v4861 = vpop.f32.mrb[0].mxu0
    %v4862 = vadd.f32 %v4821, %v4861
    %v4863 = vpop.f32.mrb[0].mxu0
    %4864 = vdwg.mxu0
    %4865 = vmatprep.subr.bf16.mxu0 0
    %4866 = vmatpush1.bf16.msra.mxu0 %v2822
    %4867 = vmatprep.subr.bf16.mxu0 0
    %4868 = vmatpush1.bf16.msra.mxu0 %v2823
    %4869 = vmatprep.subr.bf16.mxu0 0
    %4870 = vmatpush1.bf16.msra.mxu0 %v2824
    %4871 = vmatprep.subr.bf16.mxu0 0
    %4872 = vmatpush1.bf16.msra.mxu0 %v2825
    %4873 = vmatprep.subr.bf16.mxu0 0
    %4874 = vmatpush1.bf16.msra.mxu0 %v2826
    %4875 = vmatprep.subr.bf16.mxu0 0
    %4876 = vmatpush1.bf16.msra.mxu0 %v2827
    %4877 = vmatprep.subr.bf16.mxu0 0
    %4878 = vmatpush1.bf16.msra.mxu0 %v2828
    %4879 = vmatprep.subr.bf16.mxu0 0
    %4880 = vmatpush1.bf16.msra.mxu0 %v2829
    %4881 = vmatprep.subr.bf16.mxu0 0
    %4882 = vmatpush1.bf16.msra.mxu0 %v2830
    %4883 = vmatprep.subr.bf16.mxu0 0
    %4884 = vmatpush1.bf16.msra.mxu0 %v2831
    %4885 = vmatprep.subr.bf16.mxu0 0
    %4886 = vmatpush1.bf16.msra.mxu0 %v2832
    %4887 = vmatprep.subr.bf16.mxu0 0
    %4888 = vmatpush1.bf16.msra.mxu0 %v2833
    %4889 = vmatprep.subr.bf16.mxu0 0
    %4890 = vmatpush1.bf16.msra.mxu0 %v2834
    %4891 = vmatprep.subr.bf16.mxu0 0
    %4892 = vmatpush1.bf16.msra.mxu0 %v2835
    %4893 = vmatprep.subr.bf16.mxu0 0
    %4894 = vmatpush1.bf16.msra.mxu0 %v2836
    %4895 = vmatprep.subr.bf16.mxu0 0
    %4896 = vmatpush1.bf16.msra.mxu0 %v2837
    %4897 = vmatprep.mubr.bf16.mxu0 %v4694
    %4898 = vmatmul.mubr.bf16.gmra.mrb[0].mxu0 %v4693
    %v4899 = vpop.f32.mrb[0].mxu0
    %v4900 = vadd.f32 %v4859, %v4899
    %v4901 = vpop.f32.mrb[0].mxu0
    %v4902 = vpop.f32.mrb[0].mxu0
    %v4903 = vadd.f32 %v4862, %v4902
    %v4904 = vpop.f32.mrb[0].mxu0
    %4905 = vdwg.mxu0
    %4906 = vmatprep.subr.bf16.mxu0 0
    %4907 = vmatpush1.bf16.msra.mxu0 %v2838
    %4908 = vmatprep.subr.bf16.mxu0 0
    %4909 = vmatpush1.bf16.msra.mxu0 %v2839
    %4910 = vmatprep.subr.bf16.mxu0 0
    %4911 = vmatpush1.bf16.msra.mxu0 %v2840
    %4912 = vmatprep.subr.bf16.mxu0 0
    %4913 = vmatpush1.bf16.msra.mxu0 %v2841
    %4914 = vmatprep.subr.bf16.mxu0 0
    %4915 = vmatpush1.bf16.msra.mxu0 %v2842
    %4916 = vmatprep.subr.bf16.mxu0 0
    %4917 = vmatpush1.bf16.msra.mxu0 %v2843
    %4918 = vmatprep.subr.bf16.mxu0 0
    %4919 = vmatpush1.bf16.msra.mxu0 %v2844
    %4920 = vmatprep.subr.bf16.mxu0 0
    %4921 = vmatpush1.bf16.msra.mxu0 %v2845
    %4922 = vmatprep.subr.bf16.mxu0 0
    %4923 = vmatpush1.bf16.msra.mxu0 %v2846
    %4924 = vmatprep.subr.bf16.mxu0 0
    %4925 = vmatpush1.bf16.msra.mxu0 %v2847
    %4926 = vmatprep.subr.bf16.mxu0 0
    %4927 = vmatpush1.bf16.msra.mxu0 %v2848
    %4928 = vmatprep.subr.bf16.mxu0 0
    %4929 = vmatpush1.bf16.msra.mxu0 %v2849
    %4930 = vmatprep.subr.bf16.mxu0 0
    %4931 = vmatpush1.bf16.msra.mxu0 %v2850
    %4932 = vmatprep.subr.bf16.mxu0 0
    %4933 = vmatpush1.bf16.msra.mxu0 %v2851
    %4934 = vmatprep.subr.bf16.mxu0 0
    %4935 = vmatpush1.bf16.msra.mxu0 %v2852
    %4936 = vmatprep.subr.bf16.mxu0 0
    %4937 = vmatpush1.bf16.msra.mxu0 %v2853
    %4938 = vmatprep.mubr.bf16.mxu0 %v4696
    %4939 = vmatmul.mubr.bf16.gmra.mrb[0].mxu0 %v4695
    %v4940 = vpop.f32.mrb[0].mxu0
    %v4941 = vadd.f32 %v4900, %v4940
    %v4942 = vpop.f32.mrb[0].mxu0
    %v4943 = vpop.f32.mrb[0].mxu0
    %v4944 = vadd.f32 %v4903, %v4943
    %v4945 = vpop.f32.mrb[0].mxu0
    %4946 = vdwg.mxu0
    %4947 = vmatprep.subr.bf16.mxu0 0
    %4948 = vmatpush1.bf16.msra.mxu0 %v2854
    %4949 = vmatprep.subr.bf16.mxu0 0
    %4950 = vmatpush1.bf16.msra.mxu0 %v2855
    %4951 = vmatprep.subr.bf16.mxu0 0
    %4952 = vmatpush1.bf16.msra.mxu0 %v2856
    %4953 = vmatprep.subr.bf16.mxu0 0
    %4954 = vmatpush1.bf16.msra.mxu0 %v2857
    %4955 = vmatprep.subr.bf16.mxu0 0
    %4956 = vmatpush1.bf16.msra.mxu0 %v2858
    %4957 = vmatprep.subr.bf16.mxu0 0
    %4958 = vmatpush1.bf16.msra.mxu0 %v2859
    %4959 = vmatprep.subr.bf16.mxu0 0
    %4960 = vmatpush1.bf16.msra.mxu0 %v2860
    %4961 = vmatprep.subr.bf16.mxu0 0
    %4962 = vmatpush1.bf16.msra.mxu0 %v2861
    %4963 = vmatprep.subr.bf16.mxu0 0
    %4964 = vmatpush1.bf16.msra.mxu0 %v2862
    %4965 = vmatprep.subr.bf16.mxu0 0
    %4966 = vmatpush1.bf16.msra.mxu0 %v2863
    %4967 = vmatprep.subr.bf16.mxu0 0
    %4968 = vmatpush1.bf16.msra.mxu0 %v2864
    %4969 = vmatprep.subr.bf16.mxu0 0
    %4970 = vmatpush1.bf16.msra.mxu0 %v2865
    %4971 = vmatprep.subr.bf16.mxu0 0
    %4972 = vmatpush1.bf16.msra.mxu0 %v2866
    %4973 = vmatprep.subr.bf16.mxu0 0
    %4974 = vmatpush1.bf16.msra.mxu0 %v2867
    %4975 = vmatprep.subr.bf16.mxu0 0
    %4976 = vmatpush1.bf16.msra.mxu0 %v2868
    %4977 = vmatprep.subr.bf16.mxu0 0
    %4978 = vmatpush1.bf16.msra.mxu0 %v2869
    %4979 = vmatprep.mubr.bf16.mxu0 %v4698
    %4980 = vmatmul.mubr.bf16.gmra.mrb[0].mxu0 %v4697
    %v4981 = vpop.f32.mrb[0].mxu0
    %v4982 = vadd.f32 %v4941, %v4981
    %v4983 = vpop.f32.mrb[0].mxu0
    %v4984 = vpop.f32.mrb[0].mxu0
    %v4985 = vadd.f32 %v4944, %v4984
    %v4986 = vpop.f32.mrb[0].mxu0
    %4987 = vdwg.mxu0
    %4988 = vmatprep.subr.bf16.mxu0 0
    %4989 = vmatpush1.bf16.msra.mxu0 %v2870
    %4990 = vmatprep.subr.bf16.mxu0 0
    %4991 = vmatpush1.bf16.msra.mxu0 %v2871
    %4992 = vmatprep.subr.bf16.mxu0 0
    %4993 = vmatpush1.bf16.msra.mxu0 %v2872
    %4994 = vmatprep.subr.bf16.mxu0 0
    %4995 = vmatpush1.bf16.msra.mxu0 %v2873
    %4996 = vmatprep.subr.bf16.mxu0 0
    %4997 = vmatpush1.bf16.msra.mxu0 %v2874
    %4998 = vmatprep.subr.bf16.mxu0 0
    %4999 = vmatpush1.bf16.msra.mxu0 %v2875
    %5000 = vmatprep.subr.bf16.mxu0 0
    %5001 = vmatpush1.bf16.msra.mxu0 %v2876
    %5002 = vmatprep.subr.bf16.mxu0 0
    %5003 = vmatpush1.bf16.msra.mxu0 %v2877
    %5004 = vmatprep.subr.bf16.mxu0 0
    %5005 = vmatpush1.bf16.msra.mxu0 %v2878
    %5006 = vmatprep.subr.bf16.mxu0 0
    %5007 = vmatpush1.bf16.msra.mxu0 %v2879
    %5008 = vmatprep.subr.bf16.mxu0 0
    %5009 = vmatpush1.bf16.msra.mxu0 %v2880
    %5010 = vmatprep.subr.bf16.mxu0 0
    %5011 = vmatpush1.bf16.msra.mxu0 %v2881
    %5012 = vmatprep.subr.bf16.mxu0 0
    %5013 = vmatpush1.bf16.msra.mxu0 %v2882
    %5014 = vmatprep.subr.bf16.mxu0 0
    %5015 = vmatpush1.bf16.msra.mxu0 %v2883
    %5016 = vmatprep.subr.bf16.mxu0 0
    %5017 = vmatpush1.bf16.msra.mxu0 %v2884
    %5018 = vmatprep.subr.bf16.mxu0 0
    %5019 = vmatpush1.bf16.msra.mxu0 %v2885
    %5020 = vmatprep.mubr.bf16.mxu0 %v4700
    %5021 = vmatmul.mubr.bf16.gmra.mrb[0].mxu0 %v4699
    %v5022 = vpop.f32.mrb[0].mxu0
    %v5023 = vadd.f32 %v4982, %v5022
    %v5024 = vpop.f32.mrb[0].mxu0
    %v5025 = vpop.f32.mrb[0].mxu0
    %v5026 = vadd.f32 %v4985, %v5025
    %v5027 = vpop.f32.mrb[0].mxu0
    %5028 = vdwg.mxu0
    %v5029 = vadd.f32 %v4259, %v5023
    %v5030 = vadd.f32 %v4260, %v5026
    %v5031 = vadd.f32 %v5029, %v3349
    %v5032 = vadd.f32 %v5030, %v3349
    %v5033 = vsel %vm111, %v5031, 0.0
    %5034 = vadd.xlane.f32.xlu0 %v5033
    %v5035 = vpop.xlane.xlu0 %5034
    %v5036 = vsel %vm111, %v5032, 0.0
    %5037 = vadd.xlane.f32.xlu0 %v5036
    %v5038 = vpop.xlane.xlu0 %5037
    %v5039 = vmul.f32 %v5035, %v184
    %v5040 = vmul.f32 %v5038, %v184
    %v5041 = vsub.f32 %v5031, %v5039
    %v5042 = vsub.f32 %v5032, %v5040
    %v5043 = vmul.f32 %v5041, %v5041
    %v5044 = vmul.f32 %v5042, %v5042
    %v5045 = vsel %vm111, %v5043, 0.0
    %5046 = vadd.xlane.f32.xlu0 %v5045
    %v5047 = vpop.xlane.xlu0 %5046
    %v5048 = vsel %vm111, %v5044, 0.0
    %5049 = vadd.xlane.f32.xlu0 %v5048
    %v5050 = vpop.xlane.xlu0 %5049
    %v5051 = vmul.f32 %v5047, %v197
    %v5052 = vmul.f32 %v5050, %v197
    %v5053 = vld [vmem:[%s24] sm:$0x1]
    %v5055 = vlaneseq
    %v5056 = vshrl.u32 %v5055, 7
    %v5057 = vsub.s32 0, %v5056
    %v5058 = vrot.slane %v5053, %v5057
    %v5060 = vmul.f32 %v5058, %v5041
    %v5061 = vmul.f32 %v5058, %v5042
    %v5062 = vrsqrt.pop %v5051
    %v5063 = vmul.f32 %v5051, %v5062
    %vm5064 = vcmp.eq.f32.partialorder %v5051, inf
    %v5065 = vsel %vm5064, %v5051, %v5063
    %vm5066 = vcmp.eq.f32.partialorder %v5051, 0.0
    %v5067 = vand.u32 %v5051, 2147483648
    %v5068 = vsel %vm5066, %v5067, %v5065
    %v5069 = vrsqrt.pop %v5052
    %v5070 = vmul.f32 %v5052, %v5069
    %vm5071 = vcmp.eq.f32.partialorder %v5052, inf
    %v5072 = vsel %vm5071, %v5052, %v5070
    %vm5073 = vcmp.eq.f32.partialorder %v5052, 0.0
    %v5074 = vand.u32 %v5052, 2147483648
    %v5075 = vsel %vm5073, %v5074, %v5072
    %v5076 = vadd.f32 %v5068, 1e-07
    %v5077 = vadd.f32 %v5075, 1e-07
    %v5078 = vrcp.pop %v5076
    %v5079 = vmul.f32 %v5060, %v5078
    %v5080 = vrcp.pop %v5077
    %v5081 = vmul.f32 %v5061, %v5080
    %v5082 = vld [vmem:[%s25] sm:$0x1]
    %v5084 = vlaneseq
    %v5085 = vshrl.u32 %v5084, 7
    %v5086 = vsub.s32 0, %v5085
    %v5087 = vrot.slane %v5082, %v5086
    %v5089 = vadd.f32 %v5079, %v5087
    %v5090 = vadd.f32 %v5081, %v5087
    %5091 = vst.msk [vmem:[#allocation2] sm:$0xff] %vm111, %v5089
    %5092 = vst.msk [vmem:[#allocation2 + $0x8] sm:$0xff] %vm111, %v5090
    // Predicated region
    $region106: #{decoder_block.1} parent=1 // pred_check
      _
    $region107: #{decoder_block.1} parent=1 // pred_check_branch
      %5094 = sbr.rel (0) target = $region109
    $region108: #{decoder_block.1} parent=1 // pred_region
      %s5096 = ssub.s32 256, 256
      %5097 = vsyncadd [#allocation3], %s5096
      %s5098 = sshll.u32 [#allocation2], 4
      %s5099 = int_to_ptr.vmem [resolvable:$true] %s5098
      %5104 = dma.vmem_to_hbm [thread:$0]  %s5099, 256, %s26, [#allocation3], 128, 128, 8
    $region109: #{decoder_block.1} parent=1 // pred_fallthru
      _
    // Predicated region
    $region110: #{decoder_block.1} parent=1 // pred_check
      _
    $region111: #{decoder_block.1} parent=1 // pred_check_branch
      %5106 = sbr.rel (0) target = $region113
    $region112: #{decoder_block.1} parent=1 // pred_region
      %5107 = dma.done [#allocation3], 256
    $region113: #{decoder_block.1} parent=1 // pred_fallthru
      _
    %5108 = vsyncpa [#allocation3], 1

</llo_original>
